<compile_context>
chip_gen: v5e
topology: v5e:2x2
jax: 0.10.0
libtpu: 0.0.40
codegen_flags: <defaults>
</compile_context>

<pallas_src>
import functools

import numpy as np

import jax
import jax.numpy as jnp
from jax import lax
from jax.experimental import pallas as pl
from jax.experimental.pallas import tpu as pltpu


def _round_up(x, m):
    return (x + m - 1) // m * m


# ----------------------------- Pallas kernel ------------------------------

def _cnn_forward_kernel(x_ref, cw1_ref, cb1_ref, cw2_ref, cb2_ref,
                        fw1_ref, fb1_ref, fw2_ref, fb2_ref, fw3_ref, fb3_ref,
                        o_ref):
    """Fully fused CNNCifar_all forward for one batch block.

    x_ref : [32, bb, 96]   rows = h, middle = batch, lanes = w*3 + c
    o_ref : [bb, 128]      log-probs; lanes >= num_classes are padding (~ -1e30)
    """
    in_h, bb, _ = x_ref.shape
    kh1 = cw1_ref.shape[0]              # 5
    conv1_h = in_h - kh1 + 1            # 28
    half1 = cw1_ref.shape[2] // 2       # 84  = 14 * 6
    pool1_h = conv1_h // 2              # 14
    kh2 = cw2_ref.shape[0]              # 5
    conv2_h = pool1_h - kh2 + 1         # 10
    half2 = cw2_ref.shape[2] // 2       # 80  = 5 * 16
    pool2_h = conv2_h // 2              # 5

    # ---- conv1 + bias + ReLU: KH banded MXU matmuls, batch stacked into M ----
    acc = jnp.dot(x_ref[0:conv1_h, :, :].reshape(conv1_h * bb, -1), cw1_ref[0],
                  preferred_element_type=jnp.float32)
    for k in range(1, kh1):
        acc = acc + jnp.dot(x_ref[k:k + conv1_h, :, :].reshape(conv1_h * bb, -1),
                            cw1_ref[k], preferred_element_type=jnp.float32)
    y = jnp.maximum(acc + cb1_ref[...], 0.0)              # [28*bb, 168]

    # ---- 2x2 max-pool: width via even/odd column halves, height via row pairs ----
    yw = jnp.maximum(y[:, :half1], y[:, half1:])           # [28*bb, 84]
    yw = yw.reshape(pool1_h, 2 * bb, half1)                 # rows: (h_out, pair, batch)
    h1 = jnp.maximum(yw[:, :bb, :], yw[:, bb:, :])          # [14, bb, 84]

    # ---- conv2 + bias + ReLU ----
    acc2 = jnp.dot(h1[0:conv2_h].reshape(conv2_h * bb, -1), cw2_ref[0],
                   preferred_element_type=jnp.float32)
    for k in range(1, kh2):
        acc2 = acc2 + jnp.dot(h1[k:k + conv2_h].reshape(conv2_h * bb, -1),
                              cw2_ref[k], preferred_element_type=jnp.float32)
    y2 = jnp.maximum(acc2 + cb2_ref[...], 0.0)             # [10*bb, 160]

    # ---- 2x2 max-pool ----
    y2w = jnp.maximum(y2[:, :half2], y2[:, half2:])         # [10*bb, 80]
    y2w = y2w.reshape(pool2_h, 2 * bb, half2)
    feat = jnp.maximum(y2w[:, :bb, :], y2w[:, bb:, :])      # [5, bb, 80]

    # ---- fc1 + ReLU: contract (h, w, c) as pool2_h matmuls over the height dim ----
    s = jnp.dot(feat[0], fw1_ref[0], preferred_element_type=jnp.float32)
    for h in range(1, pool2_h):
        s = s + jnp.dot(feat[h], fw1_ref[h], preferred_element_type=jnp.float32)
    a1 = jnp.maximum(s + fb1_ref[...], 0.0)                 # [bb, 120]

    # ---- fc2 + ReLU -> fc3 -> log_softmax (single lane-dense [bb, 128] store) ----
    a2 = jnp.maximum(jnp.dot(a1, fw2_ref[...], preferred_element_type=jnp.float32)
                     + fb2_ref[...], 0.0)                   # [bb, 84]
    logits = (jnp.dot(a2, fw3_ref[...], preferred_element_type=jnp.float32)
              + fb3_ref[...])                               # [bb, 128]
    m = jnp.max(logits, axis=-1, keepdims=True)
    z = logits - m
    lse = jnp.log(jnp.sum(jnp.exp(z), axis=-1, keepdims=True))
    o_ref[...] = z - lse


# ----------------------------- Pallas wrapper ------------------------------

def _pick_batch_block(b, cap=128):
    # Big batch blocks: fills the MXU M dimension and amortizes per-grid-step
    # overhead; working set per step stays well under v7x's 64 MiB VMEM.
    return min(cap, _round_up(b, 8))


def cnn_cifar_all_forward(x_nchw, pk, num_classes=10):
    """Forward pass of CNNCifar_all.  x_nchw: [B, 3, 32, 32] float32."""
    B, C, H, W = x_nchw.shape
    # NCHW -> [H, B, W*C]; lane index = w*C + c, matching the banded conv weights.
    x_t = jnp.transpose(x_nchw, (2, 0, 3, 1)).reshape(H, B, W * C)

    bb = _pick_batch_block(B)
    b_pad = _round_up(B, bb)
    if b_pad != B:
        x_t = jnp.pad(x_t, ((0, 0), (0, b_pad - B), (0, 0)))

    npad = pk["fc3_w"].shape[1]
    grid = (b_pad // bb,)

    out = pl.pallas_call(
        _cnn_forward_kernel,
        out_shape=jax.ShapeDtypeStruct((b_pad, npad), jnp.float32),
        grid=grid,
        in_specs=[
            pl.BlockSpec((H, bb, W * C), lambda i: (0, i, 0)),
            pl.BlockSpec(pk["conv1_w"].shape, lambda i: (0, 0, 0)),
            pl.BlockSpec(pk["conv1_b"].shape, lambda i: (0, 0)),
            pl.BlockSpec(pk["conv2_w"].shape, lambda i: (0, 0, 0)),
            pl.BlockSpec(pk["conv2_b"].shape, lambda i: (0, 0)),
            pl.BlockSpec(pk["fc1_w"].shape, lambda i: (0, 0, 0)),
            pl.BlockSpec(pk["fc1_b"].shape, lambda i: (0, 0)),
            pl.BlockSpec(pk["fc2_w"].shape, lambda i: (0, 0)),
            pl.BlockSpec(pk["fc2_b"].shape, lambda i: (0, 0)),
            pl.BlockSpec(pk["fc3_w"].shape, lambda i: (0, 0)),
            pl.BlockSpec(pk["fc3_b"].shape, lambda i: (0, 0)),
        ],
        out_specs=pl.BlockSpec((bb, npad), lambda i: (i, 0)),
        compiler_params=pltpu.CompilerParams(
            dimension_semantics=("parallel",),
            vmem_limit_bytes=48 * 1024 * 1024),
    )(x_t, pk["conv1_w"], pk["conv1_b"], pk["conv2_w"], pk["conv2_b"],
      pk["fc1_w"], pk["fc1_b"], pk["fc2_w"], pk["fc2_b"],
      pk["fc3_w"], pk["fc3_b"])

    # Padded batch rows and padded class lanes are sliced off here (documented contract).
    return out[:B, :num_classes]


# ------------------------- parameter packing (one-time) ----------------------

def _make_banded_conv_weight(w_oihw, in_w):
    """PyTorch conv weight [OC, IC, KH, KW] -> block-banded matmul weight
    [KH, in_w*IC, out_w*OC].  Output columns are arranged [even-w | odd-w]; within
    each half the column index is (w//2)*OC + oc, so the width-direction 2x max-pool
    becomes jnp.maximum(y[:, :half], y[:, half:])."""
    w = np.asarray(w_oihw, dtype=np.float32)
    oc, ic, kh, kw = w.shape
    out_w = in_w - kw + 1
    half = (out_w // 2) * oc
    wt = np.transpose(w, (2, 3, 1, 0))                       # [KH, KW, IC, OC]
    big = np.zeros((kh, in_w * ic, out_w * oc), np.float32)
    for wo in range(out_w):
        col0 = (wo % 2) * half + (wo // 2) * oc
        for kj in range(kw):
            win = wo + kj
            big[:, win * ic:(win + 1) * ic, col0:col0 + oc] = wt[:, kj]
    return big


def pack_params(p, num_classes=10):
    """One-time repack (outside jit) of PyTorch-layout parameters into kernel layout."""
    # conv weights -> block-banded matmul weights; biases tiled over output width
    w1 = _make_banded_conv_weight(p["conv1_w"], in_w=32)               # [5, 96, 168]
    w2 = _make_banded_conv_weight(p["conv2_w"], in_w=14)               # [5, 84, 160]
    b1 = np.tile(np.asarray(p["conv1_b"], np.float32), 28)[None, :]    # [1, 168]
    b2 = np.tile(np.asarray(p["conv2_b"], np.float32), 10)[None, :]    # [1, 160]

    # fc1: fold PyTorch's NCHW flatten order (c*25 + h*5 + w) into a per-height-split
    # weight [5, 80, 120] so the kernel can contract the pooled features (layout
    # [h, batch, w*16+c]) with 5 matmuls and no in-kernel transpose.
    fc1_w = np.asarray(p["fc1_w"], np.float32)                         # [120, 400]
    w1p = np.transpose(fc1_w.reshape(120, 16, 5, 5), (2, 3, 1, 0))     # [h, w, c, n]
    w1p = np.ascontiguousarray(w1p.reshape(5, 80, 120))                # [h, w*16+c, n]
    w2p = np.asarray(p["fc2_w"], np.float32).T                         # [120, 84]

    # fc3: pad output to 128 lanes (lane-dense store); padded logits get a huge
    # negative bias so they vanish under log_softmax and are sliced off outside.
    npad = 128
    fc3_w = np.asarray(p["fc3_w"], np.float32)                         # [nc, 84]
    w3p = np.zeros((fc3_w.shape[1], npad), np.float32)
    w3p[:, :num_classes] = fc3_w.T
    b3p = np.full((1, npad), -1e30, np.float32)
    b3p[0, :num_classes] = np.asarray(p["fc3_b"], np.float32)

    return {
        "conv1_w": jnp.asarray(w1), "conv1_b": jnp.asarray(b1),
        "conv2_w": jnp.asarray(w2), "conv2_b": jnp.asarray(b2),
        "fc1_w": jnp.asarray(w1p),
        "fc1_b": jnp.asarray(np.asarray(p["fc1_b"], np.float32)[None, :]),
        "fc2_w": jnp.asarray(w2p),
        "fc2_b": jnp.asarray(np.asarray(p["fc2_b"], np.float32)[None, :]),
        "fc3_w": jnp.asarray(w3p), "fc3_b": jnp.asarray(b3p),
    }


def init_params(key, num_classes=10):
    ks = jax.random.split(key, 10)

    def rnd(k, shape, scale):
        return scale * jax.random.normal(k, shape, dtype=jnp.float32)

    return {
        "conv1_w": rnd(ks[0], (6, 3, 5, 5), 0.1),        # PyTorch [OC, IC, KH, KW]
        "conv1_b": rnd(ks[1], (6,), 0.1),
        "conv2_w": rnd(ks[2], (16, 6, 5, 5), 0.1),
        "conv2_b": rnd(ks[3], (16,), 0.1),
        "fc1_w":   rnd(ks[4], (120, 16 * 5 * 5), 0.05),  # PyTorch [out, in]
        "fc1_b":   rnd(ks[5], (120,), 0.05),
        "fc2_w":   rnd(ks[6], (84, 120), 0.05),
        "fc2_b":   rnd(ks[7], (84,), 0.05),
        "fc3_w":   rnd(ks[8], (num_classes, 84), 0.05),
        "fc3_b":   rnd(ks[9], (num_classes,), 0.05),
    }


# ----------------------- plain-XLA reference (for checking) ------------------

def reference_forward(x_nchw, p):
    dn = ("NCHW", "OIHW", "NCHW")
    y = lax.conv_general_dilated(x_nchw, p["conv1_w"], (1, 1), "VALID",
                                 dimension_numbers=dn)
    y = jax.nn.relu(y + p["conv1_b"][None, :, None, None])
    y = lax.reduce_window(y, -jnp.inf, lax.max, (1, 1, 2, 2), (1, 1, 2, 2), "VALID")
    y = lax.conv_general_dilated(y, p["conv2_w"], (1, 1), "VALID",
                                 dimension_numbers=dn)
    y = jax.nn.relu(y + p["conv2_b"][None, :, None, None])
    y = lax.reduce_window(y, -jnp.inf, lax.max, (1, 1, 2, 2), (1, 1, 2, 2), "VALID")
    flat = y.reshape(y.shape[0], -1)                              # NCHW flatten, [B,400]
    h1 = jax.nn.relu(flat @ p["fc1_w"].T + p["fc1_b"])
    h2 = jax.nn.relu(h1 @ p["fc2_w"].T + p["fc2_b"])
    logits = h2 @ p["fc3_w"].T + p["fc3_b"]
    return jax.nn.log_softmax(logits, axis=1)


# --------------------------------- driver -----------------------------------

if __name__ == "__main__":
    key = jax.random.PRNGKey(0)
    k_x, k_p = jax.random.split(key)

    B, num_classes = 2, 10
    x = jax.random.normal(k_x, (B, 3, 32, 32), dtype=jnp.float32)   # NCHW like PyTorch
    params = init_params(k_p, num_classes=num_classes)
    packed = pack_params(params, num_classes=num_classes)           # one-time repack

    fwd = jax.jit(functools.partial(cnn_cifar_all_forward, num_classes=num_classes))
    out = jax.block_until_ready(fwd(x, packed))

    assert out.shape == (B, num_classes), out.shape
    probs_sum = jnp.exp(out).sum(axis=1)
    assert bool(jnp.all(jnp.abs(probs_sum - 1.0) < 1e-4)), probs_sum
    assert bool(jnp.all(jnp.isfinite(out)))

    # cross-check against a plain-XLA implementation of the original PyTorch forward
    ref = jax.block_until_ready(jax.jit(reference_forward)(x, params))
    max_err = float(jnp.max(jnp.abs(out - ref)))
    assert max_err < 5e-2, f"mismatch vs reference: {max_err}"

    print("KERNEL_OK")
</pallas_src>

<mosaic_0001>
module attributes {stable_mosaic.version = 11 : i64} {
  func.func @_cnn_forward_kernel(%arg0: i32, %arg1: memref<32x8x96xf32, #tpu.memory_space<vmem>>, %arg2: memref<5x96x168xf32, #tpu.memory_space<vmem>>, %arg3: memref<1x168xf32, #tpu.memory_space<vmem>>, %arg4: memref<5x84x160xf32, #tpu.memory_space<vmem>>, %arg5: memref<1x160xf32, #tpu.memory_space<vmem>>, %arg6: memref<5x80x120xf32, #tpu.memory_space<vmem>>, %arg7: memref<1x120xf32, #tpu.memory_space<vmem>>, %arg8: memref<120x84xf32, #tpu.memory_space<vmem>>, %arg9: memref<1x84xf32, #tpu.memory_space<vmem>>, %arg10: memref<84x128xf32, #tpu.memory_space<vmem>>, %arg11: memref<1x128xf32, #tpu.memory_space<vmem>>, %arg12: memref<8x128xf32, #tpu.memory_space<vmem>>) attributes {dimension_semantics = [#tpu.dimension_semantics<parallel>], iteration_bounds = array<i64: 1>, scalar_prefetch = 0 : i64, scratch_operands = 0 : i64, tpu.core_type = #tpu.core_type<tc>, window_params = [{transform_indices = @transform_0, window_bounds = array<i64: 32, 8, 96>}, {pipeline_mode = #tpu.pipeline_mode<synchronous>, transform_indices = @transform_1, window_bounds = array<i64: 5, 96, 168>}, {pipeline_mode = #tpu.pipeline_mode<synchronous>, transform_indices = @transform_2, window_bounds = array<i64: 1, 168>}, {pipeline_mode = #tpu.pipeline_mode<synchronous>, transform_indices = @transform_3, window_bounds = array<i64: 5, 84, 160>}, {pipeline_mode = #tpu.pipeline_mode<synchronous>, transform_indices = @transform_4, window_bounds = array<i64: 1, 160>}, {pipeline_mode = #tpu.pipeline_mode<synchronous>, transform_indices = @transform_5, window_bounds = array<i64: 5, 80, 120>}, {pipeline_mode = #tpu.pipeline_mode<synchronous>, transform_indices = @transform_6, window_bounds = array<i64: 1, 120>}, {pipeline_mode = #tpu.pipeline_mode<synchronous>, transform_indices = @transform_7, window_bounds = array<i64: 120, 84>}, {pipeline_mode = #tpu.pipeline_mode<synchronous>, transform_indices = @transform_8, window_bounds = array<i64: 1, 84>}, {pipeline_mode = #tpu.pipeline_mode<synchronous>, transform_indices = @transform_9, window_bounds = array<i64: 84, 128>}, {pipeline_mode = #tpu.pipeline_mode<synchronous>, transform_indices = @transform_10, window_bounds = array<i64: 1, 128>}, {transform_indices = @transform_11, window_bounds = array<i64: 8, 128>}]} {
    %c0 = arith.constant 0 : index
    %c0_0 = arith.constant 0 : index
    %c0_1 = arith.constant 0 : index
    %0 = vector.load %arg1[%c0, %c0_0, %c0_1] : memref<32x8x96xf32, #tpu.memory_space<vmem>>, vector<28x8x96xf32>
    %1 = vector.shape_cast %0 : vector<28x8x96xf32> to vector<224x96xf32>
    %c0_2 = arith.constant 0 : index
    %c0_3 = arith.constant 0 : index
    %c0_4 = arith.constant 0 : index
    %2 = vector.load %arg2[%c0_2, %c0_3, %c0_4] : memref<5x96x168xf32, #tpu.memory_space<vmem>>, vector<1x96x168xf32>
    %3 = vector.shape_cast %2 : vector<1x96x168xf32> to vector<96x168xf32>
    %cst = arith.constant dense<0.000000e+00> : vector<224x168xf32>
    %4 = tpu.matmul %1, %3, %cst {dimension_numbers = #tpu.dot_dimension_numbers<[1], [0], [0], [1], [0, 0, 1, 1], [], []>} : vector<224x96xf32>, vector<96x168xf32>, vector<224x168xf32> -> vector<224x168xf32>
    %c1 = arith.constant 1 : index
    %c0_5 = arith.constant 0 : index
    %c0_6 = arith.constant 0 : index
    %5 = vector.load %arg1[%c1, %c0_5, %c0_6] : memref<32x8x96xf32, #tpu.memory_space<vmem>>, vector<28x8x96xf32>
    %6 = vector.shape_cast %5 : vector<28x8x96xf32> to vector<224x96xf32>
    %c1_7 = arith.constant 1 : index
    %c0_8 = arith.constant 0 : index
    %c0_9 = arith.constant 0 : index
    %7 = vector.load %arg2[%c1_7, %c0_8, %c0_9] : memref<5x96x168xf32, #tpu.memory_space<vmem>>, vector<1x96x168xf32>
    %8 = vector.shape_cast %7 : vector<1x96x168xf32> to vector<96x168xf32>
    %cst_10 = arith.constant dense<0.000000e+00> : vector<224x168xf32>
    %9 = tpu.matmul %6, %8, %cst_10 {dimension_numbers = #tpu.dot_dimension_numbers<[1], [0], [0], [1], [0, 0, 1, 1], [], []>} : vector<224x96xf32>, vector<96x168xf32>, vector<224x168xf32> -> vector<224x168xf32>
    %10 = arith.addf %4, %9 : vector<224x168xf32>
    %c2 = arith.constant 2 : index
    %c0_11 = arith.constant 0 : index
    %c0_12 = arith.constant 0 : index
    %11 = vector.load %arg1[%c2, %c0_11, %c0_12] : memref<32x8x96xf32, #tpu.memory_space<vmem>>, vector<28x8x96xf32>
    %12 = vector.shape_cast %11 : vector<28x8x96xf32> to vector<224x96xf32>
    %c2_13 = arith.constant 2 : index
    %c0_14 = arith.constant 0 : index
    %c0_15 = arith.constant 0 : index
    %13 = vector.load %arg2[%c2_13, %c0_14, %c0_15] : memref<5x96x168xf32, #tpu.memory_space<vmem>>, vector<1x96x168xf32>
    %14 = vector.shape_cast %13 : vector<1x96x168xf32> to vector<96x168xf32>
    %cst_16 = arith.constant dense<0.000000e+00> : vector<224x168xf32>
    %15 = tpu.matmul %12, %14, %cst_16 {dimension_numbers = #tpu.dot_dimension_numbers<[1], [0], [0], [1], [0, 0, 1, 1], [], []>} : vector<224x96xf32>, vector<96x168xf32>, vector<224x168xf32> -> vector<224x168xf32>
    %16 = arith.addf %10, %15 : vector<224x168xf32>
    %c3 = arith.constant 3 : index
    %c0_17 = arith.constant 0 : index
    %c0_18 = arith.constant 0 : index
    %17 = vector.load %arg1[%c3, %c0_17, %c0_18] : memref<32x8x96xf32, #tpu.memory_space<vmem>>, vector<28x8x96xf32>
    %18 = vector.shape_cast %17 : vector<28x8x96xf32> to vector<224x96xf32>
    %c3_19 = arith.constant 3 : index
    %c0_20 = arith.constant 0 : index
    %c0_21 = arith.constant 0 : index
    %19 = vector.load %arg2[%c3_19, %c0_20, %c0_21] : memref<5x96x168xf32, #tpu.memory_space<vmem>>, vector<1x96x168xf32>
    %20 = vector.shape_cast %19 : vector<1x96x168xf32> to vector<96x168xf32>
    %cst_22 = arith.constant dense<0.000000e+00> : vector<224x168xf32>
    %21 = tpu.matmul %18, %20, %cst_22 {dimension_numbers = #tpu.dot_dimension_numbers<[1], [0], [0], [1], [0, 0, 1, 1], [], []>} : vector<224x96xf32>, vector<96x168xf32>, vector<224x168xf32> -> vector<224x168xf32>
    %22 = arith.addf %16, %21 : vector<224x168xf32>
    %c4 = arith.constant 4 : index
    %c0_23 = arith.constant 0 : index
    %c0_24 = arith.constant 0 : index
    %23 = vector.load %arg1[%c4, %c0_23, %c0_24] : memref<32x8x96xf32, #tpu.memory_space<vmem>>, vector<28x8x96xf32>
    %24 = vector.shape_cast %23 : vector<28x8x96xf32> to vector<224x96xf32>
    %c4_25 = arith.constant 4 : index
    %c0_26 = arith.constant 0 : index
    %c0_27 = arith.constant 0 : index
    %25 = vector.load %arg2[%c4_25, %c0_26, %c0_27] : memref<5x96x168xf32, #tpu.memory_space<vmem>>, vector<1x96x168xf32>
    %26 = vector.shape_cast %25 : vector<1x96x168xf32> to vector<96x168xf32>
    %cst_28 = arith.constant dense<0.000000e+00> : vector<224x168xf32>
    %27 = tpu.matmul %24, %26, %cst_28 {dimension_numbers = #tpu.dot_dimension_numbers<[1], [0], [0], [1], [0, 0, 1, 1], [], []>} : vector<224x96xf32>, vector<96x168xf32>, vector<224x168xf32> -> vector<224x168xf32>
    %28 = arith.addf %22, %27 : vector<224x168xf32>
    %c0_29 = arith.constant 0 : index
    %c0_30 = arith.constant 0 : index
    %29 = vector.load %arg3[%c0_29, %c0_30] : memref<1x168xf32, #tpu.memory_space<vmem>>, vector<1x168xf32>
    %30 = vector.broadcast %29 : vector<1x168xf32> to vector<224x168xf32>
    %31 = arith.addf %28, %30 : vector<224x168xf32>
    %cst_31 = arith.constant 0.000000e+00 : f32
    %32 = vector.broadcast %cst_31 : f32 to vector<224x168xf32>
    %33 = arith.maximumf %31, %32 : vector<224x168xf32>
    %34 = vector.extract_strided_slice %33 {offsets = [0, 0], sizes = [224, 84], strides = [1, 1]} : vector<224x168xf32> to vector<224x84xf32>
    %35 = vector.extract_strided_slice %33 {offsets = [0, 84], sizes = [224, 84], strides = [1, 1]} : vector<224x168xf32> to vector<224x84xf32>
    %36 = arith.maximumf %34, %35 : vector<224x84xf32>
    %37 = vector.shape_cast %36 : vector<224x84xf32> to vector<14x16x84xf32>
    %38 = vector.extract_strided_slice %37 {offsets = [0, 0, 0], sizes = [14, 8, 84], strides = [1, 1, 1]} : vector<14x16x84xf32> to vector<14x8x84xf32>
    %39 = vector.extract_strided_slice %37 {offsets = [0, 8, 0], sizes = [14, 8, 84], strides = [1, 1, 1]} : vector<14x16x84xf32> to vector<14x8x84xf32>
    %40 = arith.maximumf %38, %39 : vector<14x8x84xf32>
    %41 = vector.extract_strided_slice %40 {offsets = [0, 0, 0], sizes = [10, 8, 84], strides = [1, 1, 1]} : vector<14x8x84xf32> to vector<10x8x84xf32>
    %42 = vector.shape_cast %41 : vector<10x8x84xf32> to vector<80x84xf32>
    %c0_32 = arith.constant 0 : index
    %c0_33 = arith.constant 0 : index
    %c0_34 = arith.constant 0 : index
    %43 = vector.load %arg4[%c0_32, %c0_33, %c0_34] : memref<5x84x160xf32, #tpu.memory_space<vmem>>, vector<1x84x160xf32>
    %44 = vector.shape_cast %43 : vector<1x84x160xf32> to vector<84x160xf32>
    %cst_35 = arith.constant dense<0.000000e+00> : vector<80x160xf32>
    %45 = tpu.matmul %42, %44, %cst_35 {dimension_numbers = #tpu.dot_dimension_numbers<[1], [0], [0], [1], [0, 0, 1, 1], [], []>} : vector<80x84xf32>, vector<84x160xf32>, vector<80x160xf32> -> vector<80x160xf32>
    %46 = vector.extract_strided_slice %40 {offsets = [1, 0, 0], sizes = [10, 8, 84], strides = [1, 1, 1]} : vector<14x8x84xf32> to vector<10x8x84xf32>
    %47 = vector.shape_cast %46 : vector<10x8x84xf32> to vector<80x84xf32>
    %c1_36 = arith.constant 1 : index
    %c0_37 = arith.constant 0 : index
    %c0_38 = arith.constant 0 : index
    %48 = vector.load %arg4[%c1_36, %c0_37, %c0_38] : memref<5x84x160xf32, #tpu.memory_space<vmem>>, vector<1x84x160xf32>
    %49 = vector.shape_cast %48 : vector<1x84x160xf32> to vector<84x160xf32>
    %cst_39 = arith.constant dense<0.000000e+00> : vector<80x160xf32>
    %50 = tpu.matmul %47, %49, %cst_39 {dimension_numbers = #tpu.dot_dimension_numbers<[1], [0], [0], [1], [0, 0, 1, 1], [], []>} : vector<80x84xf32>, vector<84x160xf32>, vector<80x160xf32> -> vector<80x160xf32>
    %51 = arith.addf %45, %50 : vector<80x160xf32>
    %52 = vector.extract_strided_slice %40 {offsets = [2, 0, 0], sizes = [10, 8, 84], strides = [1, 1, 1]} : vector<14x8x84xf32> to vector<10x8x84xf32>
    %53 = vector.shape_cast %52 : vector<10x8x84xf32> to vector<80x84xf32>
    %c2_40 = arith.constant 2 : index
    %c0_41 = arith.constant 0 : index
    %c0_42 = arith.constant 0 : index
    %54 = vector.load %arg4[%c2_40, %c0_41, %c0_42] : memref<5x84x160xf32, #tpu.memory_space<vmem>>, vector<1x84x160xf32>
    %55 = vector.shape_cast %54 : vector<1x84x160xf32> to vector<84x160xf32>
    %cst_43 = arith.constant dense<0.000000e+00> : vector<80x160xf32>
    %56 = tpu.matmul %53, %55, %cst_43 {dimension_numbers = #tpu.dot_dimension_numbers<[1], [0], [0], [1], [0, 0, 1, 1], [], []>} : vector<80x84xf32>, vector<84x160xf32>, vector<80x160xf32> -> vector<80x160xf32>
    %57 = arith.addf %51, %56 : vector<80x160xf32>
    %58 = vector.extract_strided_slice %40 {offsets = [3, 0, 0], sizes = [10, 8, 84], strides = [1, 1, 1]} : vector<14x8x84xf32> to vector<10x8x84xf32>
    %59 = vector.shape_cast %58 : vector<10x8x84xf32> to vector<80x84xf32>
    %c3_44 = arith.constant 3 : index
    %c0_45 = arith.constant 0 : index
    %c0_46 = arith.constant 0 : index
    %60 = vector.load %arg4[%c3_44, %c0_45, %c0_46] : memref<5x84x160xf32, #tpu.memory_space<vmem>>, vector<1x84x160xf32>
    %61 = vector.shape_cast %60 : vector<1x84x160xf32> to vector<84x160xf32>
    %cst_47 = arith.constant dense<0.000000e+00> : vector<80x160xf32>
    %62 = tpu.matmul %59, %61, %cst_47 {dimension_numbers = #tpu.dot_dimension_numbers<[1], [0], [0], [1], [0, 0, 1, 1], [], []>} : vector<80x84xf32>, vector<84x160xf32>, vector<80x160xf32> -> vector<80x160xf32>
    %63 = arith.addf %57, %62 : vector<80x160xf32>
    %64 = vector.extract_strided_slice %40 {offsets = [4, 0, 0], sizes = [10, 8, 84], strides = [1, 1, 1]} : vector<14x8x84xf32> to vector<10x8x84xf32>
    %65 = vector.shape_cast %64 : vector<10x8x84xf32> to vector<80x84xf32>
    %c4_48 = arith.constant 4 : index
    %c0_49 = arith.constant 0 : index
    %c0_50 = arith.constant 0 : index
    %66 = vector.load %arg4[%c4_48, %c0_49, %c0_50] : memref<5x84x160xf32, #tpu.memory_space<vmem>>, vector<1x84x160xf32>
    %67 = vector.shape_cast %66 : vector<1x84x160xf32> to vector<84x160xf32>
    %cst_51 = arith.constant dense<0.000000e+00> : vector<80x160xf32>
    %68 = tpu.matmul %65, %67, %cst_51 {dimension_numbers = #tpu.dot_dimension_numbers<[1], [0], [0], [1], [0, 0, 1, 1], [], []>} : vector<80x84xf32>, vector<84x160xf32>, vector<80x160xf32> -> vector<80x160xf32>
    %69 = arith.addf %63, %68 : vector<80x160xf32>
    %c0_52 = arith.constant 0 : index
    %c0_53 = arith.constant 0 : index
    %70 = vector.load %arg5[%c0_52, %c0_53] : memref<1x160xf32, #tpu.memory_space<vmem>>, vector<1x160xf32>
    %71 = vector.broadcast %70 : vector<1x160xf32> to vector<80x160xf32>
    %72 = arith.addf %69, %71 : vector<80x160xf32>
    %cst_54 = arith.constant 0.000000e+00 : f32
    %73 = vector.broadcast %cst_54 : f32 to vector<80x160xf32>
    %74 = arith.maximumf %72, %73 : vector<80x160xf32>
    %75 = vector.extract_strided_slice %74 {offsets = [0, 0], sizes = [80, 80], strides = [1, 1]} : vector<80x160xf32> to vector<80x80xf32>
    %76 = vector.extract_strided_slice %74 {offsets = [0, 80], sizes = [80, 80], strides = [1, 1]} : vector<80x160xf32> to vector<80x80xf32>
    %77 = arith.maximumf %75, %76 : vector<80x80xf32>
    %78 = vector.shape_cast %77 : vector<80x80xf32> to vector<5x16x80xf32>
    %79 = vector.extract_strided_slice %78 {offsets = [0, 0, 0], sizes = [5, 8, 80], strides = [1, 1, 1]} : vector<5x16x80xf32> to vector<5x8x80xf32>
    %80 = vector.extract_strided_slice %78 {offsets = [0, 8, 0], sizes = [5, 8, 80], strides = [1, 1, 1]} : vector<5x16x80xf32> to vector<5x8x80xf32>
    %81 = arith.maximumf %79, %80 : vector<5x8x80xf32>
    %82 = vector.extract_strided_slice %81 {offsets = [0, 0, 0], sizes = [1, 8, 80], strides = [1, 1, 1]} : vector<5x8x80xf32> to vector<1x8x80xf32>
    %83 = vector.shape_cast %82 : vector<1x8x80xf32> to vector<8x80xf32>
    %c0_55 = arith.constant 0 : index
    %c0_56 = arith.constant 0 : index
    %c0_57 = arith.constant 0 : index
    %84 = vector.load %arg6[%c0_55, %c0_56, %c0_57] : memref<5x80x120xf32, #tpu.memory_space<vmem>>, vector<1x80x120xf32>
    %85 = vector.shape_cast %84 : vector<1x80x120xf32> to vector<80x120xf32>
    %cst_58 = arith.constant dense<0.000000e+00> : vector<8x120xf32>
    %86 = tpu.matmul %83, %85, %cst_58 {dimension_numbers = #tpu.dot_dimension_numbers<[1], [0], [0], [1], [0, 0, 1, 1], [], []>} : vector<8x80xf32>, vector<80x120xf32>, vector<8x120xf32> -> vector<8x120xf32>
    %87 = vector.extract_strided_slice %81 {offsets = [1, 0, 0], sizes = [1, 8, 80], strides = [1, 1, 1]} : vector<5x8x80xf32> to vector<1x8x80xf32>
    %88 = vector.shape_cast %87 : vector<1x8x80xf32> to vector<8x80xf32>
    %c1_59 = arith.constant 1 : index
    %c0_60 = arith.constant 0 : index
    %c0_61 = arith.constant 0 : index
    %89 = vector.load %arg6[%c1_59, %c0_60, %c0_61] : memref<5x80x120xf32, #tpu.memory_space<vmem>>, vector<1x80x120xf32>
    %90 = vector.shape_cast %89 : vector<1x80x120xf32> to vector<80x120xf32>
    %cst_62 = arith.constant dense<0.000000e+00> : vector<8x120xf32>
    %91 = tpu.matmul %88, %90, %cst_62 {dimension_numbers = #tpu.dot_dimension_numbers<[1], [0], [0], [1], [0, 0, 1, 1], [], []>} : vector<8x80xf32>, vector<80x120xf32>, vector<8x120xf32> -> vector<8x120xf32>
    %92 = arith.addf %86, %91 : vector<8x120xf32>
    %93 = vector.extract_strided_slice %81 {offsets = [2, 0, 0], sizes = [1, 8, 80], strides = [1, 1, 1]} : vector<5x8x80xf32> to vector<1x8x80xf32>
    %94 = vector.shape_cast %93 : vector<1x8x80xf32> to vector<8x80xf32>
    %c2_63 = arith.constant 2 : index
    %c0_64 = arith.constant 0 : index
    %c0_65 = arith.constant 0 : index
    %95 = vector.load %arg6[%c2_63, %c0_64, %c0_65] : memref<5x80x120xf32, #tpu.memory_space<vmem>>, vector<1x80x120xf32>
    %96 = vector.shape_cast %95 : vector<1x80x120xf32> to vector<80x120xf32>
    %cst_66 = arith.constant dense<0.000000e+00> : vector<8x120xf32>
    %97 = tpu.matmul %94, %96, %cst_66 {dimension_numbers = #tpu.dot_dimension_numbers<[1], [0], [0], [1], [0, 0, 1, 1], [], []>} : vector<8x80xf32>, vector<80x120xf32>, vector<8x120xf32> -> vector<8x120xf32>
    %98 = arith.addf %92, %97 : vector<8x120xf32>
    %99 = vector.extract_strided_slice %81 {offsets = [3, 0, 0], sizes = [1, 8, 80], strides = [1, 1, 1]} : vector<5x8x80xf32> to vector<1x8x80xf32>
    %100 = vector.shape_cast %99 : vector<1x8x80xf32> to vector<8x80xf32>
    %c3_67 = arith.constant 3 : index
    %c0_68 = arith.constant 0 : index
    %c0_69 = arith.constant 0 : index
    %101 = vector.load %arg6[%c3_67, %c0_68, %c0_69] : memref<5x80x120xf32, #tpu.memory_space<vmem>>, vector<1x80x120xf32>
    %102 = vector.shape_cast %101 : vector<1x80x120xf32> to vector<80x120xf32>
    %cst_70 = arith.constant dense<0.000000e+00> : vector<8x120xf32>
    %103 = tpu.matmul %100, %102, %cst_70 {dimension_numbers = #tpu.dot_dimension_numbers<[1], [0], [0], [1], [0, 0, 1, 1], [], []>} : vector<8x80xf32>, vector<80x120xf32>, vector<8x120xf32> -> vector<8x120xf32>
    %104 = arith.addf %98, %103 : vector<8x120xf32>
    %105 = vector.extract_strided_slice %81 {offsets = [4, 0, 0], sizes = [1, 8, 80], strides = [1, 1, 1]} : vector<5x8x80xf32> to vector<1x8x80xf32>
    %106 = vector.shape_cast %105 : vector<1x8x80xf32> to vector<8x80xf32>
    %c4_71 = arith.constant 4 : index
    %c0_72 = arith.constant 0 : index
    %c0_73 = arith.constant 0 : index
    %107 = vector.load %arg6[%c4_71, %c0_72, %c0_73] : memref<5x80x120xf32, #tpu.memory_space<vmem>>, vector<1x80x120xf32>
    %108 = vector.shape_cast %107 : vector<1x80x120xf32> to vector<80x120xf32>
    %cst_74 = arith.constant dense<0.000000e+00> : vector<8x120xf32>
    %109 = tpu.matmul %106, %108, %cst_74 {dimension_numbers = #tpu.dot_dimension_numbers<[1], [0], [0], [1], [0, 0, 1, 1], [], []>} : vector<8x80xf32>, vector<80x120xf32>, vector<8x120xf32> -> vector<8x120xf32>
    %110 = arith.addf %104, %109 : vector<8x120xf32>
    %c0_75 = arith.constant 0 : index
    %c0_76 = arith.constant 0 : index
    %111 = vector.load %arg7[%c0_75, %c0_76] : memref<1x120xf32, #tpu.memory_space<vmem>>, vector<1x120xf32>
    %112 = vector.broadcast %111 : vector<1x120xf32> to vector<8x120xf32>
    %113 = arith.addf %110, %112 : vector<8x120xf32>
    %cst_77 = arith.constant 0.000000e+00 : f32
    %114 = vector.broadcast %cst_77 : f32 to vector<8x120xf32>
    %115 = arith.maximumf %113, %114 : vector<8x120xf32>
    %c0_78 = arith.constant 0 : index
    %c0_79 = arith.constant 0 : index
    %116 = vector.load %arg8[%c0_78, %c0_79] : memref<120x84xf32, #tpu.memory_space<vmem>>, vector<120x84xf32>
    %cst_80 = arith.constant dense<0.000000e+00> : vector<8x84xf32>
    %117 = tpu.matmul %115, %116, %cst_80 {dimension_numbers = #tpu.dot_dimension_numbers<[1], [0], [0], [1], [0, 0, 1, 1], [], []>} : vector<8x120xf32>, vector<120x84xf32>, vector<8x84xf32> -> vector<8x84xf32>
    %c0_81 = arith.constant 0 : index
    %c0_82 = arith.constant 0 : index
    %118 = vector.load %arg9[%c0_81, %c0_82] : memref<1x84xf32, #tpu.memory_space<vmem>>, vector<1x84xf32>
    %119 = vector.broadcast %118 : vector<1x84xf32> to vector<8x84xf32>
    %120 = arith.addf %117, %119 : vector<8x84xf32>
    %cst_83 = arith.constant 0.000000e+00 : f32
    %121 = vector.broadcast %cst_83 : f32 to vector<8x84xf32>
    %122 = arith.maximumf %120, %121 : vector<8x84xf32>
    %c0_84 = arith.constant 0 : index
    %c0_85 = arith.constant 0 : index
    %123 = vector.load %arg10[%c0_84, %c0_85] : memref<84x128xf32, #tpu.memory_space<vmem>>, vector<84x128xf32>
    %cst_86 = arith.constant dense<0.000000e+00> : vector<8x128xf32>
    %124 = tpu.matmul %122, %123, %cst_86 {dimension_numbers = #tpu.dot_dimension_numbers<[1], [0], [0], [1], [0, 0, 1, 1], [], []>} : vector<8x84xf32>, vector<84x128xf32>, vector<8x128xf32> -> vector<8x128xf32>
    %c0_87 = arith.constant 0 : index
    %c0_88 = arith.constant 0 : index
    %125 = vector.load %arg11[%c0_87, %c0_88] : memref<1x128xf32, #tpu.memory_space<vmem>>, vector<1x128xf32>
    %126 = vector.broadcast %125 : vector<1x128xf32> to vector<8x128xf32>
    %127 = arith.addf %124, %126 : vector<8x128xf32>
    %cst_89 = arith.constant dense<0xFF800000> : vector<8xf32>
    %128 = vector.multi_reduction <maximumf>, %127, %cst_89 [1] : vector<8x128xf32> to vector<8xf32>
    %129 = vector.shape_cast %128 : vector<8xf32> to vector<8x1xf32>
    %130 = vector.broadcast %129 : vector<8x1xf32> to vector<8x128xf32>
    %131 = arith.subf %127, %130 : vector<8x128xf32>
    %132 = math.exp %131 : vector<8x128xf32>
    %cst_90 = arith.constant dense<0.000000e+00> : vector<8xf32>
    %133 = vector.multi_reduction <add>, %132, %cst_90 [1] : vector<8x128xf32> to vector<8xf32>
    %134 = vector.shape_cast %133 : vector<8xf32> to vector<8x1xf32>
    %135 = math.log %134 : vector<8x1xf32>
    %136 = vector.broadcast %135 : vector<8x1xf32> to vector<8x128xf32>
    %137 = arith.subf %131, %136 : vector<8x128xf32>
    %c0_91 = arith.constant 0 : index
    %c0_92 = arith.constant 0 : index
    %138 = vector.load %arg12[%c0_91, %c0_92] : memref<8x128xf32, #tpu.memory_space<vmem>>, vector<8x128xf32>
    tpu.vector_store %arg12[%c0_91, %c0_92], %137 {strides = array<i32>} : memref<8x128xf32, #tpu.memory_space<vmem>>, vector<8x128xf32>,
    return
  }
  func.func @transform_0(%arg0: i32) -> (i32, i32, i32) {
    %c0_i32 = arith.constant 0 : i32
    %c0_i32_0 = arith.constant 0 : i32
    %c0_i32_1 = arith.constant 0 : i32
    return %c0_i32, %arg0, %c0_i32_0 : i32, i32, i32
  }
  func.func @transform_1(%arg0: i32) -> (i32, i32, i32) {
    %c0_i32 = arith.constant 0 : i32
    %c0_i32_0 = arith.constant 0 : i32
    %c0_i32_1 = arith.constant 0 : i32
    %c0_i32_2 = arith.constant 0 : i32
    return %c0_i32, %c0_i32_0, %c0_i32_1 : i32, i32, i32
  }
  func.func @transform_2(%arg0: i32) -> (i32, i32) {
    %c0_i32 = arith.constant 0 : i32
    %c0_i32_0 = arith.constant 0 : i32
    %c0_i32_1 = arith.constant 0 : i32
    return %c0_i32, %c0_i32_0 : i32, i32
  }
  func.func @transform_3(%arg0: i32) -> (i32, i32, i32) {
    %c0_i32 = arith.constant 0 : i32
    %c0_i32_0 = arith.constant 0 : i32
    %c0_i32_1 = arith.constant 0 : i32
    %c0_i32_2 = arith.constant 0 : i32
    return %c0_i32, %c0_i32_0, %c0_i32_1 : i32, i32, i32
  }
  func.func @transform_4(%arg0: i32) -> (i32, i32) {
    %c0_i32 = arith.constant 0 : i32
    %c0_i32_0 = arith.constant 0 : i32
    %c0_i32_1 = arith.constant 0 : i32
    return %c0_i32, %c0_i32_0 : i32, i32
  }
  func.func @transform_5(%arg0: i32) -> (i32, i32, i32) {
    %c0_i32 = arith.constant 0 : i32
    %c0_i32_0 = arith.constant 0 : i32
    %c0_i32_1 = arith.constant 0 : i32
    %c0_i32_2 = arith.constant 0 : i32
    return %c0_i32, %c0_i32_0, %c0_i32_1 : i32, i32, i32
  }
  func.func @transform_6(%arg0: i32) -> (i32, i32) {
    %c0_i32 = arith.constant 0 : i32
    %c0_i32_0 = arith.constant 0 : i32
    %c0_i32_1 = arith.constant 0 : i32
    return %c0_i32, %c0_i32_0 : i32, i32
  }
  func.func @transform_7(%arg0: i32) -> (i32, i32) {
    %c0_i32 = arith.constant 0 : i32
    %c0_i32_0 = arith.constant 0 : i32
    %c0_i32_1 = arith.constant 0 : i32
    return %c0_i32, %c0_i32_0 : i32, i32
  }
  func.func @transform_8(%arg0: i32) -> (i32, i32) {
    %c0_i32 = arith.constant 0 : i32
    %c0_i32_0 = arith.constant 0 : i32
    %c0_i32_1 = arith.constant 0 : i32
    return %c0_i32, %c0_i32_0 : i32, i32
  }
  func.func @transform_9(%arg0: i32) -> (i32, i32) {
    %c0_i32 = arith.constant 0 : i32
    %c0_i32_0 = arith.constant 0 : i32
    %c0_i32_1 = arith.constant 0 : i32
    return %c0_i32, %c0_i32_0 : i32, i32
  }
  func.func @transform_10(%arg0: i32) -> (i32, i32) {
    %c0_i32 = arith.constant 0 : i32
    %c0_i32_0 = arith.constant 0 : i32
    %c0_i32_1 = arith.constant 0 : i32
    return %c0_i32, %c0_i32_0 : i32, i32
  }
  func.func @transform_11(%arg0: i32) -> (i32, i32) {
    %c0_i32 = arith.constant 0 : i32
    %c0_i32_0 = arith.constant 0 : i32
    return %arg0, %c0_i32 : i32, i32
  }
}

</mosaic_0001>

<llo_original>
// kernel: cnn_cifar_all_forward.1
$region0: #{cnn_cifar_all_forward.1}
  #allocation0 [shape = 'u32[]', space=smem, size = 0x4, offset = 0x4, fixed_abs, tag = 'smem constant byte address 0x4 - core index']
  #allocation1 [shape = 'u32[72,128]{1,0:T(1,128)}', space=vmem, size = 0x9000, scoped, tag = 'internal scratch']
  %s0 = inlined_call_operand.vmem [shape: f32[32,8,96], index: 0, kind: input, shape index: {}]
  %s1 = inlined_call_operand.vmem [shape: f32[5,96,168], index: 1, kind: input, shape index: {}]
  %s2 = inlined_call_operand.vmem [shape: f32[1,168], index: 2, kind: input, shape index: {}]
  %s3 = inlined_call_operand.vmem [shape: f32[5,84,160], index: 3, kind: input, shape index: {}]
  %s4 = inlined_call_operand.vmem [shape: f32[1,160], index: 4, kind: input, shape index: {}]
  %s5 = inlined_call_operand.vmem [shape: f32[5,80,120], index: 5, kind: input, shape index: {}]
  %s6 = inlined_call_operand.vmem [shape: f32[1,120], index: 6, kind: input, shape index: {}]
  %s7 = inlined_call_operand.vmem [shape: f32[120,84], index: 7, kind: input, shape index: {}]
  %s8 = inlined_call_operand.vmem [shape: f32[1,84], index: 8, kind: input, shape index: {}]
  %s9 = inlined_call_operand.vmem [shape: f32[84,128], index: 9, kind: input, shape index: {}]
  %s10 = inlined_call_operand.vmem [shape: f32[1,128], index: 10, kind: input, shape index: {}]
  %s11 = inlined_call_operand.vmem [shape: f32[8,128], index: 11, kind: output, shape index: {}]
  %s12 = sld [smem:[#allocation0]]
  $region54: #{cnn_cifar_all_forward.1} parent=0
    _
  %s14 = ssub.s32 1, %s12
  %s15 = scalar_select 0, %s14, %s12
  // Predicated region
  $region2: #{cnn_cifar_all_forward.1} parent=0 // pred_check
    _
  $region3: #{cnn_cifar_all_forward.1} parent=0 // pred_check_branch
    %17 = sbr.rel (0) target = $region5
  $region4: #{cnn_cifar_all_forward.1} parent=0 // pred_region
    _
  $region5: #{cnn_cifar_all_forward.1} parent=0 // pred_fallthru
    _
  // Predicated region
  $region6: #{cnn_cifar_all_forward.1} parent=0 // pred_check
    _
  $region7: #{cnn_cifar_all_forward.1} parent=0 // pred_check_branch
    %19 = sbr.rel (0) target = $region9
  $region8: #{cnn_cifar_all_forward.1} parent=0 // pred_region
    _
  $region9: #{cnn_cifar_all_forward.1} parent=0 // pred_fallthru
    _
  // Predicated region
  $region10: #{cnn_cifar_all_forward.1} parent=0 // pred_check
    _
  $region11: #{cnn_cifar_all_forward.1} parent=0 // pred_check_branch
    %21 = sbr.rel (0) target = $region13
  $region12: #{cnn_cifar_all_forward.1} parent=0 // pred_region
    _
  $region13: #{cnn_cifar_all_forward.1} parent=0 // pred_fallthru
    _
  // Predicated region
  $region14: #{cnn_cifar_all_forward.1} parent=0 // pred_check
    _
  $region15: #{cnn_cifar_all_forward.1} parent=0 // pred_check_branch
    %23 = sbr.rel (0) target = $region17
  $region16: #{cnn_cifar_all_forward.1} parent=0 // pred_region
    _
  $region17: #{cnn_cifar_all_forward.1} parent=0 // pred_fallthru
    _
  // Predicated region
  $region18: #{cnn_cifar_all_forward.1} parent=0 // pred_check
    _
  $region19: #{cnn_cifar_all_forward.1} parent=0 // pred_check_branch
    %25 = sbr.rel (0) target = $region21
  $region20: #{cnn_cifar_all_forward.1} parent=0 // pred_region
    _
  $region21: #{cnn_cifar_all_forward.1} parent=0 // pred_fallthru
    _
  // Predicated region
  $region22: #{cnn_cifar_all_forward.1} parent=0 // pred_check
    _
  $region23: #{cnn_cifar_all_forward.1} parent=0 // pred_check_branch
    %27 = sbr.rel (0) target = $region25
  $region24: #{cnn_cifar_all_forward.1} parent=0 // pred_region
    _
  $region25: #{cnn_cifar_all_forward.1} parent=0 // pred_fallthru
    _
  // Predicated region
  $region26: #{cnn_cifar_all_forward.1} parent=0 // pred_check
    _
  $region27: #{cnn_cifar_all_forward.1} parent=0 // pred_check_branch
    %29 = sbr.rel (0) target = $region29
  $region28: #{cnn_cifar_all_forward.1} parent=0 // pred_region
    _
  $region29: #{cnn_cifar_all_forward.1} parent=0 // pred_fallthru
    _
  // Predicated region
  $region30: #{cnn_cifar_all_forward.1} parent=0 // pred_check
    _
  $region31: #{cnn_cifar_all_forward.1} parent=0 // pred_check_branch
    %31 = sbr.rel (0) target = $region33
  $region32: #{cnn_cifar_all_forward.1} parent=0 // pred_region
    _
  $region33: #{cnn_cifar_all_forward.1} parent=0 // pred_fallthru
    _
  // Predicated region
  $region34: #{cnn_cifar_all_forward.1} parent=0 // pred_check
    _
  $region35: #{cnn_cifar_all_forward.1} parent=0 // pred_check_branch
    %33 = sbr.rel (0) target = $region37
  $region36: #{cnn_cifar_all_forward.1} parent=0 // pred_region
    _
  $region37: #{cnn_cifar_all_forward.1} parent=0 // pred_fallthru
    _
  // Predicated region
  $region38: #{cnn_cifar_all_forward.1} parent=0 // pred_check
    _
  $region39: #{cnn_cifar_all_forward.1} parent=0 // pred_check_branch
    %35 = sbr.rel (0) target = $region41
  $region40: #{cnn_cifar_all_forward.1} parent=0 // pred_region
    _
  $region41: #{cnn_cifar_all_forward.1} parent=0 // pred_fallthru
    _
  // Predicated region
  $region42: #{cnn_cifar_all_forward.1} parent=0 // pred_check
    _
  $region43: #{cnn_cifar_all_forward.1} parent=0 // pred_check_branch
    %37 = sbr.rel (0) target = $region45
  $region44: #{cnn_cifar_all_forward.1} parent=0 // pred_region
    _
  $region45: #{cnn_cifar_all_forward.1} parent=0 // pred_fallthru
    _
  %v38 = vld [vmem:[%s0] sm:$0xff]
  %v39 = vld [vmem:[%s0 + $0x8] sm:$0xff]
  %v40 = vld [vmem:[%s0 + $0x10] sm:$0xff]
  %v41 = vld [vmem:[%s0 + $0x18] sm:$0xff]
  %v42 = vld [vmem:[%s0 + $0x20] sm:$0xff]
  %v43 = vld [vmem:[%s0 + $0x28] sm:$0xff]
  %v44 = vld [vmem:[%s0 + $0x30] sm:$0xff]
  %v45 = vld [vmem:[%s0 + $0x38] sm:$0xff]
  %v46 = vld [vmem:[%s0 + $0x40] sm:$0xff]
  %v47 = vld [vmem:[%s0 + $0x48] sm:$0xff]
  %v48 = vld [vmem:[%s0 + $0x50] sm:$0xff]
  %v49 = vld [vmem:[%s0 + $0x58] sm:$0xff]
  %v50 = vld [vmem:[%s0 + $0x60] sm:$0xff]
  %v51 = vld [vmem:[%s0 + $0x68] sm:$0xff]
  %v52 = vld [vmem:[%s0 + $0x70] sm:$0xff]
  %v53 = vld [vmem:[%s0 + $0x78] sm:$0xff]
  %v54 = vld [vmem:[%s0 + $0x80] sm:$0xff]
  %v55 = vld [vmem:[%s0 + $0x88] sm:$0xff]
  %v56 = vld [vmem:[%s0 + $0x90] sm:$0xff]
  %v57 = vld [vmem:[%s0 + $0x98] sm:$0xff]
  %v58 = vld [vmem:[%s0 + $0xa0] sm:$0xff]
  %v59 = vld [vmem:[%s0 + $0xa8] sm:$0xff]
  %v60 = vld [vmem:[%s0 + $0xb0] sm:$0xff]
  %v61 = vld [vmem:[%s0 + $0xb8] sm:$0xff]
  %v62 = vld [vmem:[%s0 + $0xc0] sm:$0xff]
  %v63 = vld [vmem:[%s0 + $0xc8] sm:$0xff]
  %v64 = vld [vmem:[%s0 + $0xd0] sm:$0xff]
  %v65 = vld [vmem:[%s0 + $0xd8] sm:$0xff]
  %v66 = vld [vmem:[%s1] sm:$0xff]
  %v67 = vld [vmem:[%s1 + $0x8] sm:$0xff]
  %v68 = vld [vmem:[%s1 + $0x10] sm:$0xff]
  %v69 = vld [vmem:[%s1 + $0x18] sm:$0xff]
  %v70 = vld [vmem:[%s1 + $0x20] sm:$0xff]
  %v71 = vld [vmem:[%s1 + $0x28] sm:$0xff]
  %v72 = vld [vmem:[%s1 + $0x30] sm:$0xff]
  %v73 = vld [vmem:[%s1 + $0x38] sm:$0xff]
  %v74 = vld [vmem:[%s1 + $0x40] sm:$0xff]
  %v75 = vld [vmem:[%s1 + $0x48] sm:$0xff]
  %v76 = vld [vmem:[%s1 + $0x50] sm:$0xff]
  %v77 = vld [vmem:[%s1 + $0x58] sm:$0xff]
  %v78 = vld [vmem:[%s1 + $0x60] sm:$0xff]
  %v79 = vld [vmem:[%s1 + $0x68] sm:$0xff]
  %v80 = vld [vmem:[%s1 + $0x70] sm:$0xff]
  %v81 = vld [vmem:[%s1 + $0x78] sm:$0xff]
  %v82 = vld [vmem:[%s1 + $0x80] sm:$0xff]
  %v83 = vld [vmem:[%s1 + $0x88] sm:$0xff]
  %v84 = vld [vmem:[%s1 + $0x90] sm:$0xff]
  %v85 = vld [vmem:[%s1 + $0x98] sm:$0xff]
  %v86 = vld [vmem:[%s1 + $0xa0] sm:$0xff]
  %v87 = vld [vmem:[%s1 + $0xa8] sm:$0xff]
  %v88 = vld [vmem:[%s1 + $0xb0] sm:$0xff]
  %v89 = vld [vmem:[%s1 + $0xb8] sm:$0xff]
  %s90 = scalar_lea.vmem %s0, 8
  %v91 = vld [vmem:[%s90] sm:$0xff]
  %v92 = vld [vmem:[%s90 + $0x8] sm:$0xff]
  %v93 = vld [vmem:[%s90 + $0x10] sm:$0xff]
  %v94 = vld [vmem:[%s90 + $0x18] sm:$0xff]
  %v95 = vld [vmem:[%s90 + $0x20] sm:$0xff]
  %v96 = vld [vmem:[%s90 + $0x28] sm:$0xff]
  %v97 = vld [vmem:[%s90 + $0x30] sm:$0xff]
  %v98 = vld [vmem:[%s90 + $0x38] sm:$0xff]
  %v99 = vld [vmem:[%s90 + $0x40] sm:$0xff]
  %v100 = vld [vmem:[%s90 + $0x48] sm:$0xff]
  %v101 = vld [vmem:[%s90 + $0x50] sm:$0xff]
  %v102 = vld [vmem:[%s90 + $0x58] sm:$0xff]
  %v103 = vld [vmem:[%s90 + $0x60] sm:$0xff]
  %v104 = vld [vmem:[%s90 + $0x68] sm:$0xff]
  %v105 = vld [vmem:[%s90 + $0x70] sm:$0xff]
  %v106 = vld [vmem:[%s90 + $0x78] sm:$0xff]
  %v107 = vld [vmem:[%s90 + $0x80] sm:$0xff]
  %v108 = vld [vmem:[%s90 + $0x88] sm:$0xff]
  %v109 = vld [vmem:[%s90 + $0x90] sm:$0xff]
  %v110 = vld [vmem:[%s90 + $0x98] sm:$0xff]
  %v111 = vld [vmem:[%s90 + $0xa0] sm:$0xff]
  %v112 = vld [vmem:[%s90 + $0xa8] sm:$0xff]
  %v113 = vld [vmem:[%s90 + $0xb0] sm:$0xff]
  %v114 = vld [vmem:[%s90 + $0xb8] sm:$0xff]
  %v115 = vld [vmem:[%s90 + $0xc0] sm:$0xff]
  %v116 = vld [vmem:[%s90 + $0xc8] sm:$0xff]
  %v117 = vld [vmem:[%s90 + $0xd0] sm:$0xff]
  %v118 = vld [vmem:[%s90 + $0xd8] sm:$0xff]
  %s119 = scalar_lea.vmem %s1, 192
  %v120 = vld [vmem:[%s119] sm:$0xff]
  %v121 = vld [vmem:[%s119 + $0x8] sm:$0xff]
  %v122 = vld [vmem:[%s119 + $0x10] sm:$0xff]
  %v123 = vld [vmem:[%s119 + $0x18] sm:$0xff]
  %v124 = vld [vmem:[%s119 + $0x20] sm:$0xff]
  %v125 = vld [vmem:[%s119 + $0x28] sm:$0xff]
  %v126 = vld [vmem:[%s119 + $0x30] sm:$0xff]
  %v127 = vld [vmem:[%s119 + $0x38] sm:$0xff]
  %v128 = vld [vmem:[%s119 + $0x40] sm:$0xff]
  %v129 = vld [vmem:[%s119 + $0x48] sm:$0xff]
  %v130 = vld [vmem:[%s119 + $0x50] sm:$0xff]
  %v131 = vld [vmem:[%s119 + $0x58] sm:$0xff]
  %v132 = vld [vmem:[%s119 + $0x60] sm:$0xff]
  %v133 = vld [vmem:[%s119 + $0x68] sm:$0xff]
  %v134 = vld [vmem:[%s119 + $0x70] sm:$0xff]
  %v135 = vld [vmem:[%s119 + $0x78] sm:$0xff]
  %v136 = vld [vmem:[%s119 + $0x80] sm:$0xff]
  %v137 = vld [vmem:[%s119 + $0x88] sm:$0xff]
  %v138 = vld [vmem:[%s119 + $0x90] sm:$0xff]
  %v139 = vld [vmem:[%s119 + $0x98] sm:$0xff]
  %v140 = vld [vmem:[%s119 + $0xa0] sm:$0xff]
  %v141 = vld [vmem:[%s119 + $0xa8] sm:$0xff]
  %v142 = vld [vmem:[%s119 + $0xb0] sm:$0xff]
  %v143 = vld [vmem:[%s119 + $0xb8] sm:$0xff]
  %vm144 = vcmask 785408
  %v146 = vsel %vm144, %v91, 0
  %v149 = vsel %vm144, %v92, 0
  %v152 = vsel %vm144, %v93, 0
  %v155 = vsel %vm144, %v94, 0
  %v158 = vsel %vm144, %v95, 0
  %v161 = vsel %vm144, %v96, 0
  %v164 = vsel %vm144, %v97, 0
  %v167 = vsel %vm144, %v98, 0
  %v170 = vsel %vm144, %v99, 0
  %v173 = vsel %vm144, %v100, 0
  %v176 = vsel %vm144, %v101, 0
  %v179 = vsel %vm144, %v102, 0
  %v182 = vsel %vm144, %v103, 0
  %v185 = vsel %vm144, %v104, 0
  %v188 = vsel %vm144, %v105, 0
  %v191 = vsel %vm144, %v106, 0
  %v194 = vsel %vm144, %v107, 0
  %v197 = vsel %vm144, %v108, 0
  %v200 = vsel %vm144, %v109, 0
  %v203 = vsel %vm144, %v110, 0
  %v206 = vsel %vm144, %v111, 0
  %v209 = vsel %vm144, %v112, 0
  %v212 = vsel %vm144, %v113, 0
  %v215 = vsel %vm144, %v114, 0
  %v218 = vsel %vm144, %v115, 0
  %v221 = vsel %vm144, %v116, 0
  %v224 = vsel %vm144, %v117, 0
  %v227 = vsel %vm144, %v118, 0
  %229 = vmatpush.msra.mxu0 0.0
  %230 = vmatpush.msra.mxu0 0.0
  %231 = vmatpush.msra.mxu0 0.0
  %232 = vmatpush.msra.mxu0 0.0
  %233 = vmatpush.msra.mxu0 %v142
  %234 = vmatpush.msra.mxu0 %v140
  %235 = vmatpush.msra.mxu0 %v138
  %236 = vmatpush.msra.mxu0 %v136
  %237 = vmatpush.msra.mxu0 %v134
  %238 = vmatpush.msra.mxu0 %v132
  %239 = vmatpush.msra.mxu0 %v130
  %240 = vmatpush.msra.mxu0 %v128
  %241 = vmatpush.msra.mxu0 %v126
  %242 = vmatpush.msra.mxu0 %v124
  %243 = vmatpush.msra.mxu0 %v122
  %244 = vmatpush.msra.mxu0 %v120
  %245 = vmatmul.f32.gmra.mxu0 %v146
  %v246 = vpop.f32.mrf.mxu0
  %v247 = vadd.f32 0.0, %v246
  %248 = vmatmul.f32.gmra.mxu0 %v149
  %v249 = vpop.f32.mrf.mxu0
  %v250 = vadd.f32 0.0, %v249
  %251 = vmatmul.f32.gmra.mxu0 %v152
  %v252 = vpop.f32.mrf.mxu0
  %v253 = vadd.f32 0.0, %v252
  %254 = vmatmul.f32.gmra.mxu0 %v155
  %v255 = vpop.f32.mrf.mxu0
  %v256 = vadd.f32 0.0, %v255
  %257 = vmatmul.f32.gmra.mxu0 %v158
  %v258 = vpop.f32.mrf.mxu0
  %v259 = vadd.f32 0.0, %v258
  %260 = vmatmul.f32.gmra.mxu0 %v161
  %v261 = vpop.f32.mrf.mxu0
  %v262 = vadd.f32 0.0, %v261
  %263 = vmatmul.f32.gmra.mxu0 %v164
  %v264 = vpop.f32.mrf.mxu0
  %v265 = vadd.f32 0.0, %v264
  %266 = vmatmul.f32.gmra.mxu0 %v167
  %v267 = vpop.f32.mrf.mxu0
  %v268 = vadd.f32 0.0, %v267
  %269 = vmatmul.f32.gmra.mxu0 %v170
  %v270 = vpop.f32.mrf.mxu0
  %v271 = vadd.f32 0.0, %v270
  %272 = vmatmul.f32.gmra.mxu0 %v173
  %v273 = vpop.f32.mrf.mxu0
  %v274 = vadd.f32 0.0, %v273
  %275 = vmatmul.f32.gmra.mxu0 %v176
  %v276 = vpop.f32.mrf.mxu0
  %v277 = vadd.f32 0.0, %v276
  %278 = vmatmul.f32.gmra.mxu0 %v179
  %v279 = vpop.f32.mrf.mxu0
  %v280 = vadd.f32 0.0, %v279
  %281 = vmatmul.f32.gmra.mxu0 %v182
  %v282 = vpop.f32.mrf.mxu0
  %v283 = vadd.f32 0.0, %v282
  %284 = vmatmul.f32.gmra.mxu0 %v185
  %v285 = vpop.f32.mrf.mxu0
  %v286 = vadd.f32 0.0, %v285
  %287 = vmatmul.f32.gmra.mxu0 %v188
  %v288 = vpop.f32.mrf.mxu0
  %v289 = vadd.f32 0.0, %v288
  %290 = vmatmul.f32.gmra.mxu0 %v191
  %v291 = vpop.f32.mrf.mxu0
  %v292 = vadd.f32 0.0, %v291
  %293 = vmatmul.f32.gmra.mxu0 %v194
  %v294 = vpop.f32.mrf.mxu0
  %v295 = vadd.f32 0.0, %v294
  %296 = vmatmul.f32.gmra.mxu0 %v197
  %v297 = vpop.f32.mrf.mxu0
  %v298 = vadd.f32 0.0, %v297
  %299 = vmatmul.f32.gmra.mxu0 %v200
  %v300 = vpop.f32.mrf.mxu0
  %v301 = vadd.f32 0.0, %v300
  %302 = vmatmul.f32.gmra.mxu0 %v203
  %v303 = vpop.f32.mrf.mxu0
  %v304 = vadd.f32 0.0, %v303
  %305 = vmatmul.f32.gmra.mxu0 %v206
  %v306 = vpop.f32.mrf.mxu0
  %v307 = vadd.f32 0.0, %v306
  %308 = vmatmul.f32.gmra.mxu0 %v209
  %v309 = vpop.f32.mrf.mxu0
  %v310 = vadd.f32 0.0, %v309
  %311 = vmatmul.f32.gmra.mxu0 %v212
  %v312 = vpop.f32.mrf.mxu0
  %v313 = vadd.f32 0.0, %v312
  %314 = vmatmul.f32.gmra.mxu0 %v215
  %v315 = vpop.f32.mrf.mxu0
  %v316 = vadd.f32 0.0, %v315
  %317 = vmatmul.f32.gmra.mxu0 %v218
  %v318 = vpop.f32.mrf.mxu0
  %v319 = vadd.f32 0.0, %v318
  %320 = vmatmul.f32.gmra.mxu0 %v221
  %v321 = vpop.f32.mrf.mxu0
  %v322 = vadd.f32 0.0, %v321
  %323 = vmatmul.f32.gmra.mxu0 %v224
  %v324 = vpop.f32.mrf.mxu0
  %v325 = vadd.f32 0.0, %v324
  %326 = vmatmul.f32.gmra.mxu0 %v227
  %v327 = vpop.f32.mrf.mxu0
  %v328 = vadd.f32 0.0, %v327
  %329 = vdwg.mxu0
  %330 = vmatpush.msra.mxu0 0.0
  %331 = vmatpush.msra.mxu0 0.0
  %332 = vmatpush.msra.mxu0 0.0
  %333 = vmatpush.msra.mxu0 0.0
  %334 = vmatpush.msra.mxu0 %v143
  %335 = vmatpush.msra.mxu0 %v141
  %336 = vmatpush.msra.mxu0 %v139
  %337 = vmatpush.msra.mxu0 %v137
  %338 = vmatpush.msra.mxu0 %v135
  %339 = vmatpush.msra.mxu0 %v133
  %340 = vmatpush.msra.mxu0 %v131
  %341 = vmatpush.msra.mxu0 %v129
  %342 = vmatpush.msra.mxu0 %v127
  %343 = vmatpush.msra.mxu0 %v125
  %344 = vmatpush.msra.mxu0 %v123
  %345 = vmatpush.msra.mxu0 %v121
  %346 = vmatmul.f32.gmra.mxu0 %v146
  %v347 = vpop.f32.mrf.mxu0
  %v348 = vadd.f32 0.0, %v347
  %349 = vmatmul.f32.gmra.mxu0 %v149
  %v350 = vpop.f32.mrf.mxu0
  %v351 = vadd.f32 0.0, %v350
  %352 = vmatmul.f32.gmra.mxu0 %v152
  %v353 = vpop.f32.mrf.mxu0
  %v354 = vadd.f32 0.0, %v353
  %355 = vmatmul.f32.gmra.mxu0 %v155
  %v356 = vpop.f32.mrf.mxu0
  %v357 = vadd.f32 0.0, %v356
  %358 = vmatmul.f32.gmra.mxu0 %v158
  %v359 = vpop.f32.mrf.mxu0
  %v360 = vadd.f32 0.0, %v359
  %361 = vmatmul.f32.gmra.mxu0 %v161
  %v362 = vpop.f32.mrf.mxu0
  %v363 = vadd.f32 0.0, %v362
  %364 = vmatmul.f32.gmra.mxu0 %v164
  %v365 = vpop.f32.mrf.mxu0
  %v366 = vadd.f32 0.0, %v365
  %367 = vmatmul.f32.gmra.mxu0 %v167
  %v368 = vpop.f32.mrf.mxu0
  %v369 = vadd.f32 0.0, %v368
  %370 = vmatmul.f32.gmra.mxu0 %v170
  %v371 = vpop.f32.mrf.mxu0
  %v372 = vadd.f32 0.0, %v371
  %373 = vmatmul.f32.gmra.mxu0 %v173
  %v374 = vpop.f32.mrf.mxu0
  %v375 = vadd.f32 0.0, %v374
  %376 = vmatmul.f32.gmra.mxu0 %v176
  %v377 = vpop.f32.mrf.mxu0
  %v378 = vadd.f32 0.0, %v377
  %379 = vmatmul.f32.gmra.mxu0 %v179
  %v380 = vpop.f32.mrf.mxu0
  %v381 = vadd.f32 0.0, %v380
  %382 = vmatmul.f32.gmra.mxu0 %v182
  %v383 = vpop.f32.mrf.mxu0
  %v384 = vadd.f32 0.0, %v383
  %385 = vmatmul.f32.gmra.mxu0 %v185
  %v386 = vpop.f32.mrf.mxu0
  %v387 = vadd.f32 0.0, %v386
  %388 = vmatmul.f32.gmra.mxu0 %v188
  %v389 = vpop.f32.mrf.mxu0
  %v390 = vadd.f32 0.0, %v389
  %391 = vmatmul.f32.gmra.mxu0 %v191
  %v392 = vpop.f32.mrf.mxu0
  %v393 = vadd.f32 0.0, %v392
  %394 = vmatmul.f32.gmra.mxu0 %v194
  %v395 = vpop.f32.mrf.mxu0
  %v396 = vadd.f32 0.0, %v395
  %397 = vmatmul.f32.gmra.mxu0 %v197
  %v398 = vpop.f32.mrf.mxu0
  %v399 = vadd.f32 0.0, %v398
  %400 = vmatmul.f32.gmra.mxu0 %v200
  %v401 = vpop.f32.mrf.mxu0
  %v402 = vadd.f32 0.0, %v401
  %403 = vmatmul.f32.gmra.mxu0 %v203
  %v404 = vpop.f32.mrf.mxu0
  %v405 = vadd.f32 0.0, %v404
  %406 = vmatmul.f32.gmra.mxu0 %v206
  %v407 = vpop.f32.mrf.mxu0
  %v408 = vadd.f32 0.0, %v407
  %409 = vmatmul.f32.gmra.mxu0 %v209
  %v410 = vpop.f32.mrf.mxu0
  %v411 = vadd.f32 0.0, %v410
  %412 = vmatmul.f32.gmra.mxu0 %v212
  %v413 = vpop.f32.mrf.mxu0
  %v414 = vadd.f32 0.0, %v413
  %415 = vmatmul.f32.gmra.mxu0 %v215
  %v416 = vpop.f32.mrf.mxu0
  %v417 = vadd.f32 0.0, %v416
  %418 = vmatmul.f32.gmra.mxu0 %v218
  %v419 = vpop.f32.mrf.mxu0
  %v420 = vadd.f32 0.0, %v419
  %421 = vmatmul.f32.gmra.mxu0 %v221
  %v422 = vpop.f32.mrf.mxu0
  %v423 = vadd.f32 0.0, %v422
  %424 = vmatmul.f32.gmra.mxu0 %v224
  %v425 = vpop.f32.mrf.mxu0
  %v426 = vadd.f32 0.0, %v425
  %427 = vmatmul.f32.gmra.mxu0 %v227
  %v428 = vpop.f32.mrf.mxu0
  %v429 = vadd.f32 0.0, %v428
  %430 = vdwg.mxu0
  %v432 = vsel %vm144, %v38, 0
  %v435 = vsel %vm144, %v39, 0
  %v438 = vsel %vm144, %v40, 0
  %v441 = vsel %vm144, %v41, 0
  %v444 = vsel %vm144, %v42, 0
  %v447 = vsel %vm144, %v43, 0
  %v450 = vsel %vm144, %v44, 0
  %v453 = vsel %vm144, %v45, 0
  %v456 = vsel %vm144, %v46, 0
  %v459 = vsel %vm144, %v47, 0
  %v462 = vsel %vm144, %v48, 0
  %v465 = vsel %vm144, %v49, 0
  %v468 = vsel %vm144, %v50, 0
  %v471 = vsel %vm144, %v51, 0
  %v474 = vsel %vm144, %v52, 0
  %v477 = vsel %vm144, %v53, 0
  %v480 = vsel %vm144, %v54, 0
  %v483 = vsel %vm144, %v55, 0
  %v486 = vsel %vm144, %v56, 0
  %v489 = vsel %vm144, %v57, 0
  %v492 = vsel %vm144, %v58, 0
  %v495 = vsel %vm144, %v59, 0
  %v498 = vsel %vm144, %v60, 0
  %v501 = vsel %vm144, %v61, 0
  %v504 = vsel %vm144, %v62, 0
  %v507 = vsel %vm144, %v63, 0
  %v510 = vsel %vm144, %v64, 0
  %v513 = vsel %vm144, %v65, 0
  %515 = vmatpush.msra.mxu0 0.0
  %516 = vmatpush.msra.mxu0 0.0
  %517 = vmatpush.msra.mxu0 0.0
  %518 = vmatpush.msra.mxu0 0.0
  %519 = vmatpush.msra.mxu0 %v88
  %520 = vmatpush.msra.mxu0 %v86
  %521 = vmatpush.msra.mxu0 %v84
  %522 = vmatpush.msra.mxu0 %v82
  %523 = vmatpush.msra.mxu0 %v80
  %524 = vmatpush.msra.mxu0 %v78
  %525 = vmatpush.msra.mxu0 %v76
  %526 = vmatpush.msra.mxu0 %v74
  %527 = vmatpush.msra.mxu0 %v72
  %528 = vmatpush.msra.mxu0 %v70
  %529 = vmatpush.msra.mxu0 %v68
  %530 = vmatpush.msra.mxu0 %v66
  %531 = vmatmul.f32.gmra.mxu0 %v432
  %v532 = vpop.f32.mrf.mxu0
  %v533 = vadd.f32 %v247, %v532
  %534 = vmatmul.f32.gmra.mxu0 %v435
  %v535 = vpop.f32.mrf.mxu0
  %v536 = vadd.f32 %v250, %v535
  %537 = vmatmul.f32.gmra.mxu0 %v438
  %v538 = vpop.f32.mrf.mxu0
  %v539 = vadd.f32 %v253, %v538
  %540 = vmatmul.f32.gmra.mxu0 %v441
  %v541 = vpop.f32.mrf.mxu0
  %v542 = vadd.f32 %v256, %v541
  %543 = vmatmul.f32.gmra.mxu0 %v444
  %v544 = vpop.f32.mrf.mxu0
  %v545 = vadd.f32 %v259, %v544
  %546 = vmatmul.f32.gmra.mxu0 %v447
  %v547 = vpop.f32.mrf.mxu0
  %v548 = vadd.f32 %v262, %v547
  %549 = vmatmul.f32.gmra.mxu0 %v450
  %v550 = vpop.f32.mrf.mxu0
  %v551 = vadd.f32 %v265, %v550
  %552 = vmatmul.f32.gmra.mxu0 %v453
  %v553 = vpop.f32.mrf.mxu0
  %v554 = vadd.f32 %v268, %v553
  %555 = vmatmul.f32.gmra.mxu0 %v456
  %v556 = vpop.f32.mrf.mxu0
  %v557 = vadd.f32 %v271, %v556
  %558 = vmatmul.f32.gmra.mxu0 %v459
  %v559 = vpop.f32.mrf.mxu0
  %v560 = vadd.f32 %v274, %v559
  %561 = vmatmul.f32.gmra.mxu0 %v462
  %v562 = vpop.f32.mrf.mxu0
  %v563 = vadd.f32 %v277, %v562
  %564 = vmatmul.f32.gmra.mxu0 %v465
  %v565 = vpop.f32.mrf.mxu0
  %v566 = vadd.f32 %v280, %v565
  %567 = vmatmul.f32.gmra.mxu0 %v468
  %v568 = vpop.f32.mrf.mxu0
  %v569 = vadd.f32 %v283, %v568
  %570 = vmatmul.f32.gmra.mxu0 %v471
  %v571 = vpop.f32.mrf.mxu0
  %v572 = vadd.f32 %v286, %v571
  %573 = vmatmul.f32.gmra.mxu0 %v474
  %v574 = vpop.f32.mrf.mxu0
  %v575 = vadd.f32 %v289, %v574
  %576 = vmatmul.f32.gmra.mxu0 %v477
  %v577 = vpop.f32.mrf.mxu0
  %v578 = vadd.f32 %v292, %v577
  %579 = vmatmul.f32.gmra.mxu0 %v480
  %v580 = vpop.f32.mrf.mxu0
  %v581 = vadd.f32 %v295, %v580
  %582 = vmatmul.f32.gmra.mxu0 %v483
  %v583 = vpop.f32.mrf.mxu0
  %v584 = vadd.f32 %v298, %v583
  %585 = vmatmul.f32.gmra.mxu0 %v486
  %v586 = vpop.f32.mrf.mxu0
  %v587 = vadd.f32 %v301, %v586
  %588 = vmatmul.f32.gmra.mxu0 %v489
  %v589 = vpop.f32.mrf.mxu0
  %v590 = vadd.f32 %v304, %v589
  %591 = vmatmul.f32.gmra.mxu0 %v492
  %v592 = vpop.f32.mrf.mxu0
  %v593 = vadd.f32 %v307, %v592
  %594 = vmatmul.f32.gmra.mxu0 %v495
  %v595 = vpop.f32.mrf.mxu0
  %v596 = vadd.f32 %v310, %v595
  %597 = vmatmul.f32.gmra.mxu0 %v498
  %v598 = vpop.f32.mrf.mxu0
  %v599 = vadd.f32 %v313, %v598
  %600 = vmatmul.f32.gmra.mxu0 %v501
  %v601 = vpop.f32.mrf.mxu0
  %v602 = vadd.f32 %v316, %v601
  %603 = vmatmul.f32.gmra.mxu0 %v504
  %v604 = vpop.f32.mrf.mxu0
  %v605 = vadd.f32 %v319, %v604
  %606 = vmatmul.f32.gmra.mxu0 %v507
  %v607 = vpop.f32.mrf.mxu0
  %v608 = vadd.f32 %v322, %v607
  %609 = vmatmul.f32.gmra.mxu0 %v510
  %v610 = vpop.f32.mrf.mxu0
  %v611 = vadd.f32 %v325, %v610
  %612 = vmatmul.f32.gmra.mxu0 %v513
  %v613 = vpop.f32.mrf.mxu0
  %v614 = vadd.f32 %v328, %v613
  %615 = vdwg.mxu0
  %616 = vmatpush.msra.mxu0 0.0
  %617 = vmatpush.msra.mxu0 0.0
  %618 = vmatpush.msra.mxu0 0.0
  %619 = vmatpush.msra.mxu0 0.0
  %620 = vmatpush.msra.mxu0 %v89
  %621 = vmatpush.msra.mxu0 %v87
  %622 = vmatpush.msra.mxu0 %v85
  %623 = vmatpush.msra.mxu0 %v83
  %624 = vmatpush.msra.mxu0 %v81
  %625 = vmatpush.msra.mxu0 %v79
  %626 = vmatpush.msra.mxu0 %v77
  %627 = vmatpush.msra.mxu0 %v75
  %628 = vmatpush.msra.mxu0 %v73
  %629 = vmatpush.msra.mxu0 %v71
  %630 = vmatpush.msra.mxu0 %v69
  %631 = vmatpush.msra.mxu0 %v67
  %632 = vmatmul.f32.gmra.mxu0 %v432
  %v633 = vpop.f32.mrf.mxu0
  %v634 = vadd.f32 %v348, %v633
  %635 = vmatmul.f32.gmra.mxu0 %v435
  %v636 = vpop.f32.mrf.mxu0
  %v637 = vadd.f32 %v351, %v636
  %638 = vmatmul.f32.gmra.mxu0 %v438
  %v639 = vpop.f32.mrf.mxu0
  %v640 = vadd.f32 %v354, %v639
  %641 = vmatmul.f32.gmra.mxu0 %v441
  %v642 = vpop.f32.mrf.mxu0
  %v643 = vadd.f32 %v357, %v642
  %644 = vmatmul.f32.gmra.mxu0 %v444
  %v645 = vpop.f32.mrf.mxu0
  %v646 = vadd.f32 %v360, %v645
  %647 = vmatmul.f32.gmra.mxu0 %v447
  %v648 = vpop.f32.mrf.mxu0
  %v649 = vadd.f32 %v363, %v648
  %650 = vmatmul.f32.gmra.mxu0 %v450
  %v651 = vpop.f32.mrf.mxu0
  %v652 = vadd.f32 %v366, %v651
  %653 = vmatmul.f32.gmra.mxu0 %v453
  %v654 = vpop.f32.mrf.mxu0
  %v655 = vadd.f32 %v369, %v654
  %656 = vmatmul.f32.gmra.mxu0 %v456
  %v657 = vpop.f32.mrf.mxu0
  %v658 = vadd.f32 %v372, %v657
  %659 = vmatmul.f32.gmra.mxu0 %v459
  %v660 = vpop.f32.mrf.mxu0
  %v661 = vadd.f32 %v375, %v660
  %662 = vmatmul.f32.gmra.mxu0 %v462
  %v663 = vpop.f32.mrf.mxu0
  %v664 = vadd.f32 %v378, %v663
  %665 = vmatmul.f32.gmra.mxu0 %v465
  %v666 = vpop.f32.mrf.mxu0
  %v667 = vadd.f32 %v381, %v666
  %668 = vmatmul.f32.gmra.mxu0 %v468
  %v669 = vpop.f32.mrf.mxu0
  %v670 = vadd.f32 %v384, %v669
  %671 = vmatmul.f32.gmra.mxu0 %v471
  %v672 = vpop.f32.mrf.mxu0
  %v673 = vadd.f32 %v387, %v672
  %674 = vmatmul.f32.gmra.mxu0 %v474
  %v675 = vpop.f32.mrf.mxu0
  %v676 = vadd.f32 %v390, %v675
  %677 = vmatmul.f32.gmra.mxu0 %v477
  %v678 = vpop.f32.mrf.mxu0
  %v679 = vadd.f32 %v393, %v678
  %680 = vmatmul.f32.gmra.mxu0 %v480
  %v681 = vpop.f32.mrf.mxu0
  %v682 = vadd.f32 %v396, %v681
  %683 = vmatmul.f32.gmra.mxu0 %v483
  %v684 = vpop.f32.mrf.mxu0
  %v685 = vadd.f32 %v399, %v684
  %686 = vmatmul.f32.gmra.mxu0 %v486
  %v687 = vpop.f32.mrf.mxu0
  %v688 = vadd.f32 %v402, %v687
  %689 = vmatmul.f32.gmra.mxu0 %v489
  %v690 = vpop.f32.mrf.mxu0
  %v691 = vadd.f32 %v405, %v690
  %692 = vmatmul.f32.gmra.mxu0 %v492
  %v693 = vpop.f32.mrf.mxu0
  %v694 = vadd.f32 %v408, %v693
  %695 = vmatmul.f32.gmra.mxu0 %v495
  %v696 = vpop.f32.mrf.mxu0
  %v697 = vadd.f32 %v411, %v696
  %698 = vmatmul.f32.gmra.mxu0 %v498
  %v699 = vpop.f32.mrf.mxu0
  %v700 = vadd.f32 %v414, %v699
  %701 = vmatmul.f32.gmra.mxu0 %v501
  %v702 = vpop.f32.mrf.mxu0
  %v703 = vadd.f32 %v417, %v702
  %704 = vmatmul.f32.gmra.mxu0 %v504
  %v705 = vpop.f32.mrf.mxu0
  %v706 = vadd.f32 %v420, %v705
  %707 = vmatmul.f32.gmra.mxu0 %v507
  %v708 = vpop.f32.mrf.mxu0
  %v709 = vadd.f32 %v423, %v708
  %710 = vmatmul.f32.gmra.mxu0 %v510
  %v711 = vpop.f32.mrf.mxu0
  %v712 = vadd.f32 %v426, %v711
  %713 = vmatmul.f32.gmra.mxu0 %v513
  %v714 = vpop.f32.mrf.mxu0
  %v715 = vadd.f32 %v429, %v714
  %716 = vdwg.mxu0
  %s717 = scalar_lea.vmem %s0, 16
  %v718 = vld [vmem:[%s717] sm:$0xff]
  %v719 = vld [vmem:[%s717 + $0x8] sm:$0xff]
  %v720 = vld [vmem:[%s717 + $0x10] sm:$0xff]
  %v721 = vld [vmem:[%s717 + $0x18] sm:$0xff]
  %v722 = vld [vmem:[%s717 + $0x20] sm:$0xff]
  %v723 = vld [vmem:[%s717 + $0x28] sm:$0xff]
  %v724 = vld [vmem:[%s717 + $0x30] sm:$0xff]
  %v725 = vld [vmem:[%s717 + $0x38] sm:$0xff]
  %v726 = vld [vmem:[%s717 + $0x40] sm:$0xff]
  %v727 = vld [vmem:[%s717 + $0x48] sm:$0xff]
  %v728 = vld [vmem:[%s717 + $0x50] sm:$0xff]
  %v729 = vld [vmem:[%s717 + $0x58] sm:$0xff]
  %v730 = vld [vmem:[%s717 + $0x60] sm:$0xff]
  %v731 = vld [vmem:[%s717 + $0x68] sm:$0xff]
  %v732 = vld [vmem:[%s717 + $0x70] sm:$0xff]
  %v733 = vld [vmem:[%s717 + $0x78] sm:$0xff]
  %v734 = vld [vmem:[%s717 + $0x80] sm:$0xff]
  %v735 = vld [vmem:[%s717 + $0x88] sm:$0xff]
  %v736 = vld [vmem:[%s717 + $0x90] sm:$0xff]
  %v737 = vld [vmem:[%s717 + $0x98] sm:$0xff]
  %v738 = vld [vmem:[%s717 + $0xa0] sm:$0xff]
  %v739 = vld [vmem:[%s717 + $0xa8] sm:$0xff]
  %v740 = vld [vmem:[%s717 + $0xb0] sm:$0xff]
  %v741 = vld [vmem:[%s717 + $0xb8] sm:$0xff]
  %v742 = vld [vmem:[%s717 + $0xc0] sm:$0xff]
  %v743 = vld [vmem:[%s717 + $0xc8] sm:$0xff]
  %v744 = vld [vmem:[%s717 + $0xd0] sm:$0xff]
  %v745 = vld [vmem:[%s717 + $0xd8] sm:$0xff]
  %s746 = scalar_lea.vmem %s1, 384
  %v747 = vld [vmem:[%s746] sm:$0xff]
  %v748 = vld [vmem:[%s746 + $0x8] sm:$0xff]
  %v749 = vld [vmem:[%s746 + $0x10] sm:$0xff]
  %v750 = vld [vmem:[%s746 + $0x18] sm:$0xff]
  %v751 = vld [vmem:[%s746 + $0x20] sm:$0xff]
  %v752 = vld [vmem:[%s746 + $0x28] sm:$0xff]
  %v753 = vld [vmem:[%s746 + $0x30] sm:$0xff]
  %v754 = vld [vmem:[%s746 + $0x38] sm:$0xff]
  %v755 = vld [vmem:[%s746 + $0x40] sm:$0xff]
  %v756 = vld [vmem:[%s746 + $0x48] sm:$0xff]
  %v757 = vld [vmem:[%s746 + $0x50] sm:$0xff]
  %v758 = vld [vmem:[%s746 + $0x58] sm:$0xff]
  %v759 = vld [vmem:[%s746 + $0x60] sm:$0xff]
  %v760 = vld [vmem:[%s746 + $0x68] sm:$0xff]
  %v761 = vld [vmem:[%s746 + $0x70] sm:$0xff]
  %v762 = vld [vmem:[%s746 + $0x78] sm:$0xff]
  %v763 = vld [vmem:[%s746 + $0x80] sm:$0xff]
  %v764 = vld [vmem:[%s746 + $0x88] sm:$0xff]
  %v765 = vld [vmem:[%s746 + $0x90] sm:$0xff]
  %v766 = vld [vmem:[%s746 + $0x98] sm:$0xff]
  %v767 = vld [vmem:[%s746 + $0xa0] sm:$0xff]
  %v768 = vld [vmem:[%s746 + $0xa8] sm:$0xff]
  %v769 = vld [vmem:[%s746 + $0xb0] sm:$0xff]
  %v770 = vld [vmem:[%s746 + $0xb8] sm:$0xff]
  %v772 = vsel %vm144, %v718, 0
  %v775 = vsel %vm144, %v719, 0
  %v778 = vsel %vm144, %v720, 0
  %v781 = vsel %vm144, %v721, 0
  %v784 = vsel %vm144, %v722, 0
  %v787 = vsel %vm144, %v723, 0
  %v790 = vsel %vm144, %v724, 0
  %v793 = vsel %vm144, %v725, 0
  %v796 = vsel %vm144, %v726, 0
  %v799 = vsel %vm144, %v727, 0
  %v802 = vsel %vm144, %v728, 0
  %v805 = vsel %vm144, %v729, 0
  %v808 = vsel %vm144, %v730, 0
  %v811 = vsel %vm144, %v731, 0
  %v814 = vsel %vm144, %v732, 0
  %v817 = vsel %vm144, %v733, 0
  %v820 = vsel %vm144, %v734, 0
  %v823 = vsel %vm144, %v735, 0
  %v826 = vsel %vm144, %v736, 0
  %v829 = vsel %vm144, %v737, 0
  %v832 = vsel %vm144, %v738, 0
  %v835 = vsel %vm144, %v739, 0
  %v838 = vsel %vm144, %v740, 0
  %v841 = vsel %vm144, %v741, 0
  %v844 = vsel %vm144, %v742, 0
  %v847 = vsel %vm144, %v743, 0
  %v850 = vsel %vm144, %v744, 0
  %v853 = vsel %vm144, %v745, 0
  %855 = vmatpush.msra.mxu0 0.0
  %856 = vmatpush.msra.mxu0 0.0
  %857 = vmatpush.msra.mxu0 0.0
  %858 = vmatpush.msra.mxu0 0.0
  %859 = vmatpush.msra.mxu0 %v769
  %860 = vmatpush.msra.mxu0 %v767
  %861 = vmatpush.msra.mxu0 %v765
  %862 = vmatpush.msra.mxu0 %v763
  %863 = vmatpush.msra.mxu0 %v761
  %864 = vmatpush.msra.mxu0 %v759
  %865 = vmatpush.msra.mxu0 %v757
  %866 = vmatpush.msra.mxu0 %v755
  %867 = vmatpush.msra.mxu0 %v753
  %868 = vmatpush.msra.mxu0 %v751
  %869 = vmatpush.msra.mxu0 %v749
  %870 = vmatpush.msra.mxu0 %v747
  %871 = vmatmul.f32.gmra.mxu0 %v772
  %v872 = vpop.f32.mrf.mxu0
  %v873 = vadd.f32 0.0, %v872
  %874 = vmatmul.f32.gmra.mxu0 %v775
  %v875 = vpop.f32.mrf.mxu0
  %v876 = vadd.f32 0.0, %v875
  %877 = vmatmul.f32.gmra.mxu0 %v778
  %v878 = vpop.f32.mrf.mxu0
  %v879 = vadd.f32 0.0, %v878
  %880 = vmatmul.f32.gmra.mxu0 %v781
  %v881 = vpop.f32.mrf.mxu0
  %v882 = vadd.f32 0.0, %v881
  %883 = vmatmul.f32.gmra.mxu0 %v784
  %v884 = vpop.f32.mrf.mxu0
  %v885 = vadd.f32 0.0, %v884
  %886 = vmatmul.f32.gmra.mxu0 %v787
  %v887 = vpop.f32.mrf.mxu0
  %v888 = vadd.f32 0.0, %v887
  %889 = vmatmul.f32.gmra.mxu0 %v790
  %v890 = vpop.f32.mrf.mxu0
  %v891 = vadd.f32 0.0, %v890
  %892 = vmatmul.f32.gmra.mxu0 %v793
  %v893 = vpop.f32.mrf.mxu0
  %v894 = vadd.f32 0.0, %v893
  %895 = vmatmul.f32.gmra.mxu0 %v796
  %v896 = vpop.f32.mrf.mxu0
  %v897 = vadd.f32 0.0, %v896
  %898 = vmatmul.f32.gmra.mxu0 %v799
  %v899 = vpop.f32.mrf.mxu0
  %v900 = vadd.f32 0.0, %v899
  %901 = vmatmul.f32.gmra.mxu0 %v802
  %v902 = vpop.f32.mrf.mxu0
  %v903 = vadd.f32 0.0, %v902
  %904 = vmatmul.f32.gmra.mxu0 %v805
  %v905 = vpop.f32.mrf.mxu0
  %v906 = vadd.f32 0.0, %v905
  %907 = vmatmul.f32.gmra.mxu0 %v808
  %v908 = vpop.f32.mrf.mxu0
  %v909 = vadd.f32 0.0, %v908
  %910 = vmatmul.f32.gmra.mxu0 %v811
  %v911 = vpop.f32.mrf.mxu0
  %v912 = vadd.f32 0.0, %v911
  %913 = vmatmul.f32.gmra.mxu0 %v814
  %v914 = vpop.f32.mrf.mxu0
  %v915 = vadd.f32 0.0, %v914
  %916 = vmatmul.f32.gmra.mxu0 %v817
  %v917 = vpop.f32.mrf.mxu0
  %v918 = vadd.f32 0.0, %v917
  %919 = vmatmul.f32.gmra.mxu0 %v820
  %v920 = vpop.f32.mrf.mxu0
  %v921 = vadd.f32 0.0, %v920
  %922 = vmatmul.f32.gmra.mxu0 %v823
  %v923 = vpop.f32.mrf.mxu0
  %v924 = vadd.f32 0.0, %v923
  %925 = vmatmul.f32.gmra.mxu0 %v826
  %v926 = vpop.f32.mrf.mxu0
  %v927 = vadd.f32 0.0, %v926
  %928 = vmatmul.f32.gmra.mxu0 %v829
  %v929 = vpop.f32.mrf.mxu0
  %v930 = vadd.f32 0.0, %v929
  %931 = vmatmul.f32.gmra.mxu0 %v832
  %v932 = vpop.f32.mrf.mxu0
  %v933 = vadd.f32 0.0, %v932
  %934 = vmatmul.f32.gmra.mxu0 %v835
  %v935 = vpop.f32.mrf.mxu0
  %v936 = vadd.f32 0.0, %v935
  %937 = vmatmul.f32.gmra.mxu0 %v838
  %v938 = vpop.f32.mrf.mxu0
  %v939 = vadd.f32 0.0, %v938
  %940 = vmatmul.f32.gmra.mxu0 %v841
  %v941 = vpop.f32.mrf.mxu0
  %v942 = vadd.f32 0.0, %v941
  %943 = vmatmul.f32.gmra.mxu0 %v844
  %v944 = vpop.f32.mrf.mxu0
  %v945 = vadd.f32 0.0, %v944
  %946 = vmatmul.f32.gmra.mxu0 %v847
  %v947 = vpop.f32.mrf.mxu0
  %v948 = vadd.f32 0.0, %v947
  %949 = vmatmul.f32.gmra.mxu0 %v850
  %v950 = vpop.f32.mrf.mxu0
  %v951 = vadd.f32 0.0, %v950
  %952 = vmatmul.f32.gmra.mxu0 %v853
  %v953 = vpop.f32.mrf.mxu0
  %v954 = vadd.f32 0.0, %v953
  %955 = vdwg.mxu0
  %956 = vmatpush.msra.mxu0 0.0
  %957 = vmatpush.msra.mxu0 0.0
  %958 = vmatpush.msra.mxu0 0.0
  %959 = vmatpush.msra.mxu0 0.0
  %960 = vmatpush.msra.mxu0 %v770
  %961 = vmatpush.msra.mxu0 %v768
  %962 = vmatpush.msra.mxu0 %v766
  %963 = vmatpush.msra.mxu0 %v764
  %964 = vmatpush.msra.mxu0 %v762
  %965 = vmatpush.msra.mxu0 %v760
  %966 = vmatpush.msra.mxu0 %v758
  %967 = vmatpush.msra.mxu0 %v756
  %968 = vmatpush.msra.mxu0 %v754
  %969 = vmatpush.msra.mxu0 %v752
  %970 = vmatpush.msra.mxu0 %v750
  %971 = vmatpush.msra.mxu0 %v748
  %972 = vmatmul.f32.gmra.mxu0 %v772
  %v973 = vpop.f32.mrf.mxu0
  %v974 = vadd.f32 0.0, %v973
  %975 = vmatmul.f32.gmra.mxu0 %v775
  %v976 = vpop.f32.mrf.mxu0
  %v977 = vadd.f32 0.0, %v976
  %978 = vmatmul.f32.gmra.mxu0 %v778
  %v979 = vpop.f32.mrf.mxu0
  %v980 = vadd.f32 0.0, %v979
  %981 = vmatmul.f32.gmra.mxu0 %v781
  %v982 = vpop.f32.mrf.mxu0
  %v983 = vadd.f32 0.0, %v982
  %984 = vmatmul.f32.gmra.mxu0 %v784
  %v985 = vpop.f32.mrf.mxu0
  %v986 = vadd.f32 0.0, %v985
  %987 = vmatmul.f32.gmra.mxu0 %v787
  %v988 = vpop.f32.mrf.mxu0
  %v989 = vadd.f32 0.0, %v988
  %990 = vmatmul.f32.gmra.mxu0 %v790
  %v991 = vpop.f32.mrf.mxu0
  %v992 = vadd.f32 0.0, %v991
  %993 = vmatmul.f32.gmra.mxu0 %v793
  %v994 = vpop.f32.mrf.mxu0
  %v995 = vadd.f32 0.0, %v994
  %996 = vmatmul.f32.gmra.mxu0 %v796
  %v997 = vpop.f32.mrf.mxu0
  %v998 = vadd.f32 0.0, %v997
  %999 = vmatmul.f32.gmra.mxu0 %v799
  %v1000 = vpop.f32.mrf.mxu0
  %v1001 = vadd.f32 0.0, %v1000
  %1002 = vmatmul.f32.gmra.mxu0 %v802
  %v1003 = vpop.f32.mrf.mxu0
  %v1004 = vadd.f32 0.0, %v1003
  %1005 = vmatmul.f32.gmra.mxu0 %v805
  %v1006 = vpop.f32.mrf.mxu0
  %v1007 = vadd.f32 0.0, %v1006
  %1008 = vmatmul.f32.gmra.mxu0 %v808
  %v1009 = vpop.f32.mrf.mxu0
  %v1010 = vadd.f32 0.0, %v1009
  %1011 = vmatmul.f32.gmra.mxu0 %v811
  %v1012 = vpop.f32.mrf.mxu0
  %v1013 = vadd.f32 0.0, %v1012
  %1014 = vmatmul.f32.gmra.mxu0 %v814
  %v1015 = vpop.f32.mrf.mxu0
  %v1016 = vadd.f32 0.0, %v1015
  %1017 = vmatmul.f32.gmra.mxu0 %v817
  %v1018 = vpop.f32.mrf.mxu0
  %v1019 = vadd.f32 0.0, %v1018
  %1020 = vmatmul.f32.gmra.mxu0 %v820
  %v1021 = vpop.f32.mrf.mxu0
  %v1022 = vadd.f32 0.0, %v1021
  %1023 = vmatmul.f32.gmra.mxu0 %v823
  %v1024 = vpop.f32.mrf.mxu0
  %v1025 = vadd.f32 0.0, %v1024
  %1026 = vmatmul.f32.gmra.mxu0 %v826
  %v1027 = vpop.f32.mrf.mxu0
  %v1028 = vadd.f32 0.0, %v1027
  %1029 = vmatmul.f32.gmra.mxu0 %v829
  %v1030 = vpop.f32.mrf.mxu0
  %v1031 = vadd.f32 0.0, %v1030
  %1032 = vmatmul.f32.gmra.mxu0 %v832
  %v1033 = vpop.f32.mrf.mxu0
  %v1034 = vadd.f32 0.0, %v1033
  %1035 = vmatmul.f32.gmra.mxu0 %v835
  %v1036 = vpop.f32.mrf.mxu0
  %v1037 = vadd.f32 0.0, %v1036
  %1038 = vmatmul.f32.gmra.mxu0 %v838
  %v1039 = vpop.f32.mrf.mxu0
  %v1040 = vadd.f32 0.0, %v1039
  %1041 = vmatmul.f32.gmra.mxu0 %v841
  %v1042 = vpop.f32.mrf.mxu0
  %v1043 = vadd.f32 0.0, %v1042
  %1044 = vmatmul.f32.gmra.mxu0 %v844
  %v1045 = vpop.f32.mrf.mxu0
  %v1046 = vadd.f32 0.0, %v1045
  %1047 = vmatmul.f32.gmra.mxu0 %v847
  %v1048 = vpop.f32.mrf.mxu0
  %v1049 = vadd.f32 0.0, %v1048
  %1050 = vmatmul.f32.gmra.mxu0 %v850
  %v1051 = vpop.f32.mrf.mxu0
  %v1052 = vadd.f32 0.0, %v1051
  %1053 = vmatmul.f32.gmra.mxu0 %v853
  %v1054 = vpop.f32.mrf.mxu0
  %v1055 = vadd.f32 0.0, %v1054
  %1056 = vdwg.mxu0
  %v1057 = vadd.f32 %v533, %v873
  %v1058 = vadd.f32 %v634, %v974
  %v1059 = vadd.f32 %v536, %v876
  %v1060 = vadd.f32 %v637, %v977
  %v1061 = vadd.f32 %v539, %v879
  %v1062 = vadd.f32 %v640, %v980
  %v1063 = vadd.f32 %v542, %v882
  %v1064 = vadd.f32 %v643, %v983
  %v1065 = vadd.f32 %v545, %v885
  %v1066 = vadd.f32 %v646, %v986
  %v1067 = vadd.f32 %v548, %v888
  %v1068 = vadd.f32 %v649, %v989
  %v1069 = vadd.f32 %v551, %v891
  %v1070 = vadd.f32 %v652, %v992
  %v1071 = vadd.f32 %v554, %v894
  %v1072 = vadd.f32 %v655, %v995
  %v1073 = vadd.f32 %v557, %v897
  %v1074 = vadd.f32 %v658, %v998
  %v1075 = vadd.f32 %v560, %v900
  %v1076 = vadd.f32 %v661, %v1001
  %v1077 = vadd.f32 %v563, %v903
  %v1078 = vadd.f32 %v664, %v1004
  %v1079 = vadd.f32 %v566, %v906
  %v1080 = vadd.f32 %v667, %v1007
  %v1081 = vadd.f32 %v569, %v909
  %v1082 = vadd.f32 %v670, %v1010
  %v1083 = vadd.f32 %v572, %v912
  %v1084 = vadd.f32 %v673, %v1013
  %v1085 = vadd.f32 %v575, %v915
  %v1086 = vadd.f32 %v676, %v1016
  %v1087 = vadd.f32 %v578, %v918
  %v1088 = vadd.f32 %v679, %v1019
  %v1089 = vadd.f32 %v581, %v921
  %v1090 = vadd.f32 %v682, %v1022
  %v1091 = vadd.f32 %v584, %v924
  %v1092 = vadd.f32 %v685, %v1025
  %v1093 = vadd.f32 %v587, %v927
  %v1094 = vadd.f32 %v688, %v1028
  %v1095 = vadd.f32 %v590, %v930
  %v1096 = vadd.f32 %v691, %v1031
  %v1097 = vadd.f32 %v593, %v933
  %v1098 = vadd.f32 %v694, %v1034
  %v1099 = vadd.f32 %v596, %v936
  %v1100 = vadd.f32 %v697, %v1037
  %v1101 = vadd.f32 %v599, %v939
  %v1102 = vadd.f32 %v700, %v1040
  %v1103 = vadd.f32 %v602, %v942
  %v1104 = vadd.f32 %v703, %v1043
  %v1105 = vadd.f32 %v605, %v945
  %v1106 = vadd.f32 %v706, %v1046
  %v1107 = vadd.f32 %v608, %v948
  %v1108 = vadd.f32 %v709, %v1049
  %v1109 = vadd.f32 %v611, %v951
  %v1110 = vadd.f32 %v712, %v1052
  %v1111 = vadd.f32 %v614, %v954
  %v1112 = vadd.f32 %v715, %v1055
  %s1113 = scalar_lea.vmem %s0, 24
  %v1114 = vld [vmem:[%s1113] sm:$0xff]
  %v1115 = vld [vmem:[%s1113 + $0x8] sm:$0xff]
  %v1116 = vld [vmem:[%s1113 + $0x10] sm:$0xff]
  %v1117 = vld [vmem:[%s1113 + $0x18] sm:$0xff]
  %v1118 = vld [vmem:[%s1113 + $0x20] sm:$0xff]
  %v1119 = vld [vmem:[%s1113 + $0x28] sm:$0xff]
  %v1120 = vld [vmem:[%s1113 + $0x30] sm:$0xff]
  %v1121 = vld [vmem:[%s1113 + $0x38] sm:$0xff]
  %v1122 = vld [vmem:[%s1113 + $0x40] sm:$0xff]
  %v1123 = vld [vmem:[%s1113 + $0x48] sm:$0xff]
  %v1124 = vld [vmem:[%s1113 + $0x50] sm:$0xff]
  %v1125 = vld [vmem:[%s1113 + $0x58] sm:$0xff]
  %v1126 = vld [vmem:[%s1113 + $0x60] sm:$0xff]
  %v1127 = vld [vmem:[%s1113 + $0x68] sm:$0xff]
  %v1128 = vld [vmem:[%s1113 + $0x70] sm:$0xff]
  %v1129 = vld [vmem:[%s1113 + $0x78] sm:$0xff]
  %v1130 = vld [vmem:[%s1113 + $0x80] sm:$0xff]
  %v1131 = vld [vmem:[%s1113 + $0x88] sm:$0xff]
  %v1132 = vld [vmem:[%s1113 + $0x90] sm:$0xff]
  %v1133 = vld [vmem:[%s1113 + $0x98] sm:$0xff]
  %v1134 = vld [vmem:[%s1113 + $0xa0] sm:$0xff]
  %v1135 = vld [vmem:[%s1113 + $0xa8] sm:$0xff]
  %v1136 = vld [vmem:[%s1113 + $0xb0] sm:$0xff]
  %v1137 = vld [vmem:[%s1113 + $0xb8] sm:$0xff]
  %v1138 = vld [vmem:[%s1113 + $0xc0] sm:$0xff]
  %v1139 = vld [vmem:[%s1113 + $0xc8] sm:$0xff]
  %v1140 = vld [vmem:[%s1113 + $0xd0] sm:$0xff]
  %v1141 = vld [vmem:[%s1113 + $0xd8] sm:$0xff]
  %s1142 = scalar_lea.vmem %s1, 576
  %v1143 = vld [vmem:[%s1142] sm:$0xff]
  %v1144 = vld [vmem:[%s1142 + $0x8] sm:$0xff]
  %v1145 = vld [vmem:[%s1142 + $0x10] sm:$0xff]
  %v1146 = vld [vmem:[%s1142 + $0x18] sm:$0xff]
  %v1147 = vld [vmem:[%s1142 + $0x20] sm:$0xff]
  %v1148 = vld [vmem:[%s1142 + $0x28] sm:$0xff]
  %v1149 = vld [vmem:[%s1142 + $0x30] sm:$0xff]
  %v1150 = vld [vmem:[%s1142 + $0x38] sm:$0xff]
  %v1151 = vld [vmem:[%s1142 + $0x40] sm:$0xff]
  %v1152 = vld [vmem:[%s1142 + $0x48] sm:$0xff]
  %v1153 = vld [vmem:[%s1142 + $0x50] sm:$0xff]
  %v1154 = vld [vmem:[%s1142 + $0x58] sm:$0xff]
  %v1155 = vld [vmem:[%s1142 + $0x60] sm:$0xff]
  %v1156 = vld [vmem:[%s1142 + $0x68] sm:$0xff]
  %v1157 = vld [vmem:[%s1142 + $0x70] sm:$0xff]
  %v1158 = vld [vmem:[%s1142 + $0x78] sm:$0xff]
  %v1159 = vld [vmem:[%s1142 + $0x80] sm:$0xff]
  %v1160 = vld [vmem:[%s1142 + $0x88] sm:$0xff]
  %v1161 = vld [vmem:[%s1142 + $0x90] sm:$0xff]
  %v1162 = vld [vmem:[%s1142 + $0x98] sm:$0xff]
  %v1163 = vld [vmem:[%s1142 + $0xa0] sm:$0xff]
  %v1164 = vld [vmem:[%s1142 + $0xa8] sm:$0xff]
  %v1165 = vld [vmem:[%s1142 + $0xb0] sm:$0xff]
  %v1166 = vld [vmem:[%s1142 + $0xb8] sm:$0xff]
  %v1168 = vsel %vm144, %v1114, 0
  %v1171 = vsel %vm144, %v1115, 0
  %v1174 = vsel %vm144, %v1116, 0
  %v1177 = vsel %vm144, %v1117, 0
  %v1180 = vsel %vm144, %v1118, 0
  %v1183 = vsel %vm144, %v1119, 0
  %v1186 = vsel %vm144, %v1120, 0
  %v1189 = vsel %vm144, %v1121, 0
  %v1192 = vsel %vm144, %v1122, 0
  %v1195 = vsel %vm144, %v1123, 0
  %v1198 = vsel %vm144, %v1124, 0
  %v1201 = vsel %vm144, %v1125, 0
  %v1204 = vsel %vm144, %v1126, 0
  %v1207 = vsel %vm144, %v1127, 0
  %v1210 = vsel %vm144, %v1128, 0
  %v1213 = vsel %vm144, %v1129, 0
  %v1216 = vsel %vm144, %v1130, 0
  %v1219 = vsel %vm144, %v1131, 0
  %v1222 = vsel %vm144, %v1132, 0
  %v1225 = vsel %vm144, %v1133, 0
  %v1228 = vsel %vm144, %v1134, 0
  %v1231 = vsel %vm144, %v1135, 0
  %v1234 = vsel %vm144, %v1136, 0
  %v1237 = vsel %vm144, %v1137, 0
  %v1240 = vsel %vm144, %v1138, 0
  %v1243 = vsel %vm144, %v1139, 0
  %v1246 = vsel %vm144, %v1140, 0
  %v1249 = vsel %vm144, %v1141, 0
  %1251 = vmatpush.msra.mxu0 0.0
  %1252 = vmatpush.msra.mxu0 0.0
  %1253 = vmatpush.msra.mxu0 0.0
  %1254 = vmatpush.msra.mxu0 0.0
  %1255 = vmatpush.msra.mxu0 %v1165
  %1256 = vmatpush.msra.mxu0 %v1163
  %1257 = vmatpush.msra.mxu0 %v1161
  %1258 = vmatpush.msra.mxu0 %v1159
  %1259 = vmatpush.msra.mxu0 %v1157
  %1260 = vmatpush.msra.mxu0 %v1155
  %1261 = vmatpush.msra.mxu0 %v1153
  %1262 = vmatpush.msra.mxu0 %v1151
  %1263 = vmatpush.msra.mxu0 %v1149
  %1264 = vmatpush.msra.mxu0 %v1147
  %1265 = vmatpush.msra.mxu0 %v1145
  %1266 = vmatpush.msra.mxu0 %v1143
  %1267 = vmatmul.f32.gmra.mxu0 %v1168
  %v1268 = vpop.f32.mrf.mxu0
  %v1269 = vadd.f32 0.0, %v1268
  %1270 = vmatmul.f32.gmra.mxu0 %v1171
  %v1271 = vpop.f32.mrf.mxu0
  %v1272 = vadd.f32 0.0, %v1271
  %1273 = vmatmul.f32.gmra.mxu0 %v1174
  %v1274 = vpop.f32.mrf.mxu0
  %v1275 = vadd.f32 0.0, %v1274
  %1276 = vmatmul.f32.gmra.mxu0 %v1177
  %v1277 = vpop.f32.mrf.mxu0
  %v1278 = vadd.f32 0.0, %v1277
  %1279 = vmatmul.f32.gmra.mxu0 %v1180
  %v1280 = vpop.f32.mrf.mxu0
  %v1281 = vadd.f32 0.0, %v1280
  %1282 = vmatmul.f32.gmra.mxu0 %v1183
  %v1283 = vpop.f32.mrf.mxu0
  %v1284 = vadd.f32 0.0, %v1283
  %1285 = vmatmul.f32.gmra.mxu0 %v1186
  %v1286 = vpop.f32.mrf.mxu0
  %v1287 = vadd.f32 0.0, %v1286
  %1288 = vmatmul.f32.gmra.mxu0 %v1189
  %v1289 = vpop.f32.mrf.mxu0
  %v1290 = vadd.f32 0.0, %v1289
  %1291 = vmatmul.f32.gmra.mxu0 %v1192
  %v1292 = vpop.f32.mrf.mxu0
  %v1293 = vadd.f32 0.0, %v1292
  %1294 = vmatmul.f32.gmra.mxu0 %v1195
  %v1295 = vpop.f32.mrf.mxu0
  %v1296 = vadd.f32 0.0, %v1295
  %1297 = vmatmul.f32.gmra.mxu0 %v1198
  %v1298 = vpop.f32.mrf.mxu0
  %v1299 = vadd.f32 0.0, %v1298
  %1300 = vmatmul.f32.gmra.mxu0 %v1201
  %v1301 = vpop.f32.mrf.mxu0
  %v1302 = vadd.f32 0.0, %v1301
  %1303 = vmatmul.f32.gmra.mxu0 %v1204
  %v1304 = vpop.f32.mrf.mxu0
  %v1305 = vadd.f32 0.0, %v1304
  %1306 = vmatmul.f32.gmra.mxu0 %v1207
  %v1307 = vpop.f32.mrf.mxu0
  %v1308 = vadd.f32 0.0, %v1307
  %1309 = vmatmul.f32.gmra.mxu0 %v1210
  %v1310 = vpop.f32.mrf.mxu0
  %v1311 = vadd.f32 0.0, %v1310
  %1312 = vmatmul.f32.gmra.mxu0 %v1213
  %v1313 = vpop.f32.mrf.mxu0
  %v1314 = vadd.f32 0.0, %v1313
  %1315 = vmatmul.f32.gmra.mxu0 %v1216
  %v1316 = vpop.f32.mrf.mxu0
  %v1317 = vadd.f32 0.0, %v1316
  %1318 = vmatmul.f32.gmra.mxu0 %v1219
  %v1319 = vpop.f32.mrf.mxu0
  %v1320 = vadd.f32 0.0, %v1319
  %1321 = vmatmul.f32.gmra.mxu0 %v1222
  %v1322 = vpop.f32.mrf.mxu0
  %v1323 = vadd.f32 0.0, %v1322
  %1324 = vmatmul.f32.gmra.mxu0 %v1225
  %v1325 = vpop.f32.mrf.mxu0
  %v1326 = vadd.f32 0.0, %v1325
  %1327 = vmatmul.f32.gmra.mxu0 %v1228
  %v1328 = vpop.f32.mrf.mxu0
  %v1329 = vadd.f32 0.0, %v1328
  %1330 = vmatmul.f32.gmra.mxu0 %v1231
  %v1331 = vpop.f32.mrf.mxu0
  %v1332 = vadd.f32 0.0, %v1331
  %1333 = vmatmul.f32.gmra.mxu0 %v1234
  %v1334 = vpop.f32.mrf.mxu0
  %v1335 = vadd.f32 0.0, %v1334
  %1336 = vmatmul.f32.gmra.mxu0 %v1237
  %v1337 = vpop.f32.mrf.mxu0
  %v1338 = vadd.f32 0.0, %v1337
  %1339 = vmatmul.f32.gmra.mxu0 %v1240
  %v1340 = vpop.f32.mrf.mxu0
  %v1341 = vadd.f32 0.0, %v1340
  %1342 = vmatmul.f32.gmra.mxu0 %v1243
  %v1343 = vpop.f32.mrf.mxu0
  %v1344 = vadd.f32 0.0, %v1343
  %1345 = vmatmul.f32.gmra.mxu0 %v1246
  %v1346 = vpop.f32.mrf.mxu0
  %v1347 = vadd.f32 0.0, %v1346
  %1348 = vmatmul.f32.gmra.mxu0 %v1249
  %v1349 = vpop.f32.mrf.mxu0
  %v1350 = vadd.f32 0.0, %v1349
  %1351 = vdwg.mxu0
  %1352 = vmatpush.msra.mxu0 0.0
  %1353 = vmatpush.msra.mxu0 0.0
  %1354 = vmatpush.msra.mxu0 0.0
  %1355 = vmatpush.msra.mxu0 0.0
  %1356 = vmatpush.msra.mxu0 %v1166
  %1357 = vmatpush.msra.mxu0 %v1164
  %1358 = vmatpush.msra.mxu0 %v1162
  %1359 = vmatpush.msra.mxu0 %v1160
  %1360 = vmatpush.msra.mxu0 %v1158
  %1361 = vmatpush.msra.mxu0 %v1156
  %1362 = vmatpush.msra.mxu0 %v1154
  %1363 = vmatpush.msra.mxu0 %v1152
  %1364 = vmatpush.msra.mxu0 %v1150
  %1365 = vmatpush.msra.mxu0 %v1148
  %1366 = vmatpush.msra.mxu0 %v1146
  %1367 = vmatpush.msra.mxu0 %v1144
  %1368 = vmatmul.f32.gmra.mxu0 %v1168
  %v1369 = vpop.f32.mrf.mxu0
  %v1370 = vadd.f32 0.0, %v1369
  %1371 = vmatmul.f32.gmra.mxu0 %v1171
  %v1372 = vpop.f32.mrf.mxu0
  %v1373 = vadd.f32 0.0, %v1372
  %1374 = vmatmul.f32.gmra.mxu0 %v1174
  %v1375 = vpop.f32.mrf.mxu0
  %v1376 = vadd.f32 0.0, %v1375
  %1377 = vmatmul.f32.gmra.mxu0 %v1177
  %v1378 = vpop.f32.mrf.mxu0
  %v1379 = vadd.f32 0.0, %v1378
  %1380 = vmatmul.f32.gmra.mxu0 %v1180
  %v1381 = vpop.f32.mrf.mxu0
  %v1382 = vadd.f32 0.0, %v1381
  %1383 = vmatmul.f32.gmra.mxu0 %v1183
  %v1384 = vpop.f32.mrf.mxu0
  %v1385 = vadd.f32 0.0, %v1384
  %1386 = vmatmul.f32.gmra.mxu0 %v1186
  %v1387 = vpop.f32.mrf.mxu0
  %v1388 = vadd.f32 0.0, %v1387
  %1389 = vmatmul.f32.gmra.mxu0 %v1189
  %v1390 = vpop.f32.mrf.mxu0
  %v1391 = vadd.f32 0.0, %v1390
  %1392 = vmatmul.f32.gmra.mxu0 %v1192
  %v1393 = vpop.f32.mrf.mxu0
  %v1394 = vadd.f32 0.0, %v1393
  %1395 = vmatmul.f32.gmra.mxu0 %v1195
  %v1396 = vpop.f32.mrf.mxu0
  %v1397 = vadd.f32 0.0, %v1396
  %1398 = vmatmul.f32.gmra.mxu0 %v1198
  %v1399 = vpop.f32.mrf.mxu0
  %v1400 = vadd.f32 0.0, %v1399
  %1401 = vmatmul.f32.gmra.mxu0 %v1201
  %v1402 = vpop.f32.mrf.mxu0
  %v1403 = vadd.f32 0.0, %v1402
  %1404 = vmatmul.f32.gmra.mxu0 %v1204
  %v1405 = vpop.f32.mrf.mxu0
  %v1406 = vadd.f32 0.0, %v1405
  %1407 = vmatmul.f32.gmra.mxu0 %v1207
  %v1408 = vpop.f32.mrf.mxu0
  %v1409 = vadd.f32 0.0, %v1408
  %1410 = vmatmul.f32.gmra.mxu0 %v1210
  %v1411 = vpop.f32.mrf.mxu0
  %v1412 = vadd.f32 0.0, %v1411
  %1413 = vmatmul.f32.gmra.mxu0 %v1213
  %v1414 = vpop.f32.mrf.mxu0
  %v1415 = vadd.f32 0.0, %v1414
  %1416 = vmatmul.f32.gmra.mxu0 %v1216
  %v1417 = vpop.f32.mrf.mxu0
  %v1418 = vadd.f32 0.0, %v1417
  %1419 = vmatmul.f32.gmra.mxu0 %v1219
  %v1420 = vpop.f32.mrf.mxu0
  %v1421 = vadd.f32 0.0, %v1420
  %1422 = vmatmul.f32.gmra.mxu0 %v1222
  %v1423 = vpop.f32.mrf.mxu0
  %v1424 = vadd.f32 0.0, %v1423
  %1425 = vmatmul.f32.gmra.mxu0 %v1225
  %v1426 = vpop.f32.mrf.mxu0
  %v1427 = vadd.f32 0.0, %v1426
  %1428 = vmatmul.f32.gmra.mxu0 %v1228
  %v1429 = vpop.f32.mrf.mxu0
  %v1430 = vadd.f32 0.0, %v1429
  %1431 = vmatmul.f32.gmra.mxu0 %v1231
  %v1432 = vpop.f32.mrf.mxu0
  %v1433 = vadd.f32 0.0, %v1432
  %1434 = vmatmul.f32.gmra.mxu0 %v1234
  %v1435 = vpop.f32.mrf.mxu0
  %v1436 = vadd.f32 0.0, %v1435
  %1437 = vmatmul.f32.gmra.mxu0 %v1237
  %v1438 = vpop.f32.mrf.mxu0
  %v1439 = vadd.f32 0.0, %v1438
  %1440 = vmatmul.f32.gmra.mxu0 %v1240
  %v1441 = vpop.f32.mrf.mxu0
  %v1442 = vadd.f32 0.0, %v1441
  %1443 = vmatmul.f32.gmra.mxu0 %v1243
  %v1444 = vpop.f32.mrf.mxu0
  %v1445 = vadd.f32 0.0, %v1444
  %1446 = vmatmul.f32.gmra.mxu0 %v1246
  %v1447 = vpop.f32.mrf.mxu0
  %v1448 = vadd.f32 0.0, %v1447
  %1449 = vmatmul.f32.gmra.mxu0 %v1249
  %v1450 = vpop.f32.mrf.mxu0
  %v1451 = vadd.f32 0.0, %v1450
  %1452 = vdwg.mxu0
  %v1453 = vadd.f32 %v1057, %v1269
  %v1454 = vadd.f32 %v1058, %v1370
  %v1455 = vadd.f32 %v1059, %v1272
  %v1456 = vadd.f32 %v1060, %v1373
  %v1457 = vadd.f32 %v1061, %v1275
  %v1458 = vadd.f32 %v1062, %v1376
  %v1459 = vadd.f32 %v1063, %v1278
  %v1460 = vadd.f32 %v1064, %v1379
  %v1461 = vadd.f32 %v1065, %v1281
  %v1462 = vadd.f32 %v1066, %v1382
  %v1463 = vadd.f32 %v1067, %v1284
  %v1464 = vadd.f32 %v1068, %v1385
  %v1465 = vadd.f32 %v1069, %v1287
  %v1466 = vadd.f32 %v1070, %v1388
  %v1467 = vadd.f32 %v1071, %v1290
  %v1468 = vadd.f32 %v1072, %v1391
  %v1469 = vadd.f32 %v1073, %v1293
  %v1470 = vadd.f32 %v1074, %v1394
  %v1471 = vadd.f32 %v1075, %v1296
  %v1472 = vadd.f32 %v1076, %v1397
  %v1473 = vadd.f32 %v1077, %v1299
  %v1474 = vadd.f32 %v1078, %v1400
  %v1475 = vadd.f32 %v1079, %v1302
  %v1476 = vadd.f32 %v1080, %v1403
  %v1477 = vadd.f32 %v1081, %v1305
  %v1478 = vadd.f32 %v1082, %v1406
  %v1479 = vadd.f32 %v1083, %v1308
  %v1480 = vadd.f32 %v1084, %v1409
  %v1481 = vadd.f32 %v1085, %v1311
  %v1482 = vadd.f32 %v1086, %v1412
  %v1483 = vadd.f32 %v1087, %v1314
  %v1484 = vadd.f32 %v1088, %v1415
  %v1485 = vadd.f32 %v1089, %v1317
  %v1486 = vadd.f32 %v1090, %v1418
  %v1487 = vadd.f32 %v1091, %v1320
  %v1488 = vadd.f32 %v1092, %v1421
  %v1489 = vadd.f32 %v1093, %v1323
  %v1490 = vadd.f32 %v1094, %v1424
  %v1491 = vadd.f32 %v1095, %v1326
  %v1492 = vadd.f32 %v1096, %v1427
  %v1493 = vadd.f32 %v1097, %v1329
  %v1494 = vadd.f32 %v1098, %v1430
  %v1495 = vadd.f32 %v1099, %v1332
  %v1496 = vadd.f32 %v1100, %v1433
  %v1497 = vadd.f32 %v1101, %v1335
  %v1498 = vadd.f32 %v1102, %v1436
  %v1499 = vadd.f32 %v1103, %v1338
  %v1500 = vadd.f32 %v1104, %v1439
  %v1501 = vadd.f32 %v1105, %v1341
  %v1502 = vadd.f32 %v1106, %v1442
  %v1503 = vadd.f32 %v1107, %v1344
  %v1504 = vadd.f32 %v1108, %v1445
  %v1505 = vadd.f32 %v1109, %v1347
  %v1506 = vadd.f32 %v1110, %v1448
  %v1507 = vadd.f32 %v1111, %v1350
  %v1508 = vadd.f32 %v1112, %v1451
  %s1509 = scalar_lea.vmem %s0, 32
  %v1510 = vld [vmem:[%s1509] sm:$0xff]
  %v1511 = vld [vmem:[%s1509 + $0x8] sm:$0xff]
  %v1512 = vld [vmem:[%s1509 + $0x10] sm:$0xff]
  %v1513 = vld [vmem:[%s1509 + $0x18] sm:$0xff]
  %v1514 = vld [vmem:[%s1509 + $0x20] sm:$0xff]
  %v1515 = vld [vmem:[%s1509 + $0x28] sm:$0xff]
  %v1516 = vld [vmem:[%s1509 + $0x30] sm:$0xff]
  %v1517 = vld [vmem:[%s1509 + $0x38] sm:$0xff]
  %v1518 = vld [vmem:[%s1509 + $0x40] sm:$0xff]
  %v1519 = vld [vmem:[%s1509 + $0x48] sm:$0xff]
  %v1520 = vld [vmem:[%s1509 + $0x50] sm:$0xff]
  %v1521 = vld [vmem:[%s1509 + $0x58] sm:$0xff]
  %v1522 = vld [vmem:[%s1509 + $0x60] sm:$0xff]
  %v1523 = vld [vmem:[%s1509 + $0x68] sm:$0xff]
  %v1524 = vld [vmem:[%s1509 + $0x70] sm:$0xff]
  %v1525 = vld [vmem:[%s1509 + $0x78] sm:$0xff]
  %v1526 = vld [vmem:[%s1509 + $0x80] sm:$0xff]
  %v1527 = vld [vmem:[%s1509 + $0x88] sm:$0xff]
  %v1528 = vld [vmem:[%s1509 + $0x90] sm:$0xff]
  %v1529 = vld [vmem:[%s1509 + $0x98] sm:$0xff]
  %v1530 = vld [vmem:[%s1509 + $0xa0] sm:$0xff]
  %v1531 = vld [vmem:[%s1509 + $0xa8] sm:$0xff]
  %v1532 = vld [vmem:[%s1509 + $0xb0] sm:$0xff]
  %v1533 = vld [vmem:[%s1509 + $0xb8] sm:$0xff]
  %v1534 = vld [vmem:[%s1509 + $0xc0] sm:$0xff]
  %v1535 = vld [vmem:[%s1509 + $0xc8] sm:$0xff]
  %v1536 = vld [vmem:[%s1509 + $0xd0] sm:$0xff]
  %v1537 = vld [vmem:[%s1509 + $0xd8] sm:$0xff]
  %s1538 = scalar_lea.vmem %s1, 768
  %v1539 = vld [vmem:[%s1538] sm:$0xff]
  %v1540 = vld [vmem:[%s1538 + $0x8] sm:$0xff]
  %v1541 = vld [vmem:[%s1538 + $0x10] sm:$0xff]
  %v1542 = vld [vmem:[%s1538 + $0x18] sm:$0xff]
  %v1543 = vld [vmem:[%s1538 + $0x20] sm:$0xff]
  %v1544 = vld [vmem:[%s1538 + $0x28] sm:$0xff]
  %v1545 = vld [vmem:[%s1538 + $0x30] sm:$0xff]
  %v1546 = vld [vmem:[%s1538 + $0x38] sm:$0xff]
  %v1547 = vld [vmem:[%s1538 + $0x40] sm:$0xff]
  %v1548 = vld [vmem:[%s1538 + $0x48] sm:$0xff]
  %v1549 = vld [vmem:[%s1538 + $0x50] sm:$0xff]
  %v1550 = vld [vmem:[%s1538 + $0x58] sm:$0xff]
  %v1551 = vld [vmem:[%s1538 + $0x60] sm:$0xff]
  %v1552 = vld [vmem:[%s1538 + $0x68] sm:$0xff]
  %v1553 = vld [vmem:[%s1538 + $0x70] sm:$0xff]
  %v1554 = vld [vmem:[%s1538 + $0x78] sm:$0xff]
  %v1555 = vld [vmem:[%s1538 + $0x80] sm:$0xff]
  %v1556 = vld [vmem:[%s1538 + $0x88] sm:$0xff]
  %v1557 = vld [vmem:[%s1538 + $0x90] sm:$0xff]
  %v1558 = vld [vmem:[%s1538 + $0x98] sm:$0xff]
  %v1559 = vld [vmem:[%s1538 + $0xa0] sm:$0xff]
  %v1560 = vld [vmem:[%s1538 + $0xa8] sm:$0xff]
  %v1561 = vld [vmem:[%s1538 + $0xb0] sm:$0xff]
  %v1562 = vld [vmem:[%s1538 + $0xb8] sm:$0xff]
  %v1564 = vsel %vm144, %v1510, 0
  %v1567 = vsel %vm144, %v1511, 0
  %v1570 = vsel %vm144, %v1512, 0
  %v1573 = vsel %vm144, %v1513, 0
  %v1576 = vsel %vm144, %v1514, 0
  %v1579 = vsel %vm144, %v1515, 0
  %v1582 = vsel %vm144, %v1516, 0
  %v1585 = vsel %vm144, %v1517, 0
  %v1588 = vsel %vm144, %v1518, 0
  %v1591 = vsel %vm144, %v1519, 0
  %v1594 = vsel %vm144, %v1520, 0
  %v1597 = vsel %vm144, %v1521, 0
  %v1600 = vsel %vm144, %v1522, 0
  %v1603 = vsel %vm144, %v1523, 0
  %v1606 = vsel %vm144, %v1524, 0
  %v1609 = vsel %vm144, %v1525, 0
  %v1612 = vsel %vm144, %v1526, 0
  %v1615 = vsel %vm144, %v1527, 0
  %v1618 = vsel %vm144, %v1528, 0
  %v1621 = vsel %vm144, %v1529, 0
  %v1624 = vsel %vm144, %v1530, 0
  %v1627 = vsel %vm144, %v1531, 0
  %v1630 = vsel %vm144, %v1532, 0
  %v1633 = vsel %vm144, %v1533, 0
  %v1636 = vsel %vm144, %v1534, 0
  %v1639 = vsel %vm144, %v1535, 0
  %v1642 = vsel %vm144, %v1536, 0
  %v1645 = vsel %vm144, %v1537, 0
  %1647 = vmatpush.msra.mxu0 0.0
  %1648 = vmatpush.msra.mxu0 0.0
  %1649 = vmatpush.msra.mxu0 0.0
  %1650 = vmatpush.msra.mxu0 0.0
  %1651 = vmatpush.msra.mxu0 %v1561
  %1652 = vmatpush.msra.mxu0 %v1559
  %1653 = vmatpush.msra.mxu0 %v1557
  %1654 = vmatpush.msra.mxu0 %v1555
  %1655 = vmatpush.msra.mxu0 %v1553
  %1656 = vmatpush.msra.mxu0 %v1551
  %1657 = vmatpush.msra.mxu0 %v1549
  %1658 = vmatpush.msra.mxu0 %v1547
  %1659 = vmatpush.msra.mxu0 %v1545
  %1660 = vmatpush.msra.mxu0 %v1543
  %1661 = vmatpush.msra.mxu0 %v1541
  %1662 = vmatpush.msra.mxu0 %v1539
  %1663 = vmatmul.f32.gmra.mxu0 %v1564
  %v1664 = vpop.f32.mrf.mxu0
  %v1665 = vadd.f32 0.0, %v1664
  %1666 = vmatmul.f32.gmra.mxu0 %v1567
  %v1667 = vpop.f32.mrf.mxu0
  %v1668 = vadd.f32 0.0, %v1667
  %1669 = vmatmul.f32.gmra.mxu0 %v1570
  %v1670 = vpop.f32.mrf.mxu0
  %v1671 = vadd.f32 0.0, %v1670
  %1672 = vmatmul.f32.gmra.mxu0 %v1573
  %v1673 = vpop.f32.mrf.mxu0
  %v1674 = vadd.f32 0.0, %v1673
  %1675 = vmatmul.f32.gmra.mxu0 %v1576
  %v1676 = vpop.f32.mrf.mxu0
  %v1677 = vadd.f32 0.0, %v1676
  %1678 = vmatmul.f32.gmra.mxu0 %v1579
  %v1679 = vpop.f32.mrf.mxu0
  %v1680 = vadd.f32 0.0, %v1679
  %1681 = vmatmul.f32.gmra.mxu0 %v1582
  %v1682 = vpop.f32.mrf.mxu0
  %v1683 = vadd.f32 0.0, %v1682
  %1684 = vmatmul.f32.gmra.mxu0 %v1585
  %v1685 = vpop.f32.mrf.mxu0
  %v1686 = vadd.f32 0.0, %v1685
  %1687 = vmatmul.f32.gmra.mxu0 %v1588
  %v1688 = vpop.f32.mrf.mxu0
  %v1689 = vadd.f32 0.0, %v1688
  %1690 = vmatmul.f32.gmra.mxu0 %v1591
  %v1691 = vpop.f32.mrf.mxu0
  %v1692 = vadd.f32 0.0, %v1691
  %1693 = vmatmul.f32.gmra.mxu0 %v1594
  %v1694 = vpop.f32.mrf.mxu0
  %v1695 = vadd.f32 0.0, %v1694
  %1696 = vmatmul.f32.gmra.mxu0 %v1597
  %v1697 = vpop.f32.mrf.mxu0
  %v1698 = vadd.f32 0.0, %v1697
  %1699 = vmatmul.f32.gmra.mxu0 %v1600
  %v1700 = vpop.f32.mrf.mxu0
  %v1701 = vadd.f32 0.0, %v1700
  %1702 = vmatmul.f32.gmra.mxu0 %v1603
  %v1703 = vpop.f32.mrf.mxu0
  %v1704 = vadd.f32 0.0, %v1703
  %1705 = vmatmul.f32.gmra.mxu0 %v1606
  %v1706 = vpop.f32.mrf.mxu0
  %v1707 = vadd.f32 0.0, %v1706
  %1708 = vmatmul.f32.gmra.mxu0 %v1609
  %v1709 = vpop.f32.mrf.mxu0
  %v1710 = vadd.f32 0.0, %v1709
  %1711 = vmatmul.f32.gmra.mxu0 %v1612
  %v1712 = vpop.f32.mrf.mxu0
  %v1713 = vadd.f32 0.0, %v1712
  %1714 = vmatmul.f32.gmra.mxu0 %v1615
  %v1715 = vpop.f32.mrf.mxu0
  %v1716 = vadd.f32 0.0, %v1715
  %1717 = vmatmul.f32.gmra.mxu0 %v1618
  %v1718 = vpop.f32.mrf.mxu0
  %v1719 = vadd.f32 0.0, %v1718
  %1720 = vmatmul.f32.gmra.mxu0 %v1621
  %v1721 = vpop.f32.mrf.mxu0
  %v1722 = vadd.f32 0.0, %v1721
  %1723 = vmatmul.f32.gmra.mxu0 %v1624
  %v1724 = vpop.f32.mrf.mxu0
  %v1725 = vadd.f32 0.0, %v1724
  %1726 = vmatmul.f32.gmra.mxu0 %v1627
  %v1727 = vpop.f32.mrf.mxu0
  %v1728 = vadd.f32 0.0, %v1727
  %1729 = vmatmul.f32.gmra.mxu0 %v1630
  %v1730 = vpop.f32.mrf.mxu0
  %v1731 = vadd.f32 0.0, %v1730
  %1732 = vmatmul.f32.gmra.mxu0 %v1633
  %v1733 = vpop.f32.mrf.mxu0
  %v1734 = vadd.f32 0.0, %v1733
  %1735 = vmatmul.f32.gmra.mxu0 %v1636
  %v1736 = vpop.f32.mrf.mxu0
  %v1737 = vadd.f32 0.0, %v1736
  %1738 = vmatmul.f32.gmra.mxu0 %v1639
  %v1739 = vpop.f32.mrf.mxu0
  %v1740 = vadd.f32 0.0, %v1739
  %1741 = vmatmul.f32.gmra.mxu0 %v1642
  %v1742 = vpop.f32.mrf.mxu0
  %v1743 = vadd.f32 0.0, %v1742
  %1744 = vmatmul.f32.gmra.mxu0 %v1645
  %v1745 = vpop.f32.mrf.mxu0
  %v1746 = vadd.f32 0.0, %v1745
  %1747 = vdwg.mxu0
  %1748 = vmatpush.msra.mxu0 0.0
  %1749 = vmatpush.msra.mxu0 0.0
  %1750 = vmatpush.msra.mxu0 0.0
  %1751 = vmatpush.msra.mxu0 0.0
  %1752 = vmatpush.msra.mxu0 %v1562
  %1753 = vmatpush.msra.mxu0 %v1560
  %1754 = vmatpush.msra.mxu0 %v1558
  %1755 = vmatpush.msra.mxu0 %v1556
  %1756 = vmatpush.msra.mxu0 %v1554
  %1757 = vmatpush.msra.mxu0 %v1552
  %1758 = vmatpush.msra.mxu0 %v1550
  %1759 = vmatpush.msra.mxu0 %v1548
  %1760 = vmatpush.msra.mxu0 %v1546
  %1761 = vmatpush.msra.mxu0 %v1544
  %1762 = vmatpush.msra.mxu0 %v1542
  %1763 = vmatpush.msra.mxu0 %v1540
  %1764 = vmatmul.f32.gmra.mxu0 %v1564
  %v1765 = vpop.f32.mrf.mxu0
  %v1766 = vadd.f32 0.0, %v1765
  %1767 = vmatmul.f32.gmra.mxu0 %v1567
  %v1768 = vpop.f32.mrf.mxu0
  %v1769 = vadd.f32 0.0, %v1768
  %1770 = vmatmul.f32.gmra.mxu0 %v1570
  %v1771 = vpop.f32.mrf.mxu0
  %v1772 = vadd.f32 0.0, %v1771
  %1773 = vmatmul.f32.gmra.mxu0 %v1573
  %v1774 = vpop.f32.mrf.mxu0
  %v1775 = vadd.f32 0.0, %v1774
  %1776 = vmatmul.f32.gmra.mxu0 %v1576
  %v1777 = vpop.f32.mrf.mxu0
  %v1778 = vadd.f32 0.0, %v1777
  %1779 = vmatmul.f32.gmra.mxu0 %v1579
  %v1780 = vpop.f32.mrf.mxu0
  %v1781 = vadd.f32 0.0, %v1780
  %1782 = vmatmul.f32.gmra.mxu0 %v1582
  %v1783 = vpop.f32.mrf.mxu0
  %v1784 = vadd.f32 0.0, %v1783
  %1785 = vmatmul.f32.gmra.mxu0 %v1585
  %v1786 = vpop.f32.mrf.mxu0
  %v1787 = vadd.f32 0.0, %v1786
  %1788 = vmatmul.f32.gmra.mxu0 %v1588
  %v1789 = vpop.f32.mrf.mxu0
  %v1790 = vadd.f32 0.0, %v1789
  %1791 = vmatmul.f32.gmra.mxu0 %v1591
  %v1792 = vpop.f32.mrf.mxu0
  %v1793 = vadd.f32 0.0, %v1792
  %1794 = vmatmul.f32.gmra.mxu0 %v1594
  %v1795 = vpop.f32.mrf.mxu0
  %v1796 = vadd.f32 0.0, %v1795
  %1797 = vmatmul.f32.gmra.mxu0 %v1597
  %v1798 = vpop.f32.mrf.mxu0
  %v1799 = vadd.f32 0.0, %v1798
  %1800 = vmatmul.f32.gmra.mxu0 %v1600
  %v1801 = vpop.f32.mrf.mxu0
  %v1802 = vadd.f32 0.0, %v1801
  %1803 = vmatmul.f32.gmra.mxu0 %v1603
  %v1804 = vpop.f32.mrf.mxu0
  %v1805 = vadd.f32 0.0, %v1804
  %1806 = vmatmul.f32.gmra.mxu0 %v1606
  %v1807 = vpop.f32.mrf.mxu0
  %v1808 = vadd.f32 0.0, %v1807
  %1809 = vmatmul.f32.gmra.mxu0 %v1609
  %v1810 = vpop.f32.mrf.mxu0
  %v1811 = vadd.f32 0.0, %v1810
  %1812 = vmatmul.f32.gmra.mxu0 %v1612
  %v1813 = vpop.f32.mrf.mxu0
  %v1814 = vadd.f32 0.0, %v1813
  %1815 = vmatmul.f32.gmra.mxu0 %v1615
  %v1816 = vpop.f32.mrf.mxu0
  %v1817 = vadd.f32 0.0, %v1816
  %1818 = vmatmul.f32.gmra.mxu0 %v1618
  %v1819 = vpop.f32.mrf.mxu0
  %v1820 = vadd.f32 0.0, %v1819
  %1821 = vmatmul.f32.gmra.mxu0 %v1621
  %v1822 = vpop.f32.mrf.mxu0
  %v1823 = vadd.f32 0.0, %v1822
  %1824 = vmatmul.f32.gmra.mxu0 %v1624
  %v1825 = vpop.f32.mrf.mxu0
  %v1826 = vadd.f32 0.0, %v1825
  %1827 = vmatmul.f32.gmra.mxu0 %v1627
  %v1828 = vpop.f32.mrf.mxu0
  %v1829 = vadd.f32 0.0, %v1828
  %1830 = vmatmul.f32.gmra.mxu0 %v1630
  %v1831 = vpop.f32.mrf.mxu0
  %v1832 = vadd.f32 0.0, %v1831
  %1833 = vmatmul.f32.gmra.mxu0 %v1633
  %v1834 = vpop.f32.mrf.mxu0
  %v1835 = vadd.f32 0.0, %v1834
  %1836 = vmatmul.f32.gmra.mxu0 %v1636
  %v1837 = vpop.f32.mrf.mxu0
  %v1838 = vadd.f32 0.0, %v1837
  %1839 = vmatmul.f32.gmra.mxu0 %v1639
  %v1840 = vpop.f32.mrf.mxu0
  %v1841 = vadd.f32 0.0, %v1840
  %1842 = vmatmul.f32.gmra.mxu0 %v1642
  %v1843 = vpop.f32.mrf.mxu0
  %v1844 = vadd.f32 0.0, %v1843
  %1845 = vmatmul.f32.gmra.mxu0 %v1645
  %v1846 = vpop.f32.mrf.mxu0
  %v1847 = vadd.f32 0.0, %v1846
  %1848 = vdwg.mxu0
  %v1849 = vadd.f32 %v1453, %v1665
  %v1850 = vadd.f32 %v1454, %v1766
  %v1851 = vadd.f32 %v1455, %v1668
  %v1852 = vadd.f32 %v1456, %v1769
  %v1853 = vadd.f32 %v1457, %v1671
  %v1854 = vadd.f32 %v1458, %v1772
  %v1855 = vadd.f32 %v1459, %v1674
  %v1856 = vadd.f32 %v1460, %v1775
  %v1857 = vadd.f32 %v1461, %v1677
  %v1858 = vadd.f32 %v1462, %v1778
  %v1859 = vadd.f32 %v1463, %v1680
  %v1860 = vadd.f32 %v1464, %v1781
  %v1861 = vadd.f32 %v1465, %v1683
  %v1862 = vadd.f32 %v1466, %v1784
  %v1863 = vadd.f32 %v1467, %v1686
  %v1864 = vadd.f32 %v1468, %v1787
  %v1865 = vadd.f32 %v1469, %v1689
  %v1866 = vadd.f32 %v1470, %v1790
  %v1867 = vadd.f32 %v1471, %v1692
  %v1868 = vadd.f32 %v1472, %v1793
  %v1869 = vadd.f32 %v1473, %v1695
  %v1870 = vadd.f32 %v1474, %v1796
  %v1871 = vadd.f32 %v1475, %v1698
  %v1872 = vadd.f32 %v1476, %v1799
  %v1873 = vadd.f32 %v1477, %v1701
  %v1874 = vadd.f32 %v1478, %v1802
  %v1875 = vadd.f32 %v1479, %v1704
  %v1876 = vadd.f32 %v1480, %v1805
  %v1877 = vadd.f32 %v1481, %v1707
  %v1878 = vadd.f32 %v1482, %v1808
  %v1879 = vadd.f32 %v1483, %v1710
  %v1880 = vadd.f32 %v1484, %v1811
  %v1881 = vadd.f32 %v1485, %v1713
  %v1882 = vadd.f32 %v1486, %v1814
  %v1883 = vadd.f32 %v1487, %v1716
  %v1884 = vadd.f32 %v1488, %v1817
  %v1885 = vadd.f32 %v1489, %v1719
  %v1886 = vadd.f32 %v1490, %v1820
  %v1887 = vadd.f32 %v1491, %v1722
  %v1888 = vadd.f32 %v1492, %v1823
  %v1889 = vadd.f32 %v1493, %v1725
  %v1890 = vadd.f32 %v1494, %v1826
  %v1891 = vadd.f32 %v1495, %v1728
  %v1892 = vadd.f32 %v1496, %v1829
  %v1893 = vadd.f32 %v1497, %v1731
  %v1894 = vadd.f32 %v1498, %v1832
  %v1895 = vadd.f32 %v1499, %v1734
  %v1896 = vadd.f32 %v1500, %v1835
  %v1897 = vadd.f32 %v1501, %v1737
  %v1898 = vadd.f32 %v1502, %v1838
  %v1899 = vadd.f32 %v1503, %v1740
  %v1900 = vadd.f32 %v1504, %v1841
  %v1901 = vadd.f32 %v1505, %v1743
  %v1902 = vadd.f32 %v1506, %v1844
  %v1903 = vadd.f32 %v1507, %v1746
  %v1904 = vadd.f32 %v1508, %v1847
  %v1905 = vld [vmem:[%s2] sm:$0x3]
  %v1907 = vperm.slane %v1905, 0
  %v1908 = vperm.slane %v1905, 1
  %v1911 = vadd.f32 %v1849, %v1907
  %v1912 = vadd.f32 %v1850, %v1908
  %v1913 = vadd.f32 %v1851, %v1907
  %v1914 = vadd.f32 %v1852, %v1908
  %v1915 = vadd.f32 %v1853, %v1907
  %v1916 = vadd.f32 %v1854, %v1908
  %v1917 = vadd.f32 %v1855, %v1907
  %v1918 = vadd.f32 %v1856, %v1908
  %v1919 = vadd.f32 %v1857, %v1907
  %v1920 = vadd.f32 %v1858, %v1908
  %v1921 = vadd.f32 %v1859, %v1907
  %v1922 = vadd.f32 %v1860, %v1908
  %v1923 = vadd.f32 %v1861, %v1907
  %v1924 = vadd.f32 %v1862, %v1908
  %v1925 = vadd.f32 %v1863, %v1907
  %v1926 = vadd.f32 %v1864, %v1908
  %v1927 = vadd.f32 %v1865, %v1907
  %v1928 = vadd.f32 %v1866, %v1908
  %v1929 = vadd.f32 %v1867, %v1907
  %v1930 = vadd.f32 %v1868, %v1908
  %v1931 = vadd.f32 %v1869, %v1907
  %v1932 = vadd.f32 %v1870, %v1908
  %v1933 = vadd.f32 %v1871, %v1907
  %v1934 = vadd.f32 %v1872, %v1908
  %v1935 = vadd.f32 %v1873, %v1907
  %v1936 = vadd.f32 %v1874, %v1908
  %v1937 = vadd.f32 %v1875, %v1907
  %v1938 = vadd.f32 %v1876, %v1908
  %v1939 = vadd.f32 %v1877, %v1907
  %v1940 = vadd.f32 %v1878, %v1908
  %v1941 = vadd.f32 %v1879, %v1907
  %v1942 = vadd.f32 %v1880, %v1908
  %v1943 = vadd.f32 %v1881, %v1907
  %v1944 = vadd.f32 %v1882, %v1908
  %v1945 = vadd.f32 %v1883, %v1907
  %v1946 = vadd.f32 %v1884, %v1908
  %v1947 = vadd.f32 %v1885, %v1907
  %v1948 = vadd.f32 %v1886, %v1908
  %v1949 = vadd.f32 %v1887, %v1907
  %v1950 = vadd.f32 %v1888, %v1908
  %v1951 = vadd.f32 %v1889, %v1907
  %v1952 = vadd.f32 %v1890, %v1908
  %v1953 = vadd.f32 %v1891, %v1907
  %v1954 = vadd.f32 %v1892, %v1908
  %v1955 = vadd.f32 %v1893, %v1907
  %v1956 = vadd.f32 %v1894, %v1908
  %v1957 = vadd.f32 %v1895, %v1907
  %v1958 = vadd.f32 %v1896, %v1908
  %v1959 = vadd.f32 %v1897, %v1907
  %v1960 = vadd.f32 %v1898, %v1908
  %v1961 = vadd.f32 %v1899, %v1907
  %v1962 = vadd.f32 %v1900, %v1908
  %v1963 = vadd.f32 %v1901, %v1907
  %v1964 = vadd.f32 %v1902, %v1908
  %v1965 = vadd.f32 %v1903, %v1907
  %v1966 = vadd.f32 %v1904, %v1908
  %v1967 = vmax.f32 %v1911, 0.0
  %v1968 = vmax.f32 %v1912, 0.0
  %v1969 = vmax.f32 %v1913, 0.0
  %v1970 = vmax.f32 %v1914, 0.0
  %v1971 = vmax.f32 %v1915, 0.0
  %v1972 = vmax.f32 %v1916, 0.0
  %v1973 = vmax.f32 %v1917, 0.0
  %v1974 = vmax.f32 %v1918, 0.0
  %v1975 = vmax.f32 %v1919, 0.0
  %v1976 = vmax.f32 %v1920, 0.0
  %v1977 = vmax.f32 %v1921, 0.0
  %v1978 = vmax.f32 %v1922, 0.0
  %v1979 = vmax.f32 %v1923, 0.0
  %v1980 = vmax.f32 %v1924, 0.0
  %v1981 = vmax.f32 %v1925, 0.0
  %v1982 = vmax.f32 %v1926, 0.0
  %v1983 = vmax.f32 %v1927, 0.0
  %v1984 = vmax.f32 %v1928, 0.0
  %v1985 = vmax.f32 %v1929, 0.0
  %v1986 = vmax.f32 %v1930, 0.0
  %v1987 = vmax.f32 %v1931, 0.0
  %v1988 = vmax.f32 %v1932, 0.0
  %v1989 = vmax.f32 %v1933, 0.0
  %v1990 = vmax.f32 %v1934, 0.0
  %v1991 = vmax.f32 %v1935, 0.0
  %v1992 = vmax.f32 %v1936, 0.0
  %v1993 = vmax.f32 %v1937, 0.0
  %v1994 = vmax.f32 %v1938, 0.0
  %v1995 = vmax.f32 %v1939, 0.0
  %v1996 = vmax.f32 %v1940, 0.0
  %v1997 = vmax.f32 %v1941, 0.0
  %v1998 = vmax.f32 %v1942, 0.0
  %v1999 = vmax.f32 %v1943, 0.0
  %v2000 = vmax.f32 %v1944, 0.0
  %v2001 = vmax.f32 %v1945, 0.0
  %v2002 = vmax.f32 %v1946, 0.0
  %v2003 = vmax.f32 %v1947, 0.0
  %v2004 = vmax.f32 %v1948, 0.0
  %v2005 = vmax.f32 %v1949, 0.0
  %v2006 = vmax.f32 %v1950, 0.0
  %v2007 = vmax.f32 %v1951, 0.0
  %v2008 = vmax.f32 %v1952, 0.0
  %v2009 = vmax.f32 %v1953, 0.0
  %v2010 = vmax.f32 %v1954, 0.0
  %v2011 = vmax.f32 %v1955, 0.0
  %v2012 = vmax.f32 %v1956, 0.0
  %v2013 = vmax.f32 %v1957, 0.0
  %v2014 = vmax.f32 %v1958, 0.0
  %v2015 = vmax.f32 %v1959, 0.0
  %v2016 = vmax.f32 %v1960, 0.0
  %v2017 = vmax.f32 %v1961, 0.0
  %v2018 = vmax.f32 %v1962, 0.0
  %v2019 = vmax.f32 %v1963, 0.0
  %v2020 = vmax.f32 %v1964, 0.0
  %v2021 = vmax.f32 %v1965, 0.0
  %v2022 = vmax.f32 %v1966, 0.0
  %2079 = vrot.lane.b32.xlu0 %v1967, 44
  %v2080 = vpop.permute.xlu0 %2079
  %2081 = vrot.lane.b32.xlu0 %v1968, 44
  %v2082 = vpop.permute.xlu0 %2081
  %2083 = vrot.lane.b32.xlu0 %v1969, 44
  %v2084 = vpop.permute.xlu0 %2083
  %2085 = vrot.lane.b32.xlu0 %v1970, 44
  %v2086 = vpop.permute.xlu0 %2085
  %2087 = vrot.lane.b32.xlu0 %v1971, 44
  %v2088 = vpop.permute.xlu0 %2087
  %2089 = vrot.lane.b32.xlu0 %v1972, 44
  %v2090 = vpop.permute.xlu0 %2089
  %2091 = vrot.lane.b32.xlu0 %v1973, 44
  %v2092 = vpop.permute.xlu0 %2091
  %2093 = vrot.lane.b32.xlu0 %v1974, 44
  %v2094 = vpop.permute.xlu0 %2093
  %2095 = vrot.lane.b32.xlu0 %v1975, 44
  %v2096 = vpop.permute.xlu0 %2095
  %2097 = vrot.lane.b32.xlu0 %v1976, 44
  %v2098 = vpop.permute.xlu0 %2097
  %2099 = vrot.lane.b32.xlu0 %v1977, 44
  %v2100 = vpop.permute.xlu0 %2099
  %2101 = vrot.lane.b32.xlu0 %v1978, 44
  %v2102 = vpop.permute.xlu0 %2101
  %2103 = vrot.lane.b32.xlu0 %v1979, 44
  %v2104 = vpop.permute.xlu0 %2103
  %2105 = vrot.lane.b32.xlu0 %v1980, 44
  %v2106 = vpop.permute.xlu0 %2105
  %2107 = vrot.lane.b32.xlu0 %v1981, 44
  %v2108 = vpop.permute.xlu0 %2107
  %2109 = vrot.lane.b32.xlu0 %v1982, 44
  %v2110 = vpop.permute.xlu0 %2109
  %2111 = vrot.lane.b32.xlu0 %v1983, 44
  %v2112 = vpop.permute.xlu0 %2111
  %2113 = vrot.lane.b32.xlu0 %v1984, 44
  %v2114 = vpop.permute.xlu0 %2113
  %2115 = vrot.lane.b32.xlu0 %v1985, 44
  %v2116 = vpop.permute.xlu0 %2115
  %2117 = vrot.lane.b32.xlu0 %v1986, 44
  %v2118 = vpop.permute.xlu0 %2117
  %2119 = vrot.lane.b32.xlu0 %v1987, 44
  %v2120 = vpop.permute.xlu0 %2119
  %2121 = vrot.lane.b32.xlu0 %v1988, 44
  %v2122 = vpop.permute.xlu0 %2121
  %2123 = vrot.lane.b32.xlu0 %v1989, 44
  %v2124 = vpop.permute.xlu0 %2123
  %2125 = vrot.lane.b32.xlu0 %v1990, 44
  %v2126 = vpop.permute.xlu0 %2125
  %2127 = vrot.lane.b32.xlu0 %v1991, 44
  %v2128 = vpop.permute.xlu0 %2127
  %2129 = vrot.lane.b32.xlu0 %v1992, 44
  %v2130 = vpop.permute.xlu0 %2129
  %2131 = vrot.lane.b32.xlu0 %v1993, 44
  %v2132 = vpop.permute.xlu0 %2131
  %2133 = vrot.lane.b32.xlu0 %v1994, 44
  %v2134 = vpop.permute.xlu0 %2133
  %2135 = vrot.lane.b32.xlu0 %v1995, 44
  %v2136 = vpop.permute.xlu0 %2135
  %2137 = vrot.lane.b32.xlu0 %v1996, 44
  %v2138 = vpop.permute.xlu0 %2137
  %2139 = vrot.lane.b32.xlu0 %v1997, 44
  %v2140 = vpop.permute.xlu0 %2139
  %2141 = vrot.lane.b32.xlu0 %v1998, 44
  %v2142 = vpop.permute.xlu0 %2141
  %2143 = vrot.lane.b32.xlu0 %v1999, 44
  %v2144 = vpop.permute.xlu0 %2143
  %2145 = vrot.lane.b32.xlu0 %v2000, 44
  %v2146 = vpop.permute.xlu0 %2145
  %2147 = vrot.lane.b32.xlu0 %v2001, 44
  %v2148 = vpop.permute.xlu0 %2147
  %2149 = vrot.lane.b32.xlu0 %v2002, 44
  %v2150 = vpop.permute.xlu0 %2149
  %2151 = vrot.lane.b32.xlu0 %v2003, 44
  %v2152 = vpop.permute.xlu0 %2151
  %2153 = vrot.lane.b32.xlu0 %v2004, 44
  %v2154 = vpop.permute.xlu0 %2153
  %2155 = vrot.lane.b32.xlu0 %v2005, 44
  %v2156 = vpop.permute.xlu0 %2155
  %2157 = vrot.lane.b32.xlu0 %v2006, 44
  %v2158 = vpop.permute.xlu0 %2157
  %2159 = vrot.lane.b32.xlu0 %v2007, 44
  %v2160 = vpop.permute.xlu0 %2159
  %2161 = vrot.lane.b32.xlu0 %v2008, 44
  %v2162 = vpop.permute.xlu0 %2161
  %2163 = vrot.lane.b32.xlu0 %v2009, 44
  %v2164 = vpop.permute.xlu0 %2163
  %2165 = vrot.lane.b32.xlu0 %v2010, 44
  %v2166 = vpop.permute.xlu0 %2165
  %2167 = vrot.lane.b32.xlu0 %v2011, 44
  %v2168 = vpop.permute.xlu0 %2167
  %2169 = vrot.lane.b32.xlu0 %v2012, 44
  %v2170 = vpop.permute.xlu0 %2169
  %2171 = vrot.lane.b32.xlu0 %v2013, 44
  %v2172 = vpop.permute.xlu0 %2171
  %2173 = vrot.lane.b32.xlu0 %v2014, 44
  %v2174 = vpop.permute.xlu0 %2173
  %2175 = vrot.lane.b32.xlu0 %v2015, 44
  %v2176 = vpop.permute.xlu0 %2175
  %2177 = vrot.lane.b32.xlu0 %v2016, 44
  %v2178 = vpop.permute.xlu0 %2177
  %2179 = vrot.lane.b32.xlu0 %v2017, 44
  %v2180 = vpop.permute.xlu0 %2179
  %2181 = vrot.lane.b32.xlu0 %v2018, 44
  %v2182 = vpop.permute.xlu0 %2181
  %2183 = vrot.lane.b32.xlu0 %v2019, 44
  %v2184 = vpop.permute.xlu0 %2183
  %2185 = vrot.lane.b32.xlu0 %v2020, 44
  %v2186 = vpop.permute.xlu0 %2185
  %2187 = vrot.lane.b32.xlu0 %v2021, 44
  %v2188 = vpop.permute.xlu0 %2187
  %2189 = vrot.lane.b32.xlu0 %v2022, 44
  %v2190 = vpop.permute.xlu0 %2189
  %vm2191 = vcmask 359424
  %v2192 = vsel %vm2191, %v2080, %v2082
  %v2193 = vsel %vm2191, %v2084, %v2086
  %v2194 = vsel %vm2191, %v2088, %v2090
  %v2195 = vsel %vm2191, %v2092, %v2094
  %v2196 = vsel %vm2191, %v2096, %v2098
  %v2197 = vsel %vm2191, %v2100, %v2102
  %v2198 = vsel %vm2191, %v2104, %v2106
  %v2199 = vsel %vm2191, %v2108, %v2110
  %v2200 = vsel %vm2191, %v2112, %v2114
  %v2201 = vsel %vm2191, %v2116, %v2118
  %v2202 = vsel %vm2191, %v2120, %v2122
  %v2203 = vsel %vm2191, %v2124, %v2126
  %v2204 = vsel %vm2191, %v2128, %v2130
  %v2205 = vsel %vm2191, %v2132, %v2134
  %v2206 = vsel %vm2191, %v2136, %v2138
  %v2207 = vsel %vm2191, %v2140, %v2142
  %v2208 = vsel %vm2191, %v2144, %v2146
  %v2209 = vsel %vm2191, %v2148, %v2150
  %v2210 = vsel %vm2191, %v2152, %v2154
  %v2211 = vsel %vm2191, %v2156, %v2158
  %v2212 = vsel %vm2191, %v2160, %v2162
  %v2213 = vsel %vm2191, %v2164, %v2166
  %v2214 = vsel %vm2191, %v2168, %v2170
  %v2215 = vsel %vm2191, %v2172, %v2174
  %v2216 = vsel %vm2191, %v2176, %v2178
  %v2217 = vsel %vm2191, %v2180, %v2182
  %v2218 = vsel %vm2191, %v2184, %v2186
  %v2219 = vsel %vm2191, %v2188, %v2190
  %v2248 = vmax.f32 %v1967, %v2192
  %v2249 = vmax.f32 %v1969, %v2193
  %v2250 = vmax.f32 %v1971, %v2194
  %v2251 = vmax.f32 %v1973, %v2195
  %v2252 = vmax.f32 %v1975, %v2196
  %v2253 = vmax.f32 %v1977, %v2197
  %v2254 = vmax.f32 %v1979, %v2198
  %v2255 = vmax.f32 %v1981, %v2199
  %v2256 = vmax.f32 %v1983, %v2200
  %v2257 = vmax.f32 %v1985, %v2201
  %v2258 = vmax.f32 %v1987, %v2202
  %v2259 = vmax.f32 %v1989, %v2203
  %v2260 = vmax.f32 %v1991, %v2204
  %v2261 = vmax.f32 %v1993, %v2205
  %v2262 = vmax.f32 %v1995, %v2206
  %v2263 = vmax.f32 %v1997, %v2207
  %v2264 = vmax.f32 %v1999, %v2208
  %v2265 = vmax.f32 %v2001, %v2209
  %v2266 = vmax.f32 %v2003, %v2210
  %v2267 = vmax.f32 %v2005, %v2211
  %v2268 = vmax.f32 %v2007, %v2212
  %v2269 = vmax.f32 %v2009, %v2213
  %v2270 = vmax.f32 %v2011, %v2214
  %v2271 = vmax.f32 %v2013, %v2215
  %v2272 = vmax.f32 %v2015, %v2216
  %v2273 = vmax.f32 %v2017, %v2217
  %v2274 = vmax.f32 %v2019, %v2218
  %v2275 = vmax.f32 %v2021, %v2219
  %v2276 = vmax.f32 %v2248, %v2249
  %v2277 = vmax.f32 %v2250, %v2251
  %v2278 = vmax.f32 %v2252, %v2253
  %v2279 = vmax.f32 %v2254, %v2255
  %v2280 = vmax.f32 %v2256, %v2257
  %v2281 = vmax.f32 %v2258, %v2259
  %v2282 = vmax.f32 %v2260, %v2261
  %v2283 = vmax.f32 %v2262, %v2263
  %v2284 = vmax.f32 %v2264, %v2265
  %v2285 = vmax.f32 %v2266, %v2267
  %v2286 = vmax.f32 %v2268, %v2269
  %v2287 = vmax.f32 %v2270, %v2271
  %v2288 = vmax.f32 %v2272, %v2273
  %v2289 = vmax.f32 %v2274, %v2275
  %v2290 = vld [vmem:[%s3] sm:$0xff]
  %v2291 = vld [vmem:[%s3 + $0x8] sm:$0xff]
  %v2292 = vld [vmem:[%s3 + $0x10] sm:$0xff]
  %v2293 = vld [vmem:[%s3 + $0x18] sm:$0xff]
  %v2294 = vld [vmem:[%s3 + $0x20] sm:$0xff]
  %v2295 = vld [vmem:[%s3 + $0x28] sm:$0xff]
  %v2296 = vld [vmem:[%s3 + $0x30] sm:$0xff]
  %v2297 = vld [vmem:[%s3 + $0x38] sm:$0xff]
  %v2298 = vld [vmem:[%s3 + $0x40] sm:$0xff]
  %v2299 = vld [vmem:[%s3 + $0x48] sm:$0xff]
  %v2300 = vld [vmem:[%s3 + $0x50] sm:$0xff]
  %v2301 = vld [vmem:[%s3 + $0x58] sm:$0xff]
  %v2302 = vld [vmem:[%s3 + $0x60] sm:$0xff]
  %v2303 = vld [vmem:[%s3 + $0x68] sm:$0xff]
  %v2304 = vld [vmem:[%s3 + $0x70] sm:$0xff]
  %v2305 = vld [vmem:[%s3 + $0x78] sm:$0xff]
  %v2306 = vld [vmem:[%s3 + $0x80] sm:$0xff]
  %v2307 = vld [vmem:[%s3 + $0x88] sm:$0xff]
  %v2308 = vld [vmem:[%s3 + $0x90] sm:$0xff]
  %v2309 = vld [vmem:[%s3 + $0x98] sm:$0xff]
  %v2310 = vld [vmem:[%s3 + $0xa0] sm:$0xf]
  %v2311 = vld [vmem:[%s3 + $0xa8] sm:$0xf]
  %s2312 = scalar_lea.vmem %s3, 176
  %v2313 = vld [vmem:[%s2312] sm:$0xff]
  %v2314 = vld [vmem:[%s2312 + $0x8] sm:$0xff]
  %v2315 = vld [vmem:[%s2312 + $0x10] sm:$0xff]
  %v2316 = vld [vmem:[%s2312 + $0x18] sm:$0xff]
  %v2317 = vld [vmem:[%s2312 + $0x20] sm:$0xff]
  %v2318 = vld [vmem:[%s2312 + $0x28] sm:$0xff]
  %v2319 = vld [vmem:[%s2312 + $0x30] sm:$0xff]
  %v2320 = vld [vmem:[%s2312 + $0x38] sm:$0xff]
  %v2321 = vld [vmem:[%s2312 + $0x40] sm:$0xff]
  %v2322 = vld [vmem:[%s2312 + $0x48] sm:$0xff]
  %v2323 = vld [vmem:[%s2312 + $0x50] sm:$0xff]
  %v2324 = vld [vmem:[%s2312 + $0x58] sm:$0xff]
  %v2325 = vld [vmem:[%s2312 + $0x60] sm:$0xff]
  %v2326 = vld [vmem:[%s2312 + $0x68] sm:$0xff]
  %v2327 = vld [vmem:[%s2312 + $0x70] sm:$0xff]
  %v2328 = vld [vmem:[%s2312 + $0x78] sm:$0xff]
  %v2329 = vld [vmem:[%s2312 + $0x80] sm:$0xff]
  %v2330 = vld [vmem:[%s2312 + $0x88] sm:$0xff]
  %v2331 = vld [vmem:[%s2312 + $0x90] sm:$0xff]
  %v2332 = vld [vmem:[%s2312 + $0x98] sm:$0xff]
  %v2333 = vld [vmem:[%s2312 + $0xa0] sm:$0xf]
  %v2334 = vld [vmem:[%s2312 + $0xa8] sm:$0xf]
  %vm2335 = vcmask 687104
  %v2337 = vsel %vm2335, %v2277, 0
  %v2340 = vsel %vm2335, %v2278, 0
  %v2343 = vsel %vm2335, %v2279, 0
  %v2346 = vsel %vm2335, %v2280, 0
  %v2349 = vsel %vm2335, %v2281, 0
  %v2352 = vsel %vm2335, %v2282, 0
  %v2355 = vsel %vm2335, %v2283, 0
  %v2358 = vsel %vm2335, %v2284, 0
  %v2361 = vsel %vm2335, %v2285, 0
  %v2364 = vsel %vm2335, %v2286, 0
  %vm2366 = vcmask 1043456
  %v2368 = vsel %vm2366, %v2333, 0
  %v2371 = vsel %vm2366, %v2334, 0
  %2373 = vmatpush.msra.mxu0 0.0
  %2374 = vmatpush.msra.mxu0 0.0
  %2375 = vmatpush.msra.mxu0 0.0
  %2376 = vmatpush.msra.mxu0 0.0
  %2377 = vmatpush.msra.mxu0 0.0
  %2378 = vmatpush.msra.mxu0 %v2368
  %2379 = vmatpush.msra.mxu0 %v2331
  %2380 = vmatpush.msra.mxu0 %v2329
  %2381 = vmatpush.msra.mxu0 %v2327
  %2382 = vmatpush.msra.mxu0 %v2325
  %2383 = vmatpush.msra.mxu0 %v2323
  %2384 = vmatpush.msra.mxu0 %v2321
  %2385 = vmatpush.msra.mxu0 %v2319
  %2386 = vmatpush.msra.mxu0 %v2317
  %2387 = vmatpush.msra.mxu0 %v2315
  %2388 = vmatpush.msra.mxu0 %v2313
  %2389 = vmatmul.f32.gmra.mxu0 %v2337
  %v2390 = vpop.f32.mrf.mxu0
  %v2391 = vadd.f32 0.0, %v2390
  %2392 = vmatmul.f32.gmra.mxu0 %v2340
  %v2393 = vpop.f32.mrf.mxu0
  %v2394 = vadd.f32 0.0, %v2393
  %2395 = vmatmul.f32.gmra.mxu0 %v2343
  %v2396 = vpop.f32.mrf.mxu0
  %v2397 = vadd.f32 0.0, %v2396
  %2398 = vmatmul.f32.gmra.mxu0 %v2346
  %v2399 = vpop.f32.mrf.mxu0
  %v2400 = vadd.f32 0.0, %v2399
  %2401 = vmatmul.f32.gmra.mxu0 %v2349
  %v2402 = vpop.f32.mrf.mxu0
  %v2403 = vadd.f32 0.0, %v2402
  %2404 = vmatmul.f32.gmra.mxu0 %v2352
  %v2405 = vpop.f32.mrf.mxu0
  %v2406 = vadd.f32 0.0, %v2405
  %2407 = vmatmul.f32.gmra.mxu0 %v2355
  %v2408 = vpop.f32.mrf.mxu0
  %v2409 = vadd.f32 0.0, %v2408
  %2410 = vmatmul.f32.gmra.mxu0 %v2358
  %v2411 = vpop.f32.mrf.mxu0
  %v2412 = vadd.f32 0.0, %v2411
  %2413 = vmatmul.f32.gmra.mxu0 %v2361
  %v2414 = vpop.f32.mrf.mxu0
  %v2415 = vadd.f32 0.0, %v2414
  %2416 = vmatmul.f32.gmra.mxu0 %v2364
  %v2417 = vpop.f32.mrf.mxu0
  %v2418 = vadd.f32 0.0, %v2417
  %2419 = vdwg.mxu0
  %2420 = vmatpush.msra.mxu0 0.0
  %2421 = vmatpush.msra.mxu0 0.0
  %2422 = vmatpush.msra.mxu0 0.0
  %2423 = vmatpush.msra.mxu0 0.0
  %2424 = vmatpush.msra.mxu0 0.0
  %2425 = vmatpush.msra.mxu0 %v2371
  %2426 = vmatpush.msra.mxu0 %v2332
  %2427 = vmatpush.msra.mxu0 %v2330
  %2428 = vmatpush.msra.mxu0 %v2328
  %2429 = vmatpush.msra.mxu0 %v2326
  %2430 = vmatpush.msra.mxu0 %v2324
  %2431 = vmatpush.msra.mxu0 %v2322
  %2432 = vmatpush.msra.mxu0 %v2320
  %2433 = vmatpush.msra.mxu0 %v2318
  %2434 = vmatpush.msra.mxu0 %v2316
  %2435 = vmatpush.msra.mxu0 %v2314
  %2436 = vmatmul.f32.gmra.mxu0 %v2337
  %v2437 = vpop.f32.mrf.mxu0
  %v2438 = vadd.f32 0.0, %v2437
  %2439 = vmatmul.f32.gmra.mxu0 %v2340
  %v2440 = vpop.f32.mrf.mxu0
  %v2441 = vadd.f32 0.0, %v2440
  %2442 = vmatmul.f32.gmra.mxu0 %v2343
  %v2443 = vpop.f32.mrf.mxu0
  %v2444 = vadd.f32 0.0, %v2443
  %2445 = vmatmul.f32.gmra.mxu0 %v2346
  %v2446 = vpop.f32.mrf.mxu0
  %v2447 = vadd.f32 0.0, %v2446
  %2448 = vmatmul.f32.gmra.mxu0 %v2349
  %v2449 = vpop.f32.mrf.mxu0
  %v2450 = vadd.f32 0.0, %v2449
  %2451 = vmatmul.f32.gmra.mxu0 %v2352
  %v2452 = vpop.f32.mrf.mxu0
  %v2453 = vadd.f32 0.0, %v2452
  %2454 = vmatmul.f32.gmra.mxu0 %v2355
  %v2455 = vpop.f32.mrf.mxu0
  %v2456 = vadd.f32 0.0, %v2455
  %2457 = vmatmul.f32.gmra.mxu0 %v2358
  %v2458 = vpop.f32.mrf.mxu0
  %v2459 = vadd.f32 0.0, %v2458
  %2460 = vmatmul.f32.gmra.mxu0 %v2361
  %v2461 = vpop.f32.mrf.mxu0
  %v2462 = vadd.f32 0.0, %v2461
  %2463 = vmatmul.f32.gmra.mxu0 %v2364
  %v2464 = vpop.f32.mrf.mxu0
  %v2465 = vadd.f32 0.0, %v2464
  %2466 = vdwg.mxu0
  %v2468 = vsel %vm2335, %v2276, 0
  %v2471 = vsel %vm2366, %v2310, 0
  %v2474 = vsel %vm2366, %v2311, 0
  %2476 = vmatpush.msra.mxu0 0.0
  %2477 = vmatpush.msra.mxu0 0.0
  %2478 = vmatpush.msra.mxu0 0.0
  %2479 = vmatpush.msra.mxu0 0.0
  %2480 = vmatpush.msra.mxu0 0.0
  %2481 = vmatpush.msra.mxu0 %v2471
  %2482 = vmatpush.msra.mxu0 %v2308
  %2483 = vmatpush.msra.mxu0 %v2306
  %2484 = vmatpush.msra.mxu0 %v2304
  %2485 = vmatpush.msra.mxu0 %v2302
  %2486 = vmatpush.msra.mxu0 %v2300
  %2487 = vmatpush.msra.mxu0 %v2298
  %2488 = vmatpush.msra.mxu0 %v2296
  %2489 = vmatpush.msra.mxu0 %v2294
  %2490 = vmatpush.msra.mxu0 %v2292
  %2491 = vmatpush.msra.mxu0 %v2290
  %2492 = vmatmul.f32.gmra.mxu0 %v2468
  %v2493 = vpop.f32.mrf.mxu0
  %v2494 = vadd.f32 %v2391, %v2493
  %2495 = vmatmul.f32.gmra.mxu0 %v2337
  %v2496 = vpop.f32.mrf.mxu0
  %v2497 = vadd.f32 %v2394, %v2496
  %2498 = vmatmul.f32.gmra.mxu0 %v2340
  %v2499 = vpop.f32.mrf.mxu0
  %v2500 = vadd.f32 %v2397, %v2499
  %2501 = vmatmul.f32.gmra.mxu0 %v2343
  %v2502 = vpop.f32.mrf.mxu0
  %v2503 = vadd.f32 %v2400, %v2502
  %2504 = vmatmul.f32.gmra.mxu0 %v2346
  %v2505 = vpop.f32.mrf.mxu0
  %v2506 = vadd.f32 %v2403, %v2505
  %2507 = vmatmul.f32.gmra.mxu0 %v2349
  %v2508 = vpop.f32.mrf.mxu0
  %v2509 = vadd.f32 %v2406, %v2508
  %2510 = vmatmul.f32.gmra.mxu0 %v2352
  %v2511 = vpop.f32.mrf.mxu0
  %v2512 = vadd.f32 %v2409, %v2511
  %2513 = vmatmul.f32.gmra.mxu0 %v2355
  %v2514 = vpop.f32.mrf.mxu0
  %v2515 = vadd.f32 %v2412, %v2514
  %2516 = vmatmul.f32.gmra.mxu0 %v2358
  %v2517 = vpop.f32.mrf.mxu0
  %v2518 = vadd.f32 %v2415, %v2517
  %2519 = vmatmul.f32.gmra.mxu0 %v2361
  %v2520 = vpop.f32.mrf.mxu0
  %v2521 = vadd.f32 %v2418, %v2520
  %2522 = vdwg.mxu0
  %2523 = vmatpush.msra.mxu0 0.0
  %2524 = vmatpush.msra.mxu0 0.0
  %2525 = vmatpush.msra.mxu0 0.0
  %2526 = vmatpush.msra.mxu0 0.0
  %2527 = vmatpush.msra.mxu0 0.0
  %2528 = vmatpush.msra.mxu0 %v2474
  %2529 = vmatpush.msra.mxu0 %v2309
  %2530 = vmatpush.msra.mxu0 %v2307
  %2531 = vmatpush.msra.mxu0 %v2305
  %2532 = vmatpush.msra.mxu0 %v2303
  %2533 = vmatpush.msra.mxu0 %v2301
  %2534 = vmatpush.msra.mxu0 %v2299
  %2535 = vmatpush.msra.mxu0 %v2297
  %2536 = vmatpush.msra.mxu0 %v2295
  %2537 = vmatpush.msra.mxu0 %v2293
  %2538 = vmatpush.msra.mxu0 %v2291
  %2539 = vmatmul.f32.gmra.mxu0 %v2468
  %v2540 = vpop.f32.mrf.mxu0
  %v2541 = vadd.f32 %v2438, %v2540
  %2542 = vmatmul.f32.gmra.mxu0 %v2337
  %v2543 = vpop.f32.mrf.mxu0
  %v2544 = vadd.f32 %v2441, %v2543
  %2545 = vmatmul.f32.gmra.mxu0 %v2340
  %v2546 = vpop.f32.mrf.mxu0
  %v2547 = vadd.f32 %v2444, %v2546
  %2548 = vmatmul.f32.gmra.mxu0 %v2343
  %v2549 = vpop.f32.mrf.mxu0
  %v2550 = vadd.f32 %v2447, %v2549
  %2551 = vmatmul.f32.gmra.mxu0 %v2346
  %v2552 = vpop.f32.mrf.mxu0
  %v2553 = vadd.f32 %v2450, %v2552
  %2554 = vmatmul.f32.gmra.mxu0 %v2349
  %v2555 = vpop.f32.mrf.mxu0
  %v2556 = vadd.f32 %v2453, %v2555
  %2557 = vmatmul.f32.gmra.mxu0 %v2352
  %v2558 = vpop.f32.mrf.mxu0
  %v2559 = vadd.f32 %v2456, %v2558
  %2560 = vmatmul.f32.gmra.mxu0 %v2355
  %v2561 = vpop.f32.mrf.mxu0
  %v2562 = vadd.f32 %v2459, %v2561
  %2563 = vmatmul.f32.gmra.mxu0 %v2358
  %v2564 = vpop.f32.mrf.mxu0
  %v2565 = vadd.f32 %v2462, %v2564
  %2566 = vmatmul.f32.gmra.mxu0 %v2361
  %v2567 = vpop.f32.mrf.mxu0
  %v2568 = vadd.f32 %v2465, %v2567
  %2569 = vdwg.mxu0
  %s2570 = scalar_lea.vmem %s3, 352
  %v2571 = vld [vmem:[%s2570] sm:$0xff]
  %v2572 = vld [vmem:[%s2570 + $0x8] sm:$0xff]
  %v2573 = vld [vmem:[%s2570 + $0x10] sm:$0xff]
  %v2574 = vld [vmem:[%s2570 + $0x18] sm:$0xff]
  %v2575 = vld [vmem:[%s2570 + $0x20] sm:$0xff]
  %v2576 = vld [vmem:[%s2570 + $0x28] sm:$0xff]
  %v2577 = vld [vmem:[%s2570 + $0x30] sm:$0xff]
  %v2578 = vld [vmem:[%s2570 + $0x38] sm:$0xff]
  %v2579 = vld [vmem:[%s2570 + $0x40] sm:$0xff]
  %v2580 = vld [vmem:[%s2570 + $0x48] sm:$0xff]
  %v2581 = vld [vmem:[%s2570 + $0x50] sm:$0xff]
  %v2582 = vld [vmem:[%s2570 + $0x58] sm:$0xff]
  %v2583 = vld [vmem:[%s2570 + $0x60] sm:$0xff]
  %v2584 = vld [vmem:[%s2570 + $0x68] sm:$0xff]
  %v2585 = vld [vmem:[%s2570 + $0x70] sm:$0xff]
  %v2586 = vld [vmem:[%s2570 + $0x78] sm:$0xff]
  %v2587 = vld [vmem:[%s2570 + $0x80] sm:$0xff]
  %v2588 = vld [vmem:[%s2570 + $0x88] sm:$0xff]
  %v2589 = vld [vmem:[%s2570 + $0x90] sm:$0xff]
  %v2590 = vld [vmem:[%s2570 + $0x98] sm:$0xff]
  %v2591 = vld [vmem:[%s2570 + $0xa0] sm:$0xf]
  %v2592 = vld [vmem:[%s2570 + $0xa8] sm:$0xf]
  %v2594 = vsel %vm2335, %v2287, 0
  %v2597 = vsel %vm2366, %v2591, 0
  %v2600 = vsel %vm2366, %v2592, 0
  %2602 = vmatpush.msra.mxu0 0.0
  %2603 = vmatpush.msra.mxu0 0.0
  %2604 = vmatpush.msra.mxu0 0.0
  %2605 = vmatpush.msra.mxu0 0.0
  %2606 = vmatpush.msra.mxu0 0.0
  %2607 = vmatpush.msra.mxu0 %v2597
  %2608 = vmatpush.msra.mxu0 %v2589
  %2609 = vmatpush.msra.mxu0 %v2587
  %2610 = vmatpush.msra.mxu0 %v2585
  %2611 = vmatpush.msra.mxu0 %v2583
  %2612 = vmatpush.msra.mxu0 %v2581
  %2613 = vmatpush.msra.mxu0 %v2579
  %2614 = vmatpush.msra.mxu0 %v2577
  %2615 = vmatpush.msra.mxu0 %v2575
  %2616 = vmatpush.msra.mxu0 %v2573
  %2617 = vmatpush.msra.mxu0 %v2571
  %2618 = vmatmul.f32.gmra.mxu0 %v2340
  %v2619 = vpop.f32.mrf.mxu0
  %v2620 = vadd.f32 0.0, %v2619
  %2621 = vmatmul.f32.gmra.mxu0 %v2343
  %v2622 = vpop.f32.mrf.mxu0
  %v2623 = vadd.f32 0.0, %v2622
  %2624 = vmatmul.f32.gmra.mxu0 %v2346
  %v2625 = vpop.f32.mrf.mxu0
  %v2626 = vadd.f32 0.0, %v2625
  %2627 = vmatmul.f32.gmra.mxu0 %v2349
  %v2628 = vpop.f32.mrf.mxu0
  %v2629 = vadd.f32 0.0, %v2628
  %2630 = vmatmul.f32.gmra.mxu0 %v2352
  %v2631 = vpop.f32.mrf.mxu0
  %v2632 = vadd.f32 0.0, %v2631
  %2633 = vmatmul.f32.gmra.mxu0 %v2355
  %v2634 = vpop.f32.mrf.mxu0
  %v2635 = vadd.f32 0.0, %v2634
  %2636 = vmatmul.f32.gmra.mxu0 %v2358
  %v2637 = vpop.f32.mrf.mxu0
  %v2638 = vadd.f32 0.0, %v2637
  %2639 = vmatmul.f32.gmra.mxu0 %v2361
  %v2640 = vpop.f32.mrf.mxu0
  %v2641 = vadd.f32 0.0, %v2640
  %2642 = vmatmul.f32.gmra.mxu0 %v2364
  %v2643 = vpop.f32.mrf.mxu0
  %v2644 = vadd.f32 0.0, %v2643
  %2645 = vmatmul.f32.gmra.mxu0 %v2594
  %v2646 = vpop.f32.mrf.mxu0
  %v2647 = vadd.f32 0.0, %v2646
  %2648 = vdwg.mxu0
  %2649 = vmatpush.msra.mxu0 0.0
  %2650 = vmatpush.msra.mxu0 0.0
  %2651 = vmatpush.msra.mxu0 0.0
  %2652 = vmatpush.msra.mxu0 0.0
  %2653 = vmatpush.msra.mxu0 0.0
  %2654 = vmatpush.msra.mxu0 %v2600
  %2655 = vmatpush.msra.mxu0 %v2590
  %2656 = vmatpush.msra.mxu0 %v2588
  %2657 = vmatpush.msra.mxu0 %v2586
  %2658 = vmatpush.msra.mxu0 %v2584
  %2659 = vmatpush.msra.mxu0 %v2582
  %2660 = vmatpush.msra.mxu0 %v2580
  %2661 = vmatpush.msra.mxu0 %v2578
  %2662 = vmatpush.msra.mxu0 %v2576
  %2663 = vmatpush.msra.mxu0 %v2574
  %2664 = vmatpush.msra.mxu0 %v2572
  %2665 = vmatmul.f32.gmra.mxu0 %v2340
  %v2666 = vpop.f32.mrf.mxu0
  %v2667 = vadd.f32 0.0, %v2666
  %2668 = vmatmul.f32.gmra.mxu0 %v2343
  %v2669 = vpop.f32.mrf.mxu0
  %v2670 = vadd.f32 0.0, %v2669
  %2671 = vmatmul.f32.gmra.mxu0 %v2346
  %v2672 = vpop.f32.mrf.mxu0
  %v2673 = vadd.f32 0.0, %v2672
  %2674 = vmatmul.f32.gmra.mxu0 %v2349
  %v2675 = vpop.f32.mrf.mxu0
  %v2676 = vadd.f32 0.0, %v2675
  %2677 = vmatmul.f32.gmra.mxu0 %v2352
  %v2678 = vpop.f32.mrf.mxu0
  %v2679 = vadd.f32 0.0, %v2678
  %2680 = vmatmul.f32.gmra.mxu0 %v2355
  %v2681 = vpop.f32.mrf.mxu0
  %v2682 = vadd.f32 0.0, %v2681
  %2683 = vmatmul.f32.gmra.mxu0 %v2358
  %v2684 = vpop.f32.mrf.mxu0
  %v2685 = vadd.f32 0.0, %v2684
  %2686 = vmatmul.f32.gmra.mxu0 %v2361
  %v2687 = vpop.f32.mrf.mxu0
  %v2688 = vadd.f32 0.0, %v2687
  %2689 = vmatmul.f32.gmra.mxu0 %v2364
  %v2690 = vpop.f32.mrf.mxu0
  %v2691 = vadd.f32 0.0, %v2690
  %2692 = vmatmul.f32.gmra.mxu0 %v2594
  %v2693 = vpop.f32.mrf.mxu0
  %v2694 = vadd.f32 0.0, %v2693
  %2695 = vdwg.mxu0
  %v2696 = vadd.f32 %v2494, %v2620
  %v2697 = vadd.f32 %v2541, %v2667
  %v2698 = vadd.f32 %v2497, %v2623
  %v2699 = vadd.f32 %v2544, %v2670
  %v2700 = vadd.f32 %v2500, %v2626
  %v2701 = vadd.f32 %v2547, %v2673
  %v2702 = vadd.f32 %v2503, %v2629
  %v2703 = vadd.f32 %v2550, %v2676
  %v2704 = vadd.f32 %v2506, %v2632
  %v2705 = vadd.f32 %v2553, %v2679
  %v2706 = vadd.f32 %v2509, %v2635
  %v2707 = vadd.f32 %v2556, %v2682
  %v2708 = vadd.f32 %v2512, %v2638
  %v2709 = vadd.f32 %v2559, %v2685
  %v2710 = vadd.f32 %v2515, %v2641
  %v2711 = vadd.f32 %v2562, %v2688
  %v2712 = vadd.f32 %v2518, %v2644
  %v2713 = vadd.f32 %v2565, %v2691
  %v2714 = vadd.f32 %v2521, %v2647
  %v2715 = vadd.f32 %v2568, %v2694
  %s2716 = scalar_lea.vmem %s3, 528
  %v2717 = vld [vmem:[%s2716] sm:$0xff]
  %v2718 = vld [vmem:[%s2716 + $0x8] sm:$0xff]
  %v2719 = vld [vmem:[%s2716 + $0x10] sm:$0xff]
  %v2720 = vld [vmem:[%s2716 + $0x18] sm:$0xff]
  %v2721 = vld [vmem:[%s2716 + $0x20] sm:$0xff]
  %v2722 = vld [vmem:[%s2716 + $0x28] sm:$0xff]
  %v2723 = vld [vmem:[%s2716 + $0x30] sm:$0xff]
  %v2724 = vld [vmem:[%s2716 + $0x38] sm:$0xff]
  %v2725 = vld [vmem:[%s2716 + $0x40] sm:$0xff]
  %v2726 = vld [vmem:[%s2716 + $0x48] sm:$0xff]
  %v2727 = vld [vmem:[%s2716 + $0x50] sm:$0xff]
  %v2728 = vld [vmem:[%s2716 + $0x58] sm:$0xff]
  %v2729 = vld [vmem:[%s2716 + $0x60] sm:$0xff]
  %v2730 = vld [vmem:[%s2716 + $0x68] sm:$0xff]
  %v2731 = vld [vmem:[%s2716 + $0x70] sm:$0xff]
  %v2732 = vld [vmem:[%s2716 + $0x78] sm:$0xff]
  %v2733 = vld [vmem:[%s2716 + $0x80] sm:$0xff]
  %v2734 = vld [vmem:[%s2716 + $0x88] sm:$0xff]
  %v2735 = vld [vmem:[%s2716 + $0x90] sm:$0xff]
  %v2736 = vld [vmem:[%s2716 + $0x98] sm:$0xff]
  %v2737 = vld [vmem:[%s2716 + $0xa0] sm:$0xf]
  %v2738 = vld [vmem:[%s2716 + $0xa8] sm:$0xf]
  %v2740 = vsel %vm2335, %v2288, 0
  %v2743 = vsel %vm2366, %v2737, 0
  %v2746 = vsel %vm2366, %v2738, 0
  %2748 = vmatpush.msra.mxu0 0.0
  %2749 = vmatpush.msra.mxu0 0.0
  %2750 = vmatpush.msra.mxu0 0.0
  %2751 = vmatpush.msra.mxu0 0.0
  %2752 = vmatpush.msra.mxu0 0.0
  %2753 = vmatpush.msra.mxu0 %v2743
  %2754 = vmatpush.msra.mxu0 %v2735
  %2755 = vmatpush.msra.mxu0 %v2733
  %2756 = vmatpush.msra.mxu0 %v2731
  %2757 = vmatpush.msra.mxu0 %v2729
  %2758 = vmatpush.msra.mxu0 %v2727
  %2759 = vmatpush.msra.mxu0 %v2725
  %2760 = vmatpush.msra.mxu0 %v2723
  %2761 = vmatpush.msra.mxu0 %v2721
  %2762 = vmatpush.msra.mxu0 %v2719
  %2763 = vmatpush.msra.mxu0 %v2717
  %2764 = vmatmul.f32.gmra.mxu0 %v2343
  %v2765 = vpop.f32.mrf.mxu0
  %v2766 = vadd.f32 0.0, %v2765
  %2767 = vmatmul.f32.gmra.mxu0 %v2346
  %v2768 = vpop.f32.mrf.mxu0
  %v2769 = vadd.f32 0.0, %v2768
  %2770 = vmatmul.f32.gmra.mxu0 %v2349
  %v2771 = vpop.f32.mrf.mxu0
  %v2772 = vadd.f32 0.0, %v2771
  %2773 = vmatmul.f32.gmra.mxu0 %v2352
  %v2774 = vpop.f32.mrf.mxu0
  %v2775 = vadd.f32 0.0, %v2774
  %2776 = vmatmul.f32.gmra.mxu0 %v2355
  %v2777 = vpop.f32.mrf.mxu0
  %v2778 = vadd.f32 0.0, %v2777
  %2779 = vmatmul.f32.gmra.mxu0 %v2358
  %v2780 = vpop.f32.mrf.mxu0
  %v2781 = vadd.f32 0.0, %v2780
  %2782 = vmatmul.f32.gmra.mxu0 %v2361
  %v2783 = vpop.f32.mrf.mxu0
  %v2784 = vadd.f32 0.0, %v2783
  %2785 = vmatmul.f32.gmra.mxu0 %v2364
  %v2786 = vpop.f32.mrf.mxu0
  %v2787 = vadd.f32 0.0, %v2786
  %2788 = vmatmul.f32.gmra.mxu0 %v2594
  %v2789 = vpop.f32.mrf.mxu0
  %v2790 = vadd.f32 0.0, %v2789
  %2791 = vmatmul.f32.gmra.mxu0 %v2740
  %v2792 = vpop.f32.mrf.mxu0
  %v2793 = vadd.f32 0.0, %v2792
  %2794 = vdwg.mxu0
  %2795 = vmatpush.msra.mxu0 0.0
  %2796 = vmatpush.msra.mxu0 0.0
  %2797 = vmatpush.msra.mxu0 0.0
  %2798 = vmatpush.msra.mxu0 0.0
  %2799 = vmatpush.msra.mxu0 0.0
  %2800 = vmatpush.msra.mxu0 %v2746
  %2801 = vmatpush.msra.mxu0 %v2736
  %2802 = vmatpush.msra.mxu0 %v2734
  %2803 = vmatpush.msra.mxu0 %v2732
  %2804 = vmatpush.msra.mxu0 %v2730
  %2805 = vmatpush.msra.mxu0 %v2728
  %2806 = vmatpush.msra.mxu0 %v2726
  %2807 = vmatpush.msra.mxu0 %v2724
  %2808 = vmatpush.msra.mxu0 %v2722
  %2809 = vmatpush.msra.mxu0 %v2720
  %2810 = vmatpush.msra.mxu0 %v2718
  %2811 = vmatmul.f32.gmra.mxu0 %v2343
  %v2812 = vpop.f32.mrf.mxu0
  %v2813 = vadd.f32 0.0, %v2812
  %2814 = vmatmul.f32.gmra.mxu0 %v2346
  %v2815 = vpop.f32.mrf.mxu0
  %v2816 = vadd.f32 0.0, %v2815
  %2817 = vmatmul.f32.gmra.mxu0 %v2349
  %v2818 = vpop.f32.mrf.mxu0
  %v2819 = vadd.f32 0.0, %v2818
  %2820 = vmatmul.f32.gmra.mxu0 %v2352
  %v2821 = vpop.f32.mrf.mxu0
  %v2822 = vadd.f32 0.0, %v2821
  %2823 = vmatmul.f32.gmra.mxu0 %v2355
  %v2824 = vpop.f32.mrf.mxu0
  %v2825 = vadd.f32 0.0, %v2824
  %2826 = vmatmul.f32.gmra.mxu0 %v2358
  %v2827 = vpop.f32.mrf.mxu0
  %v2828 = vadd.f32 0.0, %v2827
  %2829 = vmatmul.f32.gmra.mxu0 %v2361
  %v2830 = vpop.f32.mrf.mxu0
  %v2831 = vadd.f32 0.0, %v2830
  %2832 = vmatmul.f32.gmra.mxu0 %v2364
  %v2833 = vpop.f32.mrf.mxu0
  %v2834 = vadd.f32 0.0, %v2833
  %2835 = vmatmul.f32.gmra.mxu0 %v2594
  %v2836 = vpop.f32.mrf.mxu0
  %v2837 = vadd.f32 0.0, %v2836
  %2838 = vmatmul.f32.gmra.mxu0 %v2740
  %v2839 = vpop.f32.mrf.mxu0
  %v2840 = vadd.f32 0.0, %v2839
  %2841 = vdwg.mxu0
  %v2842 = vadd.f32 %v2696, %v2766
  %v2843 = vadd.f32 %v2697, %v2813
  %v2844 = vadd.f32 %v2698, %v2769
  %v2845 = vadd.f32 %v2699, %v2816
  %v2846 = vadd.f32 %v2700, %v2772
  %v2847 = vadd.f32 %v2701, %v2819
  %v2848 = vadd.f32 %v2702, %v2775
  %v2849 = vadd.f32 %v2703, %v2822
  %v2850 = vadd.f32 %v2704, %v2778
  %v2851 = vadd.f32 %v2705, %v2825
  %v2852 = vadd.f32 %v2706, %v2781
  %v2853 = vadd.f32 %v2707, %v2828
  %v2854 = vadd.f32 %v2708, %v2784
  %v2855 = vadd.f32 %v2709, %v2831
  %v2856 = vadd.f32 %v2710, %v2787
  %v2857 = vadd.f32 %v2711, %v2834
  %v2858 = vadd.f32 %v2712, %v2790
  %v2859 = vadd.f32 %v2713, %v2837
  %v2860 = vadd.f32 %v2714, %v2793
  %v2861 = vadd.f32 %v2715, %v2840
  %s2862 = scalar_lea.vmem %s3, 704
  %v2863 = vld [vmem:[%s2862] sm:$0xff]
  %v2864 = vld [vmem:[%s2862 + $0x8] sm:$0xff]
  %v2865 = vld [vmem:[%s2862 + $0x10] sm:$0xff]
  %v2866 = vld [vmem:[%s2862 + $0x18] sm:$0xff]
  %v2867 = vld [vmem:[%s2862 + $0x20] sm:$0xff]
  %v2868 = vld [vmem:[%s2862 + $0x28] sm:$0xff]
  %v2869 = vld [vmem:[%s2862 + $0x30] sm:$0xff]
  %v2870 = vld [vmem:[%s2862 + $0x38] sm:$0xff]
  %v2871 = vld [vmem:[%s2862 + $0x40] sm:$0xff]
  %v2872 = vld [vmem:[%s2862 + $0x48] sm:$0xff]
  %v2873 = vld [vmem:[%s2862 + $0x50] sm:$0xff]
  %v2874 = vld [vmem:[%s2862 + $0x58] sm:$0xff]
  %v2875 = vld [vmem:[%s2862 + $0x60] sm:$0xff]
  %v2876 = vld [vmem:[%s2862 + $0x68] sm:$0xff]
  %v2877 = vld [vmem:[%s2862 + $0x70] sm:$0xff]
  %v2878 = vld [vmem:[%s2862 + $0x78] sm:$0xff]
  %v2879 = vld [vmem:[%s2862 + $0x80] sm:$0xff]
  %v2880 = vld [vmem:[%s2862 + $0x88] sm:$0xff]
  %v2881 = vld [vmem:[%s2862 + $0x90] sm:$0xff]
  %v2882 = vld [vmem:[%s2862 + $0x98] sm:$0xff]
  %v2883 = vld [vmem:[%s2862 + $0xa0] sm:$0xf]
  %v2884 = vld [vmem:[%s2862 + $0xa8] sm:$0xf]
  %v2886 = vsel %vm2335, %v2289, 0
  %v2889 = vsel %vm2366, %v2883, 0
  %v2892 = vsel %vm2366, %v2884, 0
  %2894 = vmatpush.msra.mxu0 0.0
  %2895 = vmatpush.msra.mxu0 0.0
  %2896 = vmatpush.msra.mxu0 0.0
  %2897 = vmatpush.msra.mxu0 0.0
  %2898 = vmatpush.msra.mxu0 0.0
  %2899 = vmatpush.msra.mxu0 %v2889
  %2900 = vmatpush.msra.mxu0 %v2881
  %2901 = vmatpush.msra.mxu0 %v2879
  %2902 = vmatpush.msra.mxu0 %v2877
  %2903 = vmatpush.msra.mxu0 %v2875
  %2904 = vmatpush.msra.mxu0 %v2873
  %2905 = vmatpush.msra.mxu0 %v2871
  %2906 = vmatpush.msra.mxu0 %v2869
  %2907 = vmatpush.msra.mxu0 %v2867
  %2908 = vmatpush.msra.mxu0 %v2865
  %2909 = vmatpush.msra.mxu0 %v2863
  %2910 = vmatmul.f32.gmra.mxu0 %v2346
  %v2911 = vpop.f32.mrf.mxu0
  %v2912 = vadd.f32 0.0, %v2911
  %2913 = vmatmul.f32.gmra.mxu0 %v2349
  %v2914 = vpop.f32.mrf.mxu0
  %v2915 = vadd.f32 0.0, %v2914
  %2916 = vmatmul.f32.gmra.mxu0 %v2352
  %v2917 = vpop.f32.mrf.mxu0
  %v2918 = vadd.f32 0.0, %v2917
  %2919 = vmatmul.f32.gmra.mxu0 %v2355
  %v2920 = vpop.f32.mrf.mxu0
  %v2921 = vadd.f32 0.0, %v2920
  %2922 = vmatmul.f32.gmra.mxu0 %v2358
  %v2923 = vpop.f32.mrf.mxu0
  %v2924 = vadd.f32 0.0, %v2923
  %2925 = vmatmul.f32.gmra.mxu0 %v2361
  %v2926 = vpop.f32.mrf.mxu0
  %v2927 = vadd.f32 0.0, %v2926
  %2928 = vmatmul.f32.gmra.mxu0 %v2364
  %v2929 = vpop.f32.mrf.mxu0
  %v2930 = vadd.f32 0.0, %v2929
  %2931 = vmatmul.f32.gmra.mxu0 %v2594
  %v2932 = vpop.f32.mrf.mxu0
  %v2933 = vadd.f32 0.0, %v2932
  %2934 = vmatmul.f32.gmra.mxu0 %v2740
  %v2935 = vpop.f32.mrf.mxu0
  %v2936 = vadd.f32 0.0, %v2935
  %2937 = vmatmul.f32.gmra.mxu0 %v2886
  %v2938 = vpop.f32.mrf.mxu0
  %v2939 = vadd.f32 0.0, %v2938
  %2940 = vdwg.mxu0
  %2941 = vmatpush.msra.mxu0 0.0
  %2942 = vmatpush.msra.mxu0 0.0
  %2943 = vmatpush.msra.mxu0 0.0
  %2944 = vmatpush.msra.mxu0 0.0
  %2945 = vmatpush.msra.mxu0 0.0
  %2946 = vmatpush.msra.mxu0 %v2892
  %2947 = vmatpush.msra.mxu0 %v2882
  %2948 = vmatpush.msra.mxu0 %v2880
  %2949 = vmatpush.msra.mxu0 %v2878
  %2950 = vmatpush.msra.mxu0 %v2876
  %2951 = vmatpush.msra.mxu0 %v2874
  %2952 = vmatpush.msra.mxu0 %v2872
  %2953 = vmatpush.msra.mxu0 %v2870
  %2954 = vmatpush.msra.mxu0 %v2868
  %2955 = vmatpush.msra.mxu0 %v2866
  %2956 = vmatpush.msra.mxu0 %v2864
  %2957 = vmatmul.f32.gmra.mxu0 %v2346
  %v2958 = vpop.f32.mrf.mxu0
  %v2959 = vadd.f32 0.0, %v2958
  %2960 = vmatmul.f32.gmra.mxu0 %v2349
  %v2961 = vpop.f32.mrf.mxu0
  %v2962 = vadd.f32 0.0, %v2961
  %2963 = vmatmul.f32.gmra.mxu0 %v2352
  %v2964 = vpop.f32.mrf.mxu0
  %v2965 = vadd.f32 0.0, %v2964
  %2966 = vmatmul.f32.gmra.mxu0 %v2355
  %v2967 = vpop.f32.mrf.mxu0
  %v2968 = vadd.f32 0.0, %v2967
  %2969 = vmatmul.f32.gmra.mxu0 %v2358
  %v2970 = vpop.f32.mrf.mxu0
  %v2971 = vadd.f32 0.0, %v2970
  %2972 = vmatmul.f32.gmra.mxu0 %v2361
  %v2973 = vpop.f32.mrf.mxu0
  %v2974 = vadd.f32 0.0, %v2973
  %2975 = vmatmul.f32.gmra.mxu0 %v2364
  %v2976 = vpop.f32.mrf.mxu0
  %v2977 = vadd.f32 0.0, %v2976
  %2978 = vmatmul.f32.gmra.mxu0 %v2594
  %v2979 = vpop.f32.mrf.mxu0
  %v2980 = vadd.f32 0.0, %v2979
  %2981 = vmatmul.f32.gmra.mxu0 %v2740
  %v2982 = vpop.f32.mrf.mxu0
  %v2983 = vadd.f32 0.0, %v2982
  %2984 = vmatmul.f32.gmra.mxu0 %v2886
  %v2985 = vpop.f32.mrf.mxu0
  %v2986 = vadd.f32 0.0, %v2985
  %2987 = vdwg.mxu0
  %v2988 = vadd.f32 %v2842, %v2912
  %v2989 = vadd.f32 %v2843, %v2959
  %v2990 = vadd.f32 %v2844, %v2915
  %v2991 = vadd.f32 %v2845, %v2962
  %v2992 = vadd.f32 %v2846, %v2918
  %v2993 = vadd.f32 %v2847, %v2965
  %v2994 = vadd.f32 %v2848, %v2921
  %v2995 = vadd.f32 %v2849, %v2968
  %v2996 = vadd.f32 %v2850, %v2924
  %v2997 = vadd.f32 %v2851, %v2971
  %v2998 = vadd.f32 %v2852, %v2927
  %v2999 = vadd.f32 %v2853, %v2974
  %v3000 = vadd.f32 %v2854, %v2930
  %v3001 = vadd.f32 %v2855, %v2977
  %v3002 = vadd.f32 %v2856, %v2933
  %v3003 = vadd.f32 %v2857, %v2980
  %v3004 = vadd.f32 %v2858, %v2936
  %v3005 = vadd.f32 %v2859, %v2983
  %v3006 = vadd.f32 %v2860, %v2939
  %v3007 = vadd.f32 %v2861, %v2986
  %v3008 = vld [vmem:[%s4] sm:$0x3]
  %v3010 = vperm.slane %v3008, 0
  %v3011 = vperm.slane %v3008, 1
  %v3014 = vadd.f32 %v2988, %v3010
  %v3015 = vadd.f32 %v2989, %v3011
  %v3016 = vadd.f32 %v2990, %v3010
  %v3017 = vadd.f32 %v2991, %v3011
  %v3018 = vadd.f32 %v2992, %v3010
  %v3019 = vadd.f32 %v2993, %v3011
  %v3020 = vadd.f32 %v2994, %v3010
  %v3021 = vadd.f32 %v2995, %v3011
  %v3022 = vadd.f32 %v2996, %v3010
  %v3023 = vadd.f32 %v2997, %v3011
  %v3024 = vadd.f32 %v2998, %v3010
  %v3025 = vadd.f32 %v2999, %v3011
  %v3026 = vadd.f32 %v3000, %v3010
  %v3027 = vadd.f32 %v3001, %v3011
  %v3028 = vadd.f32 %v3002, %v3010
  %v3029 = vadd.f32 %v3003, %v3011
  %v3030 = vadd.f32 %v3004, %v3010
  %v3031 = vadd.f32 %v3005, %v3011
  %v3032 = vadd.f32 %v3006, %v3010
  %v3033 = vadd.f32 %v3007, %v3011
  %v3034 = vmax.f32 %v3014, 0.0
  %v3035 = vmax.f32 %v3015, 0.0
  %v3036 = vmax.f32 %v3016, 0.0
  %v3037 = vmax.f32 %v3017, 0.0
  %v3038 = vmax.f32 %v3018, 0.0
  %v3039 = vmax.f32 %v3019, 0.0
  %v3040 = vmax.f32 %v3020, 0.0
  %v3041 = vmax.f32 %v3021, 0.0
  %v3042 = vmax.f32 %v3022, 0.0
  %v3043 = vmax.f32 %v3023, 0.0
  %v3044 = vmax.f32 %v3024, 0.0
  %v3045 = vmax.f32 %v3025, 0.0
  %v3046 = vmax.f32 %v3026, 0.0
  %v3047 = vmax.f32 %v3027, 0.0
  %v3048 = vmax.f32 %v3028, 0.0
  %v3049 = vmax.f32 %v3029, 0.0
  %v3050 = vmax.f32 %v3030, 0.0
  %v3051 = vmax.f32 %v3031, 0.0
  %v3052 = vmax.f32 %v3032, 0.0
  %v3053 = vmax.f32 %v3033, 0.0
  %3074 = vrot.lane.b32.xlu0 %v3034, 48
  %v3075 = vpop.permute.xlu0 %3074
  %3076 = vrot.lane.b32.xlu0 %v3035, 48
  %v3077 = vpop.permute.xlu0 %3076
  %3078 = vrot.lane.b32.xlu0 %v3036, 48
  %v3079 = vpop.permute.xlu0 %3078
  %3080 = vrot.lane.b32.xlu0 %v3037, 48
  %v3081 = vpop.permute.xlu0 %3080
  %3082 = vrot.lane.b32.xlu0 %v3038, 48
  %v3083 = vpop.permute.xlu0 %3082
  %3084 = vrot.lane.b32.xlu0 %v3039, 48
  %v3085 = vpop.permute.xlu0 %3084
  %3086 = vrot.lane.b32.xlu0 %v3040, 48
  %v3087 = vpop.permute.xlu0 %3086
  %3088 = vrot.lane.b32.xlu0 %v3041, 48
  %v3089 = vpop.permute.xlu0 %3088
  %3090 = vrot.lane.b32.xlu0 %v3042, 48
  %v3091 = vpop.permute.xlu0 %3090
  %3092 = vrot.lane.b32.xlu0 %v3043, 48
  %v3093 = vpop.permute.xlu0 %3092
  %3094 = vrot.lane.b32.xlu0 %v3044, 48
  %v3095 = vpop.permute.xlu0 %3094
  %3096 = vrot.lane.b32.xlu0 %v3045, 48
  %v3097 = vpop.permute.xlu0 %3096
  %3098 = vrot.lane.b32.xlu0 %v3046, 48
  %v3099 = vpop.permute.xlu0 %3098
  %3100 = vrot.lane.b32.xlu0 %v3047, 48
  %v3101 = vpop.permute.xlu0 %3100
  %3102 = vrot.lane.b32.xlu0 %v3048, 48
  %v3103 = vpop.permute.xlu0 %3102
  %3104 = vrot.lane.b32.xlu0 %v3049, 48
  %v3105 = vpop.permute.xlu0 %3104
  %3106 = vrot.lane.b32.xlu0 %v3050, 48
  %v3107 = vpop.permute.xlu0 %3106
  %3108 = vrot.lane.b32.xlu0 %v3051, 48
  %v3109 = vpop.permute.xlu0 %3108
  %3110 = vrot.lane.b32.xlu0 %v3052, 48
  %v3111 = vpop.permute.xlu0 %3110
  %3112 = vrot.lane.b32.xlu0 %v3053, 48
  %v3113 = vpop.permute.xlu0 %3112
  %vm3114 = vcmask 392192
  %v3115 = vsel %vm3114, %v3075, %v3077
  %v3116 = vsel %vm3114, %v3079, %v3081
  %v3117 = vsel %vm3114, %v3083, %v3085
  %v3118 = vsel %vm3114, %v3087, %v3089
  %v3119 = vsel %vm3114, %v3091, %v3093
  %v3120 = vsel %vm3114, %v3095, %v3097
  %v3121 = vsel %vm3114, %v3099, %v3101
  %v3122 = vsel %vm3114, %v3103, %v3105
  %v3123 = vsel %vm3114, %v3107, %v3109
  %v3124 = vsel %vm3114, %v3111, %v3113
  %v3135 = vmax.f32 %v3034, %v3115
  %v3136 = vmax.f32 %v3036, %v3116
  %v3137 = vmax.f32 %v3038, %v3117
  %v3138 = vmax.f32 %v3040, %v3118
  %v3139 = vmax.f32 %v3042, %v3119
  %v3140 = vmax.f32 %v3044, %v3120
  %v3141 = vmax.f32 %v3046, %v3121
  %v3142 = vmax.f32 %v3048, %v3122
  %v3143 = vmax.f32 %v3050, %v3123
  %v3144 = vmax.f32 %v3052, %v3124
  %v3145 = vmax.f32 %v3135, %v3136
  %v3146 = vmax.f32 %v3137, %v3138
  %v3147 = vmax.f32 %v3139, %v3140
  %v3148 = vmax.f32 %v3141, %v3142
  %v3149 = vmax.f32 %v3143, %v3144
  %v3150 = vld [vmem:[%s5] sm:$0xff]
  %v3151 = vld [vmem:[%s5 + $0x8] sm:$0xff]
  %v3152 = vld [vmem:[%s5 + $0x10] sm:$0xff]
  %v3153 = vld [vmem:[%s5 + $0x18] sm:$0xff]
  %v3154 = vld [vmem:[%s5 + $0x20] sm:$0xff]
  %v3155 = vld [vmem:[%s5 + $0x28] sm:$0xff]
  %v3156 = vld [vmem:[%s5 + $0x30] sm:$0xff]
  %v3157 = vld [vmem:[%s5 + $0x38] sm:$0xff]
  %v3158 = vld [vmem:[%s5 + $0x40] sm:$0xff]
  %v3159 = vld [vmem:[%s5 + $0x48] sm:$0xff]
  %s3160 = scalar_lea.vmem %s5, 80
  %v3161 = vld [vmem:[%s3160] sm:$0xff]
  %v3162 = vld [vmem:[%s3160 + $0x8] sm:$0xff]
  %v3163 = vld [vmem:[%s3160 + $0x10] sm:$0xff]
  %v3164 = vld [vmem:[%s3160 + $0x18] sm:$0xff]
  %v3165 = vld [vmem:[%s3160 + $0x20] sm:$0xff]
  %v3166 = vld [vmem:[%s3160 + $0x28] sm:$0xff]
  %v3167 = vld [vmem:[%s3160 + $0x30] sm:$0xff]
  %v3168 = vld [vmem:[%s3160 + $0x38] sm:$0xff]
  %v3169 = vld [vmem:[%s3160 + $0x40] sm:$0xff]
  %v3170 = vld [vmem:[%s3160 + $0x48] sm:$0xff]
  %vm3171 = vcmask 654336
  %v3173 = vsel %vm3171, %v3146, 0
  %3175 = vmatpush.msra.mxu0 0.0
  %3176 = vmatpush.msra.mxu0 0.0
  %3177 = vmatpush.msra.mxu0 0.0
  %3178 = vmatpush.msra.mxu0 0.0
  %3179 = vmatpush.msra.mxu0 0.0
  %3180 = vmatpush.msra.mxu0 0.0
  %3181 = vmatpush.msra.mxu0 %v3170
  %3182 = vmatpush.msra.mxu0 %v3169
  %3183 = vmatpush.msra.mxu0 %v3168
  %3184 = vmatpush.msra.mxu0 %v3167
  %3185 = vmatpush.msra.mxu0 %v3166
  %3186 = vmatpush.msra.mxu0 %v3165
  %3187 = vmatpush.msra.mxu0 %v3164
  %3188 = vmatpush.msra.mxu0 %v3163
  %3189 = vmatpush.msra.mxu0 %v3162
  %3190 = vmatpush.msra.mxu0 %v3161
  %3191 = vmatmul.f32.gmra.mxu0 %v3173
  %v3192 = vpop.f32.mrf.mxu0
  %v3193 = vadd.f32 0.0, %v3192
  %3194 = vdwg.mxu0
  %v3196 = vsel %vm3171, %v3145, 0
  %3198 = vmatpush.msra.mxu0 0.0
  %3199 = vmatpush.msra.mxu0 0.0
  %3200 = vmatpush.msra.mxu0 0.0
  %3201 = vmatpush.msra.mxu0 0.0
  %3202 = vmatpush.msra.mxu0 0.0
  %3203 = vmatpush.msra.mxu0 0.0
  %3204 = vmatpush.msra.mxu0 %v3159
  %3205 = vmatpush.msra.mxu0 %v3158
  %3206 = vmatpush.msra.mxu0 %v3157
  %3207 = vmatpush.msra.mxu0 %v3156
  %3208 = vmatpush.msra.mxu0 %v3155
  %3209 = vmatpush.msra.mxu0 %v3154
  %3210 = vmatpush.msra.mxu0 %v3153
  %3211 = vmatpush.msra.mxu0 %v3152
  %3212 = vmatpush.msra.mxu0 %v3151
  %3213 = vmatpush.msra.mxu0 %v3150
  %3214 = vmatmul.f32.gmra.mxu0 %v3196
  %v3215 = vpop.f32.mrf.mxu0
  %v3216 = vadd.f32 %v3193, %v3215
  %3217 = vdwg.mxu0
  %s3218 = scalar_lea.vmem %s5, 160
  %v3219 = vld [vmem:[%s3218] sm:$0xff]
  %v3220 = vld [vmem:[%s3218 + $0x8] sm:$0xff]
  %v3221 = vld [vmem:[%s3218 + $0x10] sm:$0xff]
  %v3222 = vld [vmem:[%s3218 + $0x18] sm:$0xff]
  %v3223 = vld [vmem:[%s3218 + $0x20] sm:$0xff]
  %v3224 = vld [vmem:[%s3218 + $0x28] sm:$0xff]
  %v3225 = vld [vmem:[%s3218 + $0x30] sm:$0xff]
  %v3226 = vld [vmem:[%s3218 + $0x38] sm:$0xff]
  %v3227 = vld [vmem:[%s3218 + $0x40] sm:$0xff]
  %v3228 = vld [vmem:[%s3218 + $0x48] sm:$0xff]
  %v3230 = vsel %vm3171, %v3147, 0
  %3232 = vmatpush.msra.mxu0 0.0
  %3233 = vmatpush.msra.mxu0 0.0
  %3234 = vmatpush.msra.mxu0 0.0
  %3235 = vmatpush.msra.mxu0 0.0
  %3236 = vmatpush.msra.mxu0 0.0
  %3237 = vmatpush.msra.mxu0 0.0
  %3238 = vmatpush.msra.mxu0 %v3228
  %3239 = vmatpush.msra.mxu0 %v3227
  %3240 = vmatpush.msra.mxu0 %v3226
  %3241 = vmatpush.msra.mxu0 %v3225
  %3242 = vmatpush.msra.mxu0 %v3224
  %3243 = vmatpush.msra.mxu0 %v3223
  %3244 = vmatpush.msra.mxu0 %v3222
  %3245 = vmatpush.msra.mxu0 %v3221
  %3246 = vmatpush.msra.mxu0 %v3220
  %3247 = vmatpush.msra.mxu0 %v3219
  %3248 = vmatmul.f32.gmra.mxu0 %v3230
  %v3249 = vpop.f32.mrf.mxu0
  %v3250 = vadd.f32 0.0, %v3249
  %3251 = vdwg.mxu0
  %v3252 = vadd.f32 %v3216, %v3250
  %s3253 = scalar_lea.vmem %s5, 240
  %v3254 = vld [vmem:[%s3253] sm:$0xff]
  %v3255 = vld [vmem:[%s3253 + $0x8] sm:$0xff]
  %v3256 = vld [vmem:[%s3253 + $0x10] sm:$0xff]
  %v3257 = vld [vmem:[%s3253 + $0x18] sm:$0xff]
  %v3258 = vld [vmem:[%s3253 + $0x20] sm:$0xff]
  %v3259 = vld [vmem:[%s3253 + $0x28] sm:$0xff]
  %v3260 = vld [vmem:[%s3253 + $0x30] sm:$0xff]
  %v3261 = vld [vmem:[%s3253 + $0x38] sm:$0xff]
  %v3262 = vld [vmem:[%s3253 + $0x40] sm:$0xff]
  %v3263 = vld [vmem:[%s3253 + $0x48] sm:$0xff]
  %v3265 = vsel %vm3171, %v3148, 0
  %3267 = vmatpush.msra.mxu0 0.0
  %3268 = vmatpush.msra.mxu0 0.0
  %3269 = vmatpush.msra.mxu0 0.0
  %3270 = vmatpush.msra.mxu0 0.0
  %3271 = vmatpush.msra.mxu0 0.0
  %3272 = vmatpush.msra.mxu0 0.0
  %3273 = vmatpush.msra.mxu0 %v3263
  %3274 = vmatpush.msra.mxu0 %v3262
  %3275 = vmatpush.msra.mxu0 %v3261
  %3276 = vmatpush.msra.mxu0 %v3260
  %3277 = vmatpush.msra.mxu0 %v3259
  %3278 = vmatpush.msra.mxu0 %v3258
  %3279 = vmatpush.msra.mxu0 %v3257
  %3280 = vmatpush.msra.mxu0 %v3256
  %3281 = vmatpush.msra.mxu0 %v3255
  %3282 = vmatpush.msra.mxu0 %v3254
  %3283 = vmatmul.f32.gmra.mxu0 %v3265
  %v3284 = vpop.f32.mrf.mxu0
  %v3285 = vadd.f32 0.0, %v3284
  %3286 = vdwg.mxu0
  %v3287 = vadd.f32 %v3252, %v3285
  %s3288 = scalar_lea.vmem %s5, 320
  %v3289 = vld [vmem:[%s3288] sm:$0xff]
  %v3290 = vld [vmem:[%s3288 + $0x8] sm:$0xff]
  %v3291 = vld [vmem:[%s3288 + $0x10] sm:$0xff]
  %v3292 = vld [vmem:[%s3288 + $0x18] sm:$0xff]
  %v3293 = vld [vmem:[%s3288 + $0x20] sm:$0xff]
  %v3294 = vld [vmem:[%s3288 + $0x28] sm:$0xff]
  %v3295 = vld [vmem:[%s3288 + $0x30] sm:$0xff]
  %v3296 = vld [vmem:[%s3288 + $0x38] sm:$0xff]
  %v3297 = vld [vmem:[%s3288 + $0x40] sm:$0xff]
  %v3298 = vld [vmem:[%s3288 + $0x48] sm:$0xff]
  %v3300 = vsel %vm3171, %v3149, 0
  %3302 = vmatpush.msra.mxu0 0.0
  %3303 = vmatpush.msra.mxu0 0.0
  %3304 = vmatpush.msra.mxu0 0.0
  %3305 = vmatpush.msra.mxu0 0.0
  %3306 = vmatpush.msra.mxu0 0.0
  %3307 = vmatpush.msra.mxu0 0.0
  %3308 = vmatpush.msra.mxu0 %v3298
  %3309 = vmatpush.msra.mxu0 %v3297
  %3310 = vmatpush.msra.mxu0 %v3296
  %3311 = vmatpush.msra.mxu0 %v3295
  %3312 = vmatpush.msra.mxu0 %v3294
  %3313 = vmatpush.msra.mxu0 %v3293
  %3314 = vmatpush.msra.mxu0 %v3292
  %3315 = vmatpush.msra.mxu0 %v3291
  %3316 = vmatpush.msra.mxu0 %v3290
  %3317 = vmatpush.msra.mxu0 %v3289
  %3318 = vmatmul.f32.gmra.mxu0 %v3300
  %v3319 = vpop.f32.mrf.mxu0
  %v3320 = vadd.f32 0.0, %v3319
  %3321 = vdwg.mxu0
  %v3322 = vadd.f32 %v3287, %v3320
  %v3323 = vld [vmem:[%s6] sm:$0x1]
  %v3325 = vperm.slane %v3323, 0
  %v3327 = vadd.f32 %v3322, %v3325
  %v3328 = vmax.f32 %v3327, 0.0
  %v3329 = vld [vmem:[%s7] sm:$0xff]
  %v3330 = vld [vmem:[%s7 + $0x8] sm:$0xff]
  %v3331 = vld [vmem:[%s7 + $0x10] sm:$0xff]
  %v3332 = vld [vmem:[%s7 + $0x18] sm:$0xff]
  %v3333 = vld [vmem:[%s7 + $0x20] sm:$0xff]
  %v3334 = vld [vmem:[%s7 + $0x28] sm:$0xff]
  %v3335 = vld [vmem:[%s7 + $0x30] sm:$0xff]
  %v3336 = vld [vmem:[%s7 + $0x38] sm:$0xff]
  %v3337 = vld [vmem:[%s7 + $0x40] sm:$0xff]
  %v3338 = vld [vmem:[%s7 + $0x48] sm:$0xff]
  %v3339 = vld [vmem:[%s7 + $0x50] sm:$0xff]
  %v3340 = vld [vmem:[%s7 + $0x58] sm:$0xff]
  %v3341 = vld [vmem:[%s7 + $0x60] sm:$0xff]
  %v3342 = vld [vmem:[%s7 + $0x68] sm:$0xff]
  %v3343 = vld [vmem:[%s7 + $0x70] sm:$0xff]
  %v3344 = vld [vmem:[%s8] sm:$0x1]
  %v3346 = vperm.slane %v3344, 0
  %vm3348 = vcmask 982016
  %v3350 = vsel %vm3348, %v3328, 0
  %3352 = vmatpush.msra.mxu0 0.0
  %3353 = vmatpush.msra.mxu0 %v3343
  %3354 = vmatpush.msra.mxu0 %v3342
  %3355 = vmatpush.msra.mxu0 %v3341
  %3356 = vmatpush.msra.mxu0 %v3340
  %3357 = vmatpush.msra.mxu0 %v3339
  %3358 = vmatpush.msra.mxu0 %v3338
  %3359 = vmatpush.msra.mxu0 %v3337
  %3360 = vmatpush.msra.mxu0 %v3336
  %3361 = vmatpush.msra.mxu0 %v3335
  %3362 = vmatpush.msra.mxu0 %v3334
  %3363 = vmatpush.msra.mxu0 %v3333
  %3364 = vmatpush.msra.mxu0 %v3332
  %3365 = vmatpush.msra.mxu0 %v3331
  %3366 = vmatpush.msra.mxu0 %v3330
  %3367 = vmatpush.msra.mxu0 %v3329
  %3368 = vmatmul.f32.gmra.mxu0 %v3350
  %v3369 = vpop.f32.mrf.mxu0
  %v3370 = vadd.f32 %v3346, %v3369
  %3371 = vdwg.mxu0
  %v3372 = vmax.f32 %v3370, 0.0
  %v3373 = vld [vmem:[%s9] sm:$0xff]
  %v3374 = vld [vmem:[%s9 + $0x8] sm:$0xff]
  %v3375 = vld [vmem:[%s9 + $0x10] sm:$0xff]
  %v3376 = vld [vmem:[%s9 + $0x18] sm:$0xff]
  %v3377 = vld [vmem:[%s9 + $0x20] sm:$0xff]
  %v3378 = vld [vmem:[%s9 + $0x28] sm:$0xff]
  %v3379 = vld [vmem:[%s9 + $0x30] sm:$0xff]
  %v3380 = vld [vmem:[%s9 + $0x38] sm:$0xff]
  %v3381 = vld [vmem:[%s9 + $0x40] sm:$0xff]
  %v3382 = vld [vmem:[%s9 + $0x48] sm:$0xff]
  %v3383 = vld [vmem:[%s9 + $0x50] sm:$0xf]
  %v3384 = vld [vmem:[%s10] sm:$0x1]
  %v3386 = vperm.slane %v3384, 0
  %v3389 = vsel %vm2335, %v3372, 0
  %v3392 = vsel %vm2366, %v3383, 0
  %3394 = vmatpush.msra.mxu0 0.0
  %3395 = vmatpush.msra.mxu0 0.0
  %3396 = vmatpush.msra.mxu0 0.0
  %3397 = vmatpush.msra.mxu0 0.0
  %3398 = vmatpush.msra.mxu0 0.0
  %3399 = vmatpush.msra.mxu0 %v3392
  %3400 = vmatpush.msra.mxu0 %v3382
  %3401 = vmatpush.msra.mxu0 %v3381
  %3402 = vmatpush.msra.mxu0 %v3380
  %3403 = vmatpush.msra.mxu0 %v3379
  %3404 = vmatpush.msra.mxu0 %v3378
  %3405 = vmatpush.msra.mxu0 %v3377
  %3406 = vmatpush.msra.mxu0 %v3376
  %3407 = vmatpush.msra.mxu0 %v3375
  %3408 = vmatpush.msra.mxu0 %v3374
  %3409 = vmatpush.msra.mxu0 %v3373
  %3410 = vmatmul.f32.gmra.mxu0 %v3389
  %v3411 = vpop.f32.mrf.mxu0
  %v3412 = vadd.f32 %v3386, %v3411
  %3413 = vdwg.mxu0
  %3414 = vmax.xlane.f32.xlu0 %v3412
  %v3415 = vpop.xlane.xlu0 %3414
  %v3416 = vsub.f32 %v3412, %v3415
  %v3417 = vmul.f32 %v3416, 1.442695
  %v3418 = vpow.pop %v3417
  %3419 = vadd.xlane.f32.xlu0 %v3418
  %v3420 = vpop.xlane.xlu0 %3419
  %v3421 = vlog2.pop %v3420
  %v3422 = vmul.f32 %v3421, 0.6931472
  %v3423 = vsub.f32 %v3416, %v3422
  %3424 = vst [vmem:[%s11] sm:$0xff] %v3423
  // Predicated region
  $region46: #{cnn_cifar_all_forward.1} parent=0 // pred_check
    _
  $region47: #{cnn_cifar_all_forward.1} parent=0 // pred_check_branch
    %3426 = sbr.rel (0) target = $region49
  $region48: #{cnn_cifar_all_forward.1} parent=0 // pred_region
    _
  $region49: #{cnn_cifar_all_forward.1} parent=0 // pred_fallthru
    _
  // Predicated region
  $region50: #{cnn_cifar_all_forward.1} parent=0 // pred_check
    _
  $region51: #{cnn_cifar_all_forward.1} parent=0 // pred_check_branch
    %3428 = sbr.rel (0) target = $region53
  $region52: #{cnn_cifar_all_forward.1} parent=0 // pred_region
    _
  $region53: #{cnn_cifar_all_forward.1} parent=0 // pred_fallthru
    _

</llo_original>
